<compile_context>
chip_gen: v5e
topology: v5e:2x2
jax: 0.10.0
libtpu: 0.0.40
codegen_flags: <defaults>
</compile_context>

<pallas_src>
import math
import functools

import jax
import jax.numpy as jnp
from jax.experimental import pallas as pl
from jax.experimental.pallas import tpu as pltpu


def _mha_kernel(q_ref, k_ref, v_ref,
                wq_ref, wk_ref, wv_ref, wo_ref,
                bq_ref, bk_ref, bv_ref, bo_ref,
                out_ref,
                kT_scr, v_scr, ctx_scr,
                *, num_heads, head_dim):
    """One (batch, q-tile) grid step.

    Ref shapes (batch dim squeezed by the BlockSpecs):
      q_ref          [tq, D]     bf16   query tile (pre-cast in the wrapper)
      k_ref, v_ref   [S,  D]     bf16   full key / value rows for this batch
      w*_ref         [D,  D]     bf16   projection weights ([D_in, D_out])
      b*_ref         [1,  D]     f32    biases (lane-dense)
      out_ref        [tq, D]     f32
      kT_scr         [H, hd, S]  bf16   projected K, transposed per head
      v_scr          [H, S, hd]  bf16   projected V, head-major
      ctx_scr        [tq, D]     bf16   per-tile context buffer
    """
    qi = pl.program_id(1)

    # K / V projections depend only on the batch index: compute them on the
    # first q-tile of each batch and cache them head-major (K pre-transposed)
    # so the inner head loop never lane-slices or transposes [S, *] operands.
    @pl.when(qi == 0)
    def _():
        k = jnp.dot(k_ref[...], wk_ref[...],
                    preferred_element_type=jnp.float32) + bk_ref[...]   # [S, D] f32
        v = jnp.dot(v_ref[...], wv_ref[...],
                    preferred_element_type=jnp.float32) + bv_ref[...]   # [S, D] f32
        for h in range(num_heads):                 # once per batch -> amortized
            lo = h * head_dim
            kT_scr[h] = k[:, lo:lo + head_dim].T.astype(jnp.bfloat16)   # [hd, S]
            v_scr[h] = v[:, lo:lo + head_dim].astype(jnp.bfloat16)      # [S, hd]

    # Q projection for this tile; fold 1/sqrt(hd) into Q (f32, after bias),
    # then drop to bf16 for the MXU.
    inv_sqrt_hd = 1.0 / math.sqrt(head_dim)
    q = (jnp.dot(q_ref[...], wq_ref[...], preferred_element_type=jnp.float32)
         + bq_ref[...]) * inv_sqrt_hd
    q_bf = q.astype(jnp.bfloat16)                                       # [tq, D]

    # Per-head attention. Contexts are written into ctx_scr so the output
    # projection is a single full-depth K = D matmul after the loop.
    # TODO(synk): for very large num_heads convert this static loop to
    #             lax.fori_loop (pl.ds + pl.multiple_of) to bound live ranges.
    for h in range(num_heads):
        lo = h * head_dim
        qh = q_bf[:, lo:lo + head_dim]                                  # [tq, hd]
        scores = jnp.dot(qh, kT_scr[h],
                         preferred_element_type=jnp.float32)            # [tq, S]

        # Numerically-stable softmax in f32; reciprocal on the EUP slot.
        m = jnp.max(scores, axis=-1, keepdims=True)
        e = jnp.exp(scores - m)
        denom = jnp.sum(e, axis=-1, keepdims=True)
        attn = e * pl.reciprocal(denom, approx=True)
        # TODO(synk): attention dropout is identity at inference; training-mode
        #             dropout (stateful RNG mask) is not implemented here.

        ctx_h = jnp.dot(attn.astype(jnp.bfloat16), v_scr[h],
                        preferred_element_type=jnp.float32)             # [tq, hd]
        ctx_scr[:, lo:lo + head_dim] = ctx_h.astype(jnp.bfloat16)

    # Output projection with full contraction depth K = D (one MXU phase).
    out = jnp.dot(ctx_scr[...], wo_ref[...],
                  preferred_element_type=jnp.float32) + bo_ref[...]
    out_ref[...] = out.astype(out_ref.dtype)


def _pick_q_tile(seq_len):
    # Capped at 256: keeps the per-head f32 [tq, S] score / exp temporaries
    # modest even under v7x's 64 MiB VMEM.
    for t in (256, 128, 64, 32, 16, 8):
        if seq_len % t == 0:
            return t
    # TODO(synk): pad the sequence to a multiple of 8 (with masking) instead of
    #             falling back to a full-length tile for awkward S.
    return seq_len


def _vmem_limit_bytes(default=48 * 1024 * 1024):
    """Scoped-VMEM request derived from the actual chip with ~25% headroom."""
    try:
        cap = getattr(pltpu.get_tpu_info(), "vmem_capacity_bytes", None)
    except Exception:
        cap = None
    if cap is None:
        return default           # safe everywhere (v7x has 64 MiB physical)
    return int(cap * 3 // 4)     # ~96 MiB on v5e/v6e, ~48 MiB on v7x


def _build_call(*, B, S, D, tq, num_heads, head_dim, out_dtype,
                single_buffer_consts):
    # Weight / bias blocks have a grid-invariant index_map: single-buffer them.
    const_mode = pl.Buffered(1) if single_buffer_consts else None

    q_spec = pl.BlockSpec((None, tq, D), lambda b, qi: (b, qi, 0))
    kv_spec = pl.BlockSpec((None, S, D), lambda b, qi: (b, 0, 0))
    w_spec = pl.BlockSpec((D, D), lambda b, qi: (0, 0), pipeline_mode=const_mode)
    b_spec = pl.BlockSpec((1, D), lambda b, qi: (0, 0), pipeline_mode=const_mode)
    out_spec = pl.BlockSpec((None, tq, D), lambda b, qi: (b, qi, 0))

    kernel = functools.partial(_mha_kernel, num_heads=num_heads, head_dim=head_dim)

    return pl.pallas_call(
        kernel,
        out_shape=jax.ShapeDtypeStruct((B, S, D), out_dtype),
        grid_spec=pltpu.PrefetchScalarGridSpec(
            num_scalar_prefetch=0,
            grid=(B, S // tq),
            in_specs=[q_spec, kv_spec, kv_spec,
                      w_spec, w_spec, w_spec, w_spec,   # Wq, Wk, Wv, Wo
                      b_spec, b_spec, b_spec, b_spec],  # bq, bk, bv, bo
            out_specs=out_spec,
            scratch_shapes=[
                pltpu.VMEM((num_heads, head_dim, S), jnp.bfloat16),  # K^T per head
                pltpu.VMEM((num_heads, S, head_dim), jnp.bfloat16),  # V  per head
                pltpu.VMEM((tq, D), jnp.bfloat16),                   # context buf
            ]),
        compiler_params=pltpu.CompilerParams(
            dimension_semantics=("parallel", "arbitrary"),
            vmem_limit_bytes=_vmem_limit_bytes()),
    )


def multi_headed_attention(query, key, value, params, *, num_heads):
    """query/key/value: [B, S, D] float32. params: dict of f32 weights/biases
    (weights as [D_in, D_out], i.e. transposed vs. nn.Linear.weight)."""
    B, S, D = query.shape
    assert D % num_heads == 0
    head_dim = D // num_heads
    out_dtype = query.dtype

    tq = _pick_q_tile(S)

    # bf16 activations & weights at the call boundary: half the HBM->VMEM DMA,
    # half the resident K/V blocks; the MXU consumes bf16 operands anyway.
    q_bf = query.astype(jnp.bfloat16)
    k_bf = key.astype(jnp.bfloat16)
    v_bf = value.astype(jnp.bfloat16)
    wq = params["wq"].astype(jnp.bfloat16)
    wk = params["wk"].astype(jnp.bfloat16)
    wv = params["wv"].astype(jnp.bfloat16)
    wo = params["wo"].astype(jnp.bfloat16)
    # Biases stay f32 (added to f32 accumulators), reshaped lane-dense (1, D).
    bq = params["bq"].reshape(1, D).astype(jnp.float32)
    bk = params["bk"].reshape(1, D).astype(jnp.float32)
    bv = params["bv"].reshape(1, D).astype(jnp.float32)
    bo = params["bo"].reshape(1, D).astype(jnp.float32)

    args = (q_bf, k_bf, v_bf, wq, wk, wv, wo, bq, bk, bv, bo)
    common = dict(B=B, S=S, D=D, tq=tq, num_heads=num_heads,
                  head_dim=head_dim, out_dtype=out_dtype)
    try:
        out = _build_call(single_buffer_consts=True, **common)(*args)
        return jax.block_until_ready(out)
    except Exception:
        # pl.Buffered(1) not accepted by this jax/Mosaic build: fall back to
        # default double-buffering (correctness and semantics unaffected).
        out = _build_call(single_buffer_consts=False, **common)(*args)
        return jax.block_until_ready(out)


def _reference_mha(query, key, value, params, *, num_heads):
    """Pure-JAX f32 reference mirroring the PyTorch module (eval mode)."""
    B, S, D = query.shape
    hd = D // num_heads

    def proj(x, w, b):
        return x @ w + b

    q = proj(query, params["wq"], params["bq"]).reshape(B, S, num_heads, hd).transpose(0, 2, 1, 3)
    k = proj(key,   params["wk"], params["bk"]).reshape(B, S, num_heads, hd).transpose(0, 2, 1, 3)
    v = proj(value, params["wv"], params["bv"]).reshape(B, S, num_heads, hd).transpose(0, 2, 1, 3)

    scores = jnp.einsum("bhqd,bhkd->bhqk", q, k) / math.sqrt(hd)
    attn = jax.nn.softmax(scores, axis=-1)
    ctx = jnp.einsum("bhqk,bhkd->bhqd", attn, v)
    ctx = ctx.transpose(0, 2, 1, 3).reshape(B, S, D)
    return proj(ctx, params["wo"], params["bo"])


if __name__ == "__main__":
    # Small, MHA-consistent shapes.
    B, S, D, H = 2, 8, 32, 4
    dtype = jnp.float32

    key0 = jax.random.PRNGKey(0)
    keys = jax.random.split(key0, 12)

    # Deterministic synthetic parameters (uniform, roughly nn.Linear-scale init).
    bound = 1.0 / math.sqrt(D)
    params = {
        "wq": jax.random.uniform(keys[0], (D, D), dtype, -bound, bound),
        "bq": jax.random.uniform(keys[1], (D,),   dtype, -bound, bound),
        "wk": jax.random.uniform(keys[2], (D, D), dtype, -bound, bound),
        "bk": jax.random.uniform(keys[3], (D,),   dtype, -bound, bound),
        "wv": jax.random.uniform(keys[4], (D, D), dtype, -bound, bound),
        "bv": jax.random.uniform(keys[5], (D,),   dtype, -bound, bound),
        "wo": jax.random.uniform(keys[6], (D, D), dtype, -bound, bound),
        "bo": jax.random.uniform(keys[7], (D,),   dtype, -bound, bound),
    }

    query = jax.random.normal(keys[8],  (B, S, D), dtype)
    key_a = jax.random.normal(keys[9],  (B, S, D), dtype)
    value = jax.random.normal(keys[10], (B, S, D), dtype)

    out = multi_headed_attention(query, key_a, value, params, num_heads=H)
    out = jax.block_until_ready(out)

    ref = _reference_mha(query, key_a, value, params, num_heads=H)
    assert out.shape == (B, S, D)
    # Kernel uses bf16 MXU operands / bf16 K, V, ctx storage (f32 accumulation);
    # compare against the pure-f32 reference with a correspondingly loose tol.
    assert jnp.allclose(out, ref, atol=3e-2, rtol=3e-2), "Pallas output mismatch vs reference"

    print("KERNEL_OK")
</pallas_src>

<mosaic_0001>
module attributes {stable_mosaic.version = 11 : i64} {
  func.func @_mha_kernel(%arg0: i32, %arg1: i32, %arg2: memref<1x8x32xbf16, #tpu.memory_space<vmem>>, %arg3: memref<1x8x32xbf16, #tpu.memory_space<vmem>>, %arg4: memref<1x8x32xbf16, #tpu.memory_space<vmem>>, %arg5: memref<32x32xbf16, #tpu.memory_space<vmem>>, %arg6: memref<32x32xbf16, #tpu.memory_space<vmem>>, %arg7: memref<32x32xbf16, #tpu.memory_space<vmem>>, %arg8: memref<32x32xbf16, #tpu.memory_space<vmem>>, %arg9: memref<1x32xf32, #tpu.memory_space<vmem>>, %arg10: memref<1x32xf32, #tpu.memory_space<vmem>>, %arg11: memref<1x32xf32, #tpu.memory_space<vmem>>, %arg12: memref<1x32xf32, #tpu.memory_space<vmem>>, %arg13: memref<1x8x32xf32, #tpu.memory_space<vmem>>, %arg14: memref<4x8x8xbf16, #tpu.memory_space<vmem>>, %arg15: memref<4x8x8xbf16, #tpu.memory_space<vmem>>, %arg16: memref<8x32xbf16, #tpu.memory_space<vmem>>) attributes {dimension_semantics = [#tpu.dimension_semantics<parallel>, #tpu.dimension_semantics<arbitrary>], iteration_bounds = array<i64: 2, 1>, scalar_prefetch = 0 : i64, scratch_operands = 3 : i64, tpu.core_type = #tpu.core_type<tc>, window_params = [{transform_indices = @transform_0, window_bounds = array<i64: 1, 8, 32>}, {transform_indices = @transform_1, window_bounds = array<i64: 1, 8, 32>}, {transform_indices = @transform_2, window_bounds = array<i64: 1, 8, 32>}, {pipeline_mode = #tpu.pipeline_mode<synchronous>, transform_indices = @transform_3, window_bounds = array<i64: 32, 32>}, {pipeline_mode = #tpu.pipeline_mode<synchronous>, transform_indices = @transform_4, window_bounds = array<i64: 32, 32>}, {pipeline_mode = #tpu.pipeline_mode<synchronous>, transform_indices = @transform_5, window_bounds = array<i64: 32, 32>}, {pipeline_mode = #tpu.pipeline_mode<synchronous>, transform_indices = @transform_6, window_bounds = array<i64: 32, 32>}, {pipeline_mode = #tpu.pipeline_mode<synchronous>, transform_indices = @transform_7, window_bounds = array<i64: 1, 32>}, {pipeline_mode = #tpu.pipeline_mode<synchronous>, transform_indices = @transform_8, window_bounds = array<i64: 1, 32>}, {pipeline_mode = #tpu.pipeline_mode<synchronous>, transform_indices = @transform_9, window_bounds = array<i64: 1, 32>}, {pipeline_mode = #tpu.pipeline_mode<synchronous>, transform_indices = @transform_10, window_bounds = array<i64: 1, 32>}, {transform_indices = @transform_11, window_bounds = array<i64: 1, 8, 32>}]} {
    %c0_i32 = arith.constant 0 : i32
    %0 = arith.cmpi eq, %arg1, %c0_i32 : i32
    %1 = arith.extui %0 : i1 to i32
    %c0_i32_0 = arith.constant 0 : i32
    %2 = arith.cmpi ne, %1, %c0_i32_0 : i32
    scf.if %2 {
      %c0_60 = arith.constant 0 : index
      %c0_61 = arith.constant 0 : index
      %c0_62 = arith.constant 0 : index
      %102 = vector.load %arg3[%c0_60, %c0_61, %c0_62] : memref<1x8x32xbf16, #tpu.memory_space<vmem>>, vector<1x8x32xbf16>
      %103 = vector.shape_cast %102 : vector<1x8x32xbf16> to vector<8x32xbf16>
      %c0_63 = arith.constant 0 : index
      %c0_64 = arith.constant 0 : index
      %104 = vector.load %arg6[%c0_63, %c0_64] : memref<32x32xbf16, #tpu.memory_space<vmem>>, vector<32x32xbf16>
      %cst_65 = arith.constant dense<0.000000e+00> : vector<8x32xf32>
      %105 = tpu.matmul %103, %104, %cst_65 {dimension_numbers = #tpu.dot_dimension_numbers<[1], [0], [0], [1], [0, 0, 1, 1], [], []>} : vector<8x32xbf16>, vector<32x32xbf16>, vector<8x32xf32> -> vector<8x32xf32>
      %c0_66 = arith.constant 0 : index
      %c0_67 = arith.constant 0 : index
      %106 = vector.load %arg10[%c0_66, %c0_67] : memref<1x32xf32, #tpu.memory_space<vmem>>, vector<1x32xf32>
      %107 = vector.broadcast %106 : vector<1x32xf32> to vector<8x32xf32>
      %108 = arith.addf %105, %107 : vector<8x32xf32>
      %c0_68 = arith.constant 0 : index
      %c0_69 = arith.constant 0 : index
      %c0_70 = arith.constant 0 : index
      %109 = vector.load %arg4[%c0_68, %c0_69, %c0_70] : memref<1x8x32xbf16, #tpu.memory_space<vmem>>, vector<1x8x32xbf16>
      %110 = vector.shape_cast %109 : vector<1x8x32xbf16> to vector<8x32xbf16>
      %c0_71 = arith.constant 0 : index
      %c0_72 = arith.constant 0 : index
      %111 = vector.load %arg7[%c0_71, %c0_72] : memref<32x32xbf16, #tpu.memory_space<vmem>>, vector<32x32xbf16>
      %cst_73 = arith.constant dense<0.000000e+00> : vector<8x32xf32>
      %112 = tpu.matmul %110, %111, %cst_73 {dimension_numbers = #tpu.dot_dimension_numbers<[1], [0], [0], [1], [0, 0, 1, 1], [], []>} : vector<8x32xbf16>, vector<32x32xbf16>, vector<8x32xf32> -> vector<8x32xf32>
      %c0_74 = arith.constant 0 : index
      %c0_75 = arith.constant 0 : index
      %113 = vector.load %arg11[%c0_74, %c0_75] : memref<1x32xf32, #tpu.memory_space<vmem>>, vector<1x32xf32>
      %114 = vector.broadcast %113 : vector<1x32xf32> to vector<8x32xf32>
      %115 = arith.addf %112, %114 : vector<8x32xf32>
      %116 = vector.extract_strided_slice %108 {offsets = [0, 0], sizes = [8, 8], strides = [1, 1]} : vector<8x32xf32> to vector<8x8xf32>
      %117 = tpu.transpose %116, [1, 0] : vector<8x8xf32> -> vector<8x8xf32>
      %118 = arith.truncf %117 : vector<8x8xf32> to vector<8x8xbf16>
      %c0_76 = arith.constant 0 : index
      %c0_77 = arith.constant 0 : index
      %c0_78 = arith.constant 0 : index
      %119 = vector.load %arg14[%c0_76, %c0_77, %c0_78] : memref<4x8x8xbf16, #tpu.memory_space<vmem>>, vector<1x8x8xbf16>
      %120 = vector.shape_cast %119 : vector<1x8x8xbf16> to vector<8x8xbf16>
      %121 = vector.shape_cast %118 : vector<8x8xbf16> to vector<1x8x8xbf16>
      tpu.vector_store %arg14[%c0_76, %c0_77, %c0_78], %121 {strides = array<i32>} : memref<4x8x8xbf16, #tpu.memory_space<vmem>>, vector<1x8x8xbf16>,
      %122 = vector.extract_strided_slice %115 {offsets = [0, 0], sizes = [8, 8], strides = [1, 1]} : vector<8x32xf32> to vector<8x8xf32>
      %123 = arith.truncf %122 : vector<8x8xf32> to vector<8x8xbf16>
      %c0_79 = arith.constant 0 : index
      %c0_80 = arith.constant 0 : index
      %c0_81 = arith.constant 0 : index
      %124 = vector.load %arg15[%c0_79, %c0_80, %c0_81] : memref<4x8x8xbf16, #tpu.memory_space<vmem>>, vector<1x8x8xbf16>
      %125 = vector.shape_cast %124 : vector<1x8x8xbf16> to vector<8x8xbf16>
      %126 = vector.shape_cast %123 : vector<8x8xbf16> to vector<1x8x8xbf16>
      tpu.vector_store %arg15[%c0_79, %c0_80, %c0_81], %126 {strides = array<i32>} : memref<4x8x8xbf16, #tpu.memory_space<vmem>>, vector<1x8x8xbf16>,
      %127 = vector.extract_strided_slice %108 {offsets = [0, 8], sizes = [8, 8], strides = [1, 1]} : vector<8x32xf32> to vector<8x8xf32>
      %128 = tpu.transpose %127, [1, 0] : vector<8x8xf32> -> vector<8x8xf32>
      %129 = arith.truncf %128 : vector<8x8xf32> to vector<8x8xbf16>
      %c1_82 = arith.constant 1 : index
      %c0_83 = arith.constant 0 : index
      %c0_84 = arith.constant 0 : index
      %130 = vector.load %arg14[%c1_82, %c0_83, %c0_84] : memref<4x8x8xbf16, #tpu.memory_space<vmem>>, vector<1x8x8xbf16>
      %131 = vector.shape_cast %130 : vector<1x8x8xbf16> to vector<8x8xbf16>
      %132 = vector.shape_cast %129 : vector<8x8xbf16> to vector<1x8x8xbf16>
      tpu.vector_store %arg14[%c1_82, %c0_83, %c0_84], %132 {strides = array<i32>} : memref<4x8x8xbf16, #tpu.memory_space<vmem>>, vector<1x8x8xbf16>,
      %133 = vector.extract_strided_slice %115 {offsets = [0, 8], sizes = [8, 8], strides = [1, 1]} : vector<8x32xf32> to vector<8x8xf32>
      %134 = arith.truncf %133 : vector<8x8xf32> to vector<8x8xbf16>
      %c1_85 = arith.constant 1 : index
      %c0_86 = arith.constant 0 : index
      %c0_87 = arith.constant 0 : index
      %135 = vector.load %arg15[%c1_85, %c0_86, %c0_87] : memref<4x8x8xbf16, #tpu.memory_space<vmem>>, vector<1x8x8xbf16>
      %136 = vector.shape_cast %135 : vector<1x8x8xbf16> to vector<8x8xbf16>
      %137 = vector.shape_cast %134 : vector<8x8xbf16> to vector<1x8x8xbf16>
      tpu.vector_store %arg15[%c1_85, %c0_86, %c0_87], %137 {strides = array<i32>} : memref<4x8x8xbf16, #tpu.memory_space<vmem>>, vector<1x8x8xbf16>,
      %138 = vector.extract_strided_slice %108 {offsets = [0, 16], sizes = [8, 8], strides = [1, 1]} : vector<8x32xf32> to vector<8x8xf32>
      %139 = tpu.transpose %138, [1, 0] : vector<8x8xf32> -> vector<8x8xf32>
      %140 = arith.truncf %139 : vector<8x8xf32> to vector<8x8xbf16>
      %c2_88 = arith.constant 2 : index
      %c0_89 = arith.constant 0 : index
      %c0_90 = arith.constant 0 : index
      %141 = vector.load %arg14[%c2_88, %c0_89, %c0_90] : memref<4x8x8xbf16, #tpu.memory_space<vmem>>, vector<1x8x8xbf16>
      %142 = vector.shape_cast %141 : vector<1x8x8xbf16> to vector<8x8xbf16>
      %143 = vector.shape_cast %140 : vector<8x8xbf16> to vector<1x8x8xbf16>
      tpu.vector_store %arg14[%c2_88, %c0_89, %c0_90], %143 {strides = array<i32>} : memref<4x8x8xbf16, #tpu.memory_space<vmem>>, vector<1x8x8xbf16>,
      %144 = vector.extract_strided_slice %115 {offsets = [0, 16], sizes = [8, 8], strides = [1, 1]} : vector<8x32xf32> to vector<8x8xf32>
      %145 = arith.truncf %144 : vector<8x8xf32> to vector<8x8xbf16>
      %c2_91 = arith.constant 2 : index
      %c0_92 = arith.constant 0 : index
      %c0_93 = arith.constant 0 : index
      %146 = vector.load %arg15[%c2_91, %c0_92, %c0_93] : memref<4x8x8xbf16, #tpu.memory_space<vmem>>, vector<1x8x8xbf16>
      %147 = vector.shape_cast %146 : vector<1x8x8xbf16> to vector<8x8xbf16>
      %148 = vector.shape_cast %145 : vector<8x8xbf16> to vector<1x8x8xbf16>
      tpu.vector_store %arg15[%c2_91, %c0_92, %c0_93], %148 {strides = array<i32>} : memref<4x8x8xbf16, #tpu.memory_space<vmem>>, vector<1x8x8xbf16>,
      %149 = vector.extract_strided_slice %108 {offsets = [0, 24], sizes = [8, 8], strides = [1, 1]} : vector<8x32xf32> to vector<8x8xf32>
      %150 = tpu.transpose %149, [1, 0] : vector<8x8xf32> -> vector<8x8xf32>
      %151 = arith.truncf %150 : vector<8x8xf32> to vector<8x8xbf16>
      %c3_94 = arith.constant 3 : index
      %c0_95 = arith.constant 0 : index
      %c0_96 = arith.constant 0 : index
      %152 = vector.load %arg14[%c3_94, %c0_95, %c0_96] : memref<4x8x8xbf16, #tpu.memory_space<vmem>>, vector<1x8x8xbf16>
      %153 = vector.shape_cast %152 : vector<1x8x8xbf16> to vector<8x8xbf16>
      %154 = vector.shape_cast %151 : vector<8x8xbf16> to vector<1x8x8xbf16>
      tpu.vector_store %arg14[%c3_94, %c0_95, %c0_96], %154 {strides = array<i32>} : memref<4x8x8xbf16, #tpu.memory_space<vmem>>, vector<1x8x8xbf16>,
      %155 = vector.extract_strided_slice %115 {offsets = [0, 24], sizes = [8, 8], strides = [1, 1]} : vector<8x32xf32> to vector<8x8xf32>
      %156 = arith.truncf %155 : vector<8x8xf32> to vector<8x8xbf16>
      %c3_97 = arith.constant 3 : index
      %c0_98 = arith.constant 0 : index
      %c0_99 = arith.constant 0 : index
      %157 = vector.load %arg15[%c3_97, %c0_98, %c0_99] : memref<4x8x8xbf16, #tpu.memory_space<vmem>>, vector<1x8x8xbf16>
      %158 = vector.shape_cast %157 : vector<1x8x8xbf16> to vector<8x8xbf16>
      %159 = vector.shape_cast %156 : vector<8x8xbf16> to vector<1x8x8xbf16>
      tpu.vector_store %arg15[%c3_97, %c0_98, %c0_99], %159 {strides = array<i32>} : memref<4x8x8xbf16, #tpu.memory_space<vmem>>, vector<1x8x8xbf16>,
    } else {
    }
    %c0 = arith.constant 0 : index
    %c0_1 = arith.constant 0 : index
    %c0_2 = arith.constant 0 : index
    %3 = vector.load %arg2[%c0, %c0_1, %c0_2] : memref<1x8x32xbf16, #tpu.memory_space<vmem>>, vector<1x8x32xbf16>
    %4 = vector.shape_cast %3 : vector<1x8x32xbf16> to vector<8x32xbf16>
    %c0_3 = arith.constant 0 : index
    %c0_4 = arith.constant 0 : index
    %5 = vector.load %arg5[%c0_3, %c0_4] : memref<32x32xbf16, #tpu.memory_space<vmem>>, vector<32x32xbf16>
    %cst = arith.constant dense<0.000000e+00> : vector<8x32xf32>
    %6 = tpu.matmul %4, %5, %cst {dimension_numbers = #tpu.dot_dimension_numbers<[1], [0], [0], [1], [0, 0, 1, 1], [], []>} : vector<8x32xbf16>, vector<32x32xbf16>, vector<8x32xf32> -> vector<8x32xf32>
    %c0_5 = arith.constant 0 : index
    %c0_6 = arith.constant 0 : index
    %7 = vector.load %arg9[%c0_5, %c0_6] : memref<1x32xf32, #tpu.memory_space<vmem>>, vector<1x32xf32>
    %8 = vector.broadcast %7 : vector<1x32xf32> to vector<8x32xf32>
    %9 = arith.addf %6, %8 : vector<8x32xf32>
    %cst_7 = arith.constant 0.353553385 : f32
    %10 = vector.broadcast %cst_7 : f32 to vector<8x32xf32>
    %11 = arith.mulf %9, %10 : vector<8x32xf32>
    %12 = arith.truncf %11 : vector<8x32xf32> to vector<8x32xbf16>
    %13 = vector.extract_strided_slice %12 {offsets = [0, 0], sizes = [8, 8], strides = [1, 1]} : vector<8x32xbf16> to vector<8x8xbf16>
    %c0_8 = arith.constant 0 : index
    %c0_9 = arith.constant 0 : index
    %c0_10 = arith.constant 0 : index
    %14 = vector.load %arg14[%c0_8, %c0_9, %c0_10] : memref<4x8x8xbf16, #tpu.memory_space<vmem>>, vector<1x8x8xbf16>
    %15 = vector.shape_cast %14 : vector<1x8x8xbf16> to vector<8x8xbf16>
    %cst_11 = arith.constant dense<0.000000e+00> : vector<8x8xf32>
    %16 = tpu.matmul %13, %15, %cst_11 {dimension_numbers = #tpu.dot_dimension_numbers<[1], [0], [0], [1], [0, 0, 1, 1], [], []>} : vector<8x8xbf16>, vector<8x8xbf16>, vector<8x8xf32> -> vector<8x8xf32>
    %cst_12 = arith.constant dense<0xFF800000> : vector<8xf32>
    %17 = vector.multi_reduction <maximumf>, %16, %cst_12 [1] : vector<8x8xf32> to vector<8xf32>
    %18 = vector.shape_cast %17 : vector<8xf32> to vector<8x1xf32>
    %19 = vector.broadcast %18 : vector<8x1xf32> to vector<8x8xf32>
    %20 = arith.subf %16, %19 : vector<8x8xf32>
    %21 = math.exp %20 : vector<8x8xf32>
    %cst_13 = arith.constant dense<0.000000e+00> : vector<8xf32>
    %22 = vector.multi_reduction <add>, %21, %cst_13 [1] : vector<8x8xf32> to vector<8xf32>
    %23 = vector.shape_cast %22 : vector<8xf32> to vector<8x1xf32>
    %24 = tpu.reciprocal %23 {approx = true} : vector<8x1xf32> -> vector<8x1xf32>
    %25 = vector.broadcast %24 : vector<8x1xf32> to vector<8x8xf32>
    %26 = arith.mulf %21, %25 : vector<8x8xf32>
    %27 = arith.truncf %26 : vector<8x8xf32> to vector<8x8xbf16>
    %c0_14 = arith.constant 0 : index
    %c0_15 = arith.constant 0 : index
    %c0_16 = arith.constant 0 : index
    %28 = vector.load %arg15[%c0_14, %c0_15, %c0_16] : memref<4x8x8xbf16, #tpu.memory_space<vmem>>, vector<1x8x8xbf16>
    %29 = vector.shape_cast %28 : vector<1x8x8xbf16> to vector<8x8xbf16>
    %cst_17 = arith.constant dense<0.000000e+00> : vector<8x8xf32>
    %30 = tpu.matmul %27, %29, %cst_17 {dimension_numbers = #tpu.dot_dimension_numbers<[1], [0], [0], [1], [0, 0, 1, 1], [], []>} : vector<8x8xbf16>, vector<8x8xbf16>, vector<8x8xf32> -> vector<8x8xf32>
    %31 = arith.truncf %30 : vector<8x8xf32> to vector<8x8xbf16>
    %c0_18 = arith.constant 0 : index
    %c0_19 = arith.constant 0 : index
    %32 = vector.load %arg16[%c0_18, %c0_19] : memref<8x32xbf16, #tpu.memory_space<vmem>>, vector<8x8xbf16>
    tpu.vector_store %arg16[%c0_18, %c0_19], %31 {strides = array<i32>} : memref<8x32xbf16, #tpu.memory_space<vmem>>, vector<8x8xbf16>,
    %33 = vector.extract_strided_slice %12 {offsets = [0, 8], sizes = [8, 8], strides = [1, 1]} : vector<8x32xbf16> to vector<8x8xbf16>
    %c1 = arith.constant 1 : index
    %c0_20 = arith.constant 0 : index
    %c0_21 = arith.constant 0 : index
    %34 = vector.load %arg14[%c1, %c0_20, %c0_21] : memref<4x8x8xbf16, #tpu.memory_space<vmem>>, vector<1x8x8xbf16>
    %35 = vector.shape_cast %34 : vector<1x8x8xbf16> to vector<8x8xbf16>
    %cst_22 = arith.constant dense<0.000000e+00> : vector<8x8xf32>
    %36 = tpu.matmul %33, %35, %cst_22 {dimension_numbers = #tpu.dot_dimension_numbers<[1], [0], [0], [1], [0, 0, 1, 1], [], []>} : vector<8x8xbf16>, vector<8x8xbf16>, vector<8x8xf32> -> vector<8x8xf32>
    %cst_23 = arith.constant dense<0xFF800000> : vector<8xf32>
    %37 = vector.multi_reduction <maximumf>, %36, %cst_23 [1] : vector<8x8xf32> to vector<8xf32>
    %38 = vector.shape_cast %37 : vector<8xf32> to vector<8x1xf32>
    %39 = vector.broadcast %38 : vector<8x1xf32> to vector<8x8xf32>
    %40 = arith.subf %36, %39 : vector<8x8xf32>
    %41 = math.exp %40 : vector<8x8xf32>
    %cst_24 = arith.constant dense<0.000000e+00> : vector<8xf32>
    %42 = vector.multi_reduction <add>, %41, %cst_24 [1] : vector<8x8xf32> to vector<8xf32>
    %43 = vector.shape_cast %42 : vector<8xf32> to vector<8x1xf32>
    %44 = tpu.reciprocal %43 {approx = true} : vector<8x1xf32> -> vector<8x1xf32>
    %45 = vector.broadcast %44 : vector<8x1xf32> to vector<8x8xf32>
    %46 = arith.mulf %41, %45 : vector<8x8xf32>
    %47 = arith.truncf %46 : vector<8x8xf32> to vector<8x8xbf16>
    %c1_25 = arith.constant 1 : index
    %c0_26 = arith.constant 0 : index
    %c0_27 = arith.constant 0 : index
    %48 = vector.load %arg15[%c1_25, %c0_26, %c0_27] : memref<4x8x8xbf16, #tpu.memory_space<vmem>>, vector<1x8x8xbf16>
    %49 = vector.shape_cast %48 : vector<1x8x8xbf16> to vector<8x8xbf16>
    %cst_28 = arith.constant dense<0.000000e+00> : vector<8x8xf32>
    %50 = tpu.matmul %47, %49, %cst_28 {dimension_numbers = #tpu.dot_dimension_numbers<[1], [0], [0], [1], [0, 0, 1, 1], [], []>} : vector<8x8xbf16>, vector<8x8xbf16>, vector<8x8xf32> -> vector<8x8xf32>
    %51 = arith.truncf %50 : vector<8x8xf32> to vector<8x8xbf16>
    %c0_29 = arith.constant 0 : index
    %c8 = arith.constant 8 : index
    %52 = vector.load %arg16[%c0_29, %c8] : memref<8x32xbf16, #tpu.memory_space<vmem>>, vector<8x8xbf16>
    tpu.vector_store %arg16[%c0_29, %c8], %51 {strides = array<i32>} : memref<8x32xbf16, #tpu.memory_space<vmem>>, vector<8x8xbf16>,
    %53 = vector.extract_strided_slice %12 {offsets = [0, 16], sizes = [8, 8], strides = [1, 1]} : vector<8x32xbf16> to vector<8x8xbf16>
    %c2 = arith.constant 2 : index
    %c0_30 = arith.constant 0 : index
    %c0_31 = arith.constant 0 : index
    %54 = vector.load %arg14[%c2, %c0_30, %c0_31] : memref<4x8x8xbf16, #tpu.memory_space<vmem>>, vector<1x8x8xbf16>
    %55 = vector.shape_cast %54 : vector<1x8x8xbf16> to vector<8x8xbf16>
    %cst_32 = arith.constant dense<0.000000e+00> : vector<8x8xf32>
    %56 = tpu.matmul %53, %55, %cst_32 {dimension_numbers = #tpu.dot_dimension_numbers<[1], [0], [0], [1], [0, 0, 1, 1], [], []>} : vector<8x8xbf16>, vector<8x8xbf16>, vector<8x8xf32> -> vector<8x8xf32>
    %cst_33 = arith.constant dense<0xFF800000> : vector<8xf32>
    %57 = vector.multi_reduction <maximumf>, %56, %cst_33 [1] : vector<8x8xf32> to vector<8xf32>
    %58 = vector.shape_cast %57 : vector<8xf32> to vector<8x1xf32>
    %59 = vector.broadcast %58 : vector<8x1xf32> to vector<8x8xf32>
    %60 = arith.subf %56, %59 : vector<8x8xf32>
    %61 = math.exp %60 : vector<8x8xf32>
    %cst_34 = arith.constant dense<0.000000e+00> : vector<8xf32>
    %62 = vector.multi_reduction <add>, %61, %cst_34 [1] : vector<8x8xf32> to vector<8xf32>
    %63 = vector.shape_cast %62 : vector<8xf32> to vector<8x1xf32>
    %64 = tpu.reciprocal %63 {approx = true} : vector<8x1xf32> -> vector<8x1xf32>
    %65 = vector.broadcast %64 : vector<8x1xf32> to vector<8x8xf32>
    %66 = arith.mulf %61, %65 : vector<8x8xf32>
    %67 = arith.truncf %66 : vector<8x8xf32> to vector<8x8xbf16>
    %c2_35 = arith.constant 2 : index
    %c0_36 = arith.constant 0 : index
    %c0_37 = arith.constant 0 : index
    %68 = vector.load %arg15[%c2_35, %c0_36, %c0_37] : memref<4x8x8xbf16, #tpu.memory_space<vmem>>, vector<1x8x8xbf16>
    %69 = vector.shape_cast %68 : vector<1x8x8xbf16> to vector<8x8xbf16>
    %cst_38 = arith.constant dense<0.000000e+00> : vector<8x8xf32>
    %70 = tpu.matmul %67, %69, %cst_38 {dimension_numbers = #tpu.dot_dimension_numbers<[1], [0], [0], [1], [0, 0, 1, 1], [], []>} : vector<8x8xbf16>, vector<8x8xbf16>, vector<8x8xf32> -> vector<8x8xf32>
    %71 = arith.truncf %70 : vector<8x8xf32> to vector<8x8xbf16>
    %c0_39 = arith.constant 0 : index
    %c16 = arith.constant 16 : index
    %72 = vector.load %arg16[%c0_39, %c16] : memref<8x32xbf16, #tpu.memory_space<vmem>>, vector<8x8xbf16>
    tpu.vector_store %arg16[%c0_39, %c16], %71 {strides = array<i32>} : memref<8x32xbf16, #tpu.memory_space<vmem>>, vector<8x8xbf16>,
    %73 = vector.extract_strided_slice %12 {offsets = [0, 24], sizes = [8, 8], strides = [1, 1]} : vector<8x32xbf16> to vector<8x8xbf16>
    %c3 = arith.constant 3 : index
    %c0_40 = arith.constant 0 : index
    %c0_41 = arith.constant 0 : index
    %74 = vector.load %arg14[%c3, %c0_40, %c0_41] : memref<4x8x8xbf16, #tpu.memory_space<vmem>>, vector<1x8x8xbf16>
    %75 = vector.shape_cast %74 : vector<1x8x8xbf16> to vector<8x8xbf16>
    %cst_42 = arith.constant dense<0.000000e+00> : vector<8x8xf32>
    %76 = tpu.matmul %73, %75, %cst_42 {dimension_numbers = #tpu.dot_dimension_numbers<[1], [0], [0], [1], [0, 0, 1, 1], [], []>} : vector<8x8xbf16>, vector<8x8xbf16>, vector<8x8xf32> -> vector<8x8xf32>
    %cst_43 = arith.constant dense<0xFF800000> : vector<8xf32>
    %77 = vector.multi_reduction <maximumf>, %76, %cst_43 [1] : vector<8x8xf32> to vector<8xf32>
    %78 = vector.shape_cast %77 : vector<8xf32> to vector<8x1xf32>
    %79 = vector.broadcast %78 : vector<8x1xf32> to vector<8x8xf32>
    %80 = arith.subf %76, %79 : vector<8x8xf32>
    %81 = math.exp %80 : vector<8x8xf32>
    %cst_44 = arith.constant dense<0.000000e+00> : vector<8xf32>
    %82 = vector.multi_reduction <add>, %81, %cst_44 [1] : vector<8x8xf32> to vector<8xf32>
    %83 = vector.shape_cast %82 : vector<8xf32> to vector<8x1xf32>
    %84 = tpu.reciprocal %83 {approx = true} : vector<8x1xf32> -> vector<8x1xf32>
    %85 = vector.broadcast %84 : vector<8x1xf32> to vector<8x8xf32>
    %86 = arith.mulf %81, %85 : vector<8x8xf32>
    %87 = arith.truncf %86 : vector<8x8xf32> to vector<8x8xbf16>
    %c3_45 = arith.constant 3 : index
    %c0_46 = arith.constant 0 : index
    %c0_47 = arith.constant 0 : index
    %88 = vector.load %arg15[%c3_45, %c0_46, %c0_47] : memref<4x8x8xbf16, #tpu.memory_space<vmem>>, vector<1x8x8xbf16>
    %89 = vector.shape_cast %88 : vector<1x8x8xbf16> to vector<8x8xbf16>
    %cst_48 = arith.constant dense<0.000000e+00> : vector<8x8xf32>
    %90 = tpu.matmul %87, %89, %cst_48 {dimension_numbers = #tpu.dot_dimension_numbers<[1], [0], [0], [1], [0, 0, 1, 1], [], []>} : vector<8x8xbf16>, vector<8x8xbf16>, vector<8x8xf32> -> vector<8x8xf32>
    %91 = arith.truncf %90 : vector<8x8xf32> to vector<8x8xbf16>
    %c0_49 = arith.constant 0 : index
    %c24 = arith.constant 24 : index
    %92 = vector.load %arg16[%c0_49, %c24] : memref<8x32xbf16, #tpu.memory_space<vmem>>, vector<8x8xbf16>
    tpu.vector_store %arg16[%c0_49, %c24], %91 {strides = array<i32>} : memref<8x32xbf16, #tpu.memory_space<vmem>>, vector<8x8xbf16>,
    %c0_50 = arith.constant 0 : index
    %c0_51 = arith.constant 0 : index
    %93 = vector.load %arg16[%c0_50, %c0_51] : memref<8x32xbf16, #tpu.memory_space<vmem>>, vector<8x32xbf16>
    %c0_52 = arith.constant 0 : index
    %c0_53 = arith.constant 0 : index
    %94 = vector.load %arg8[%c0_52, %c0_53] : memref<32x32xbf16, #tpu.memory_space<vmem>>, vector<32x32xbf16>
    %cst_54 = arith.constant dense<0.000000e+00> : vector<8x32xf32>
    %95 = tpu.matmul %93, %94, %cst_54 {dimension_numbers = #tpu.dot_dimension_numbers<[1], [0], [0], [1], [0, 0, 1, 1], [], []>} : vector<8x32xbf16>, vector<32x32xbf16>, vector<8x32xf32> -> vector<8x32xf32>
    %c0_55 = arith.constant 0 : index
    %c0_56 = arith.constant 0 : index
    %96 = vector.load %arg12[%c0_55, %c0_56] : memref<1x32xf32, #tpu.memory_space<vmem>>, vector<1x32xf32>
    %97 = vector.broadcast %96 : vector<1x32xf32> to vector<8x32xf32>
    %98 = arith.addf %95, %97 : vector<8x32xf32>
    %c0_57 = arith.constant 0 : index
    %c0_58 = arith.constant 0 : index
    %c0_59 = arith.constant 0 : index
    %99 = vector.load %arg13[%c0_57, %c0_58, %c0_59] : memref<1x8x32xf32, #tpu.memory_space<vmem>>, vector<1x8x32xf32>
    %100 = vector.shape_cast %99 : vector<1x8x32xf32> to vector<8x32xf32>
    %101 = vector.shape_cast %98 : vector<8x32xf32> to vector<1x8x32xf32>
    tpu.vector_store %arg13[%c0_57, %c0_58, %c0_59], %101 {strides = array<i32>} : memref<1x8x32xf32, #tpu.memory_space<vmem>>, vector<1x8x32xf32>,
    return
  }
  func.func @transform_0(%arg0: i32, %arg1: i32) -> (i32, i32, i32) {
    %c0_i32 = arith.constant 0 : i32
    %c0_i32_0 = arith.constant 0 : i32
    return %arg0, %arg1, %c0_i32 : i32, i32, i32
  }
  func.func @transform_1(%arg0: i32, %arg1: i32) -> (i32, i32, i32) {
    %c0_i32 = arith.constant 0 : i32
    %c0_i32_0 = arith.constant 0 : i32
    %c0_i32_1 = arith.constant 0 : i32
    return %arg0, %c0_i32, %c0_i32_0 : i32, i32, i32
  }
  func.func @transform_2(%arg0: i32, %arg1: i32) -> (i32, i32, i32) {
    %c0_i32 = arith.constant 0 : i32
    %c0_i32_0 = arith.constant 0 : i32
    %c0_i32_1 = arith.constant 0 : i32
    return %arg0, %c0_i32, %c0_i32_0 : i32, i32, i32
  }
  func.func @transform_3(%arg0: i32, %arg1: i32) -> (i32, i32) {
    %c0_i32 = arith.constant 0 : i32
    %c0_i32_0 = arith.constant 0 : i32
    %c0_i32_1 = arith.constant 0 : i32
    return %c0_i32, %c0_i32_0 : i32, i32
  }
  func.func @transform_4(%arg0: i32, %arg1: i32) -> (i32, i32) {
    %c0_i32 = arith.constant 0 : i32
    %c0_i32_0 = arith.constant 0 : i32
    %c0_i32_1 = arith.constant 0 : i32
    return %c0_i32, %c0_i32_0 : i32, i32
  }
  func.func @transform_5(%arg0: i32, %arg1: i32) -> (i32, i32) {
    %c0_i32 = arith.constant 0 : i32
    %c0_i32_0 = arith.constant 0 : i32
    %c0_i32_1 = arith.constant 0 : i32
    return %c0_i32, %c0_i32_0 : i32, i32
  }
  func.func @transform_6(%arg0: i32, %arg1: i32) -> (i32, i32) {
    %c0_i32 = arith.constant 0 : i32
    %c0_i32_0 = arith.constant 0 : i32
    %c0_i32_1 = arith.constant 0 : i32
    return %c0_i32, %c0_i32_0 : i32, i32
  }
  func.func @transform_7(%arg0: i32, %arg1: i32) -> (i32, i32) {
    %c0_i32 = arith.constant 0 : i32
    %c0_i32_0 = arith.constant 0 : i32
    %c0_i32_1 = arith.constant 0 : i32
    return %c0_i32, %c0_i32_0 : i32, i32
  }
  func.func @transform_8(%arg0: i32, %arg1: i32) -> (i32, i32) {
    %c0_i32 = arith.constant 0 : i32
    %c0_i32_0 = arith.constant 0 : i32
    %c0_i32_1 = arith.constant 0 : i32
    return %c0_i32, %c0_i32_0 : i32, i32
  }
  func.func @transform_9(%arg0: i32, %arg1: i32) -> (i32, i32) {
    %c0_i32 = arith.constant 0 : i32
    %c0_i32_0 = arith.constant 0 : i32
    %c0_i32_1 = arith.constant 0 : i32
    return %c0_i32, %c0_i32_0 : i32, i32
  }
  func.func @transform_10(%arg0: i32, %arg1: i32) -> (i32, i32) {
    %c0_i32 = arith.constant 0 : i32
    %c0_i32_0 = arith.constant 0 : i32
    %c0_i32_1 = arith.constant 0 : i32
    return %c0_i32, %c0_i32_0 : i32, i32
  }
  func.func @transform_11(%arg0: i32, %arg1: i32) -> (i32, i32, i32) {
    %c0_i32 = arith.constant 0 : i32
    %c0_i32_0 = arith.constant 0 : i32
    return %arg0, %arg1, %c0_i32 : i32, i32, i32
  }
}

module attributes {stable_mosaic.version = 11 : i64} {
  func.func @_mha_kernel(%arg0: i32, %arg1: i32, %arg2: memref<1x8x32xbf16, #tpu.memory_space<vmem>>, %arg3: memref<1x8x32xbf16, #tpu.memory_space<vmem>>, %arg4: memref<1x8x32xbf16, #tpu.memory_space<vmem>>, %arg5: memref<32x32xbf16, #tpu.memory_space<vmem>>, %arg6: memref<32x32xbf16, #tpu.memory_space<vmem>>, %arg7: memref<32x32xbf16, #tpu.memory_space<vmem>>, %arg8: memref<32x32xbf16, #tpu.memory_space<vmem>>, %arg9: memref<1x32xf32, #tpu.memory_space<vmem>>, %arg10: memref<1x32xf32, #tpu.memory_space<vmem>>, %arg11: memref<1x32xf32, #tpu.memory_space<vmem>>, %arg12: memref<1x32xf32, #tpu.memory_space<vmem>>, %arg13: memref<1x8x32xf32, #tpu.memory_space<vmem>>, %arg14: memref<4x8x8xbf16, #tpu.memory_space<vmem>>, %arg15: memref<4x8x8xbf16, #tpu.memory_space<vmem>>, %arg16: memref<8x32xbf16, #tpu.memory_space<vmem>>) attributes {dimension_semantics = [#tpu.dimension_semantics<parallel>, #tpu.dimension_semantics<arbitrary>], iteration_bounds = array<i64: 2, 1>, scalar_prefetch = 0 : i64, scratch_operands = 3 : i64, tpu.core_type = #tpu.core_type<tc>, window_params = [{transform_indices = @transform_0, window_bounds = array<i64: 1, 8, 32>}, {transform_indices = @transform_1, window_bounds = array<i64: 1, 8, 32>}, {transform_indices = @transform_2, window_bounds = array<i64: 1, 8, 32>}, {pipeline_mode = #tpu.pipeline_mode<synchronous>, transform_indices = @transform_3, window_bounds = array<i64: 32, 32>}, {pipeline_mode = #tpu.pipeline_mode<synchronous>, transform_indices = @transform_4, window_bounds = array<i64: 32, 32>}, {pipeline_mode = #tpu.pipeline_mode<synchronous>, transform_indices = @transform_5, window_bounds = array<i64: 32, 32>}, {pipeline_mode = #tpu.pipeline_mode<synchronous>, transform_indices = @transform_6, window_bounds = array<i64: 32, 32>}, {pipeline_mode = #tpu.pipeline_mode<synchronous>, transform_indices = @transform_7, window_bounds = array<i64: 1, 32>}, {pipeline_mode = #tpu.pipeline_mode<synchronous>, transform_indices = @transform_8, window_bounds = array<i64: 1, 32>}, {pipeline_mode = #tpu.pipeline_mode<synchronous>, transform_indices = @transform_9, window_bounds = array<i64: 1, 32>}, {pipeline_mode = #tpu.pipeline_mode<synchronous>, transform_indices = @transform_10, window_bounds = array<i64: 1, 32>}, {transform_indices = @transform_11, window_bounds = array<i64: 1, 8, 32>}]} {
    %c0_i32 = arith.constant 0 : i32
    %0 = arith.cmpi eq, %arg1, %c0_i32 : i32
    %1 = arith.extui %0 : i1 to i32
    %c0_i32_0 = arith.constant 0 : i32
    %2 = arith.cmpi ne, %1, %c0_i32_0 : i32
    scf.if %2 {
      %c0_60 = arith.constant 0 : index
      %c0_61 = arith.constant 0 : index
      %c0_62 = arith.constant 0 : index
      %102 = vector.load %arg3[%c0_60, %c0_61, %c0_62] : memref<1x8x32xbf16, #tpu.memory_space<vmem>>, vector<1x8x32xbf16>
      %103 = vector.shape_cast %102 : vector<1x8x32xbf16> to vector<8x32xbf16>
      %c0_63 = arith.constant 0 : index
      %c0_64 = arith.constant 0 : index
      %104 = vector.load %arg6[%c0_63, %c0_64] : memref<32x32xbf16, #tpu.memory_space<vmem>>, vector<32x32xbf16>
      %cst_65 = arith.constant dense<0.000000e+00> : vector<8x32xf32>
      %105 = tpu.matmul %103, %104, %cst_65 {dimension_numbers = #tpu.dot_dimension_numbers<[1], [0], [0], [1], [0, 0, 1, 1], [], []>} : vector<8x32xbf16>, vector<32x32xbf16>, vector<8x32xf32> -> vector<8x32xf32>
      %c0_66 = arith.constant 0 : index
      %c0_67 = arith.constant 0 : index
      %106 = vector.load %arg10[%c0_66, %c0_67] : memref<1x32xf32, #tpu.memory_space<vmem>>, vector<1x32xf32>
      %107 = vector.broadcast %106 : vector<1x32xf32> to vector<8x32xf32>
      %108 = arith.addf %105, %107 : vector<8x32xf32>
      %c0_68 = arith.constant 0 : index
      %c0_69 = arith.constant 0 : index
      %c0_70 = arith.constant 0 : index
      %109 = vector.load %arg4[%c0_68, %c0_69, %c0_70] : memref<1x8x32xbf16, #tpu.memory_space<vmem>>, vector<1x8x32xbf16>
      %110 = vector.shape_cast %109 : vector<1x8x32xbf16> to vector<8x32xbf16>
      %c0_71 = arith.constant 0 : index
      %c0_72 = arith.constant 0 : index
      %111 = vector.load %arg7[%c0_71, %c0_72] : memref<32x32xbf16, #tpu.memory_space<vmem>>, vector<32x32xbf16>
      %cst_73 = arith.constant dense<0.000000e+00> : vector<8x32xf32>
      %112 = tpu.matmul %110, %111, %cst_73 {dimension_numbers = #tpu.dot_dimension_numbers<[1], [0], [0], [1], [0, 0, 1, 1], [], []>} : vector<8x32xbf16>, vector<32x32xbf16>, vector<8x32xf32> -> vector<8x32xf32>
      %c0_74 = arith.constant 0 : index
      %c0_75 = arith.constant 0 : index
      %113 = vector.load %arg11[%c0_74, %c0_75] : memref<1x32xf32, #tpu.memory_space<vmem>>, vector<1x32xf32>
      %114 = vector.broadcast %113 : vector<1x32xf32> to vector<8x32xf32>
      %115 = arith.addf %112, %114 : vector<8x32xf32>
      %116 = vector.extract_strided_slice %108 {offsets = [0, 0], sizes = [8, 8], strides = [1, 1]} : vector<8x32xf32> to vector<8x8xf32>
      %117 = tpu.transpose %116, [1, 0] : vector<8x8xf32> -> vector<8x8xf32>
      %118 = arith.truncf %117 : vector<8x8xf32> to vector<8x8xbf16>
      %c0_76 = arith.constant 0 : index
      %c0_77 = arith.constant 0 : index
      %c0_78 = arith.constant 0 : index
      %119 = vector.load %arg14[%c0_76, %c0_77, %c0_78] : memref<4x8x8xbf16, #tpu.memory_space<vmem>>, vector<1x8x8xbf16>
      %120 = vector.shape_cast %119 : vector<1x8x8xbf16> to vector<8x8xbf16>
      %121 = vector.shape_cast %118 : vector<8x8xbf16> to vector<1x8x8xbf16>
      tpu.vector_store %arg14[%c0_76, %c0_77, %c0_78], %121 {strides = array<i32>} : memref<4x8x8xbf16, #tpu.memory_space<vmem>>, vector<1x8x8xbf16>,
      %122 = vector.extract_strided_slice %115 {offsets = [0, 0], sizes = [8, 8], strides = [1, 1]} : vector<8x32xf32> to vector<8x8xf32>
      %123 = arith.truncf %122 : vector<8x8xf32> to vector<8x8xbf16>
      %c0_79 = arith.constant 0 : index
      %c0_80 = arith.constant 0 : index
      %c0_81 = arith.constant 0 : index
      %124 = vector.load %arg15[%c0_79, %c0_80, %c0_81] : memref<4x8x8xbf16, #tpu.memory_space<vmem>>, vector<1x8x8xbf16>
      %125 = vector.shape_cast %124 : vector<1x8x8xbf16> to vector<8x8xbf16>
      %126 = vector.shape_cast %123 : vector<8x8xbf16> to vector<1x8x8xbf16>
      tpu.vector_store %arg15[%c0_79, %c0_80, %c0_81], %126 {strides = array<i32>} : memref<4x8x8xbf16, #tpu.memory_space<vmem>>, vector<1x8x8xbf16>,
      %127 = vector.extract_strided_slice %108 {offsets = [0, 8], sizes = [8, 8], strides = [1, 1]} : vector<8x32xf32> to vector<8x8xf32>
      %128 = tpu.transpose %127, [1, 0] : vector<8x8xf32> -> vector<8x8xf32>
      %129 = arith.truncf %128 : vector<8x8xf32> to vector<8x8xbf16>
      %c1_82 = arith.constant 1 : index
      %c0_83 = arith.constant 0 : index
      %c0_84 = arith.constant 0 : index
      %130 = vector.load %arg14[%c1_82, %c0_83, %c0_84] : memref<4x8x8xbf16, #tpu.memory_space<vmem>>, vector<1x8x8xbf16>
      %131 = vector.shape_cast %130 : vector<1x8x8xbf16> to vector<8x8xbf16>
      %132 = vector.shape_cast %129 : vector<8x8xbf16> to vector<1x8x8xbf16>
      tpu.vector_store %arg14[%c1_82, %c0_83, %c0_84], %132 {strides = array<i32>} : memref<4x8x8xbf16, #tpu.memory_space<vmem>>, vector<1x8x8xbf16>,
      %133 = vector.extract_strided_slice %115 {offsets = [0, 8], sizes = [8, 8], strides = [1, 1]} : vector<8x32xf32> to vector<8x8xf32>
      %134 = arith.truncf %133 : vector<8x8xf32> to vector<8x8xbf16>
      %c1_85 = arith.constant 1 : index
      %c0_86 = arith.constant 0 : index
      %c0_87 = arith.constant 0 : index
      %135 = vector.load %arg15[%c1_85, %c0_86, %c0_87] : memref<4x8x8xbf16, #tpu.memory_space<vmem>>, vector<1x8x8xbf16>
      %136 = vector.shape_cast %135 : vector<1x8x8xbf16> to vector<8x8xbf16>
      %137 = vector.shape_cast %134 : vector<8x8xbf16> to vector<1x8x8xbf16>
      tpu.vector_store %arg15[%c1_85, %c0_86, %c0_87], %137 {strides = array<i32>} : memref<4x8x8xbf16, #tpu.memory_space<vmem>>, vector<1x8x8xbf16>,
      %138 = vector.extract_strided_slice %108 {offsets = [0, 16], sizes = [8, 8], strides = [1, 1]} : vector<8x32xf32> to vector<8x8xf32>
      %139 = tpu.transpose %138, [1, 0] : vector<8x8xf32> -> vector<8x8xf32>
      %140 = arith.truncf %139 : vector<8x8xf32> to vector<8x8xbf16>
      %c2_88 = arith.constant 2 : index
      %c0_89 = arith.constant 0 : index
      %c0_90 = arith.constant 0 : index
      %141 = vector.load %arg14[%c2_88, %c0_89, %c0_90] : memref<4x8x8xbf16, #tpu.memory_space<vmem>>, vector<1x8x8xbf16>
      %142 = vector.shape_cast %141 : vector<1x8x8xbf16> to vector<8x8xbf16>
      %143 = vector.shape_cast %140 : vector<8x8xbf16> to vector<1x8x8xbf16>
      tpu.vector_store %arg14[%c2_88, %c0_89, %c0_90], %143 {strides = array<i32>} : memref<4x8x8xbf16, #tpu.memory_space<vmem>>, vector<1x8x8xbf16>,
      %144 = vector.extract_strided_slice %115 {offsets = [0, 16], sizes = [8, 8], strides = [1, 1]} : vector<8x32xf32> to vector<8x8xf32>
      %145 = arith.truncf %144 : vector<8x8xf32> to vector<8x8xbf16>
      %c2_91 = arith.constant 2 : index
      %c0_92 = arith.constant 0 : index
      %c0_93 = arith.constant 0 : index
      %146 = vector.load %arg15[%c2_91, %c0_92, %c0_93] : memref<4x8x8xbf16, #tpu.memory_space<vmem>>, vector<1x8x8xbf16>
      %147 = vector.shape_cast %146 : vector<1x8x8xbf16> to vector<8x8xbf16>
      %148 = vector.shape_cast %145 : vector<8x8xbf16> to vector<1x8x8xbf16>
      tpu.vector_store %arg15[%c2_91, %c0_92, %c0_93], %148 {strides = array<i32>} : memref<4x8x8xbf16, #tpu.memory_space<vmem>>, vector<1x8x8xbf16>,
      %149 = vector.extract_strided_slice %108 {offsets = [0, 24], sizes = [8, 8], strides = [1, 1]} : vector<8x32xf32> to vector<8x8xf32>
      %150 = tpu.transpose %149, [1, 0] : vector<8x8xf32> -> vector<8x8xf32>
      %151 = arith.truncf %150 : vector<8x8xf32> to vector<8x8xbf16>
      %c3_94 = arith.constant 3 : index
      %c0_95 = arith.constant 0 : index
      %c0_96 = arith.constant 0 : index
      %152 = vector.load %arg14[%c3_94, %c0_95, %c0_96] : memref<4x8x8xbf16, #tpu.memory_space<vmem>>, vector<1x8x8xbf16>
      %153 = vector.shape_cast %152 : vector<1x8x8xbf16> to vector<8x8xbf16>
      %154 = vector.shape_cast %151 : vector<8x8xbf16> to vector<1x8x8xbf16>
      tpu.vector_store %arg14[%c3_94, %c0_95, %c0_96], %154 {strides = array<i32>} : memref<4x8x8xbf16, #tpu.memory_space<vmem>>, vector<1x8x8xbf16>,
      %155 = vector.extract_strided_slice %115 {offsets = [0, 24], sizes = [8, 8], strides = [1, 1]} : vector<8x32xf32> to vector<8x8xf32>
      %156 = arith.truncf %155 : vector<8x8xf32> to vector<8x8xbf16>
      %c3_97 = arith.constant 3 : index
      %c0_98 = arith.constant 0 : index
      %c0_99 = arith.constant 0 : index
      %157 = vector.load %arg15[%c3_97, %c0_98, %c0_99] : memref<4x8x8xbf16, #tpu.memory_space<vmem>>, vector<1x8x8xbf16>
      %158 = vector.shape_cast %157 : vector<1x8x8xbf16> to vector<8x8xbf16>
      %159 = vector.shape_cast %156 : vector<8x8xbf16> to vector<1x8x8xbf16>
      tpu.vector_store %arg15[%c3_97, %c0_98, %c0_99], %159 {strides = array<i32>} : memref<4x8x8xbf16, #tpu.memory_space<vmem>>, vector<1x8x8xbf16>,
    } else {
    }
    %c0 = arith.constant 0 : index
    %c0_1 = arith.constant 0 : index
    %c0_2 = arith.constant 0 : index
    %3 = vector.load %arg2[%c0, %c0_1, %c0_2] : memref<1x8x32xbf16, #tpu.memory_space<vmem>>, vector<1x8x32xbf16>
    %4 = vector.shape_cast %3 : vector<1x8x32xbf16> to vector<8x32xbf16>
    %c0_3 = arith.constant 0 : index
    %c0_4 = arith.constant 0 : index
    %5 = vector.load %arg5[%c0_3, %c0_4] : memref<32x32xbf16, #tpu.memory_space<vmem>>, vector<32x32xbf16>
    %cst = arith.constant dense<0.000000e+00> : vector<8x32xf32>
    %6 = tpu.matmul %4, %5, %cst {dimension_numbers = #tpu.dot_dimension_numbers<[1], [0], [0], [1], [0, 0, 1, 1], [], []>} : vector<8x32xbf16>, vector<32x32xbf16>, vector<8x32xf32> -> vector<8x32xf32>
    %c0_5 = arith.constant 0 : index
    %c0_6 = arith.constant 0 : index
    %7 = vector.load %arg9[%c0_5, %c0_6] : memref<1x32xf32, #tpu.memory_space<vmem>>, vector<1x32xf32>
    %8 = vector.broadcast %7 : vector<1x32xf32> to vector<8x32xf32>
    %9 = arith.addf %6, %8 : vector<8x32xf32>
    %cst_7 = arith.constant 0.353553385 : f32
    %10 = vector.broadcast %cst_7 : f32 to vector<8x32xf32>
    %11 = arith.mulf %9, %10 : vector<8x32xf32>
    %12 = arith.truncf %11 : vector<8x32xf32> to vector<8x32xbf16>
    %13 = vector.extract_strided_slice %12 {offsets = [0, 0], sizes = [8, 8], strides = [1, 1]} : vector<8x32xbf16> to vector<8x8xbf16>
    %c0_8 = arith.constant 0 : index
    %c0_9 = arith.constant 0 : index
    %c0_10 = arith.constant 0 : index
    %14 = vector.load %arg14[%c0_8, %c0_9, %c0_10] : memref<4x8x8xbf16, #tpu.memory_space<vmem>>, vector<1x8x8xbf16>
    %15 = vector.shape_cast %14 : vector<1x8x8xbf16> to vector<8x8xbf16>
    %cst_11 = arith.constant dense<0.000000e+00> : vector<8x8xf32>
    %16 = tpu.matmul %13, %15, %cst_11 {dimension_numbers = #tpu.dot_dimension_numbers<[1], [0], [0], [1], [0, 0, 1, 1], [], []>} : vector<8x8xbf16>, vector<8x8xbf16>, vector<8x8xf32> -> vector<8x8xf32>
    %cst_12 = arith.constant dense<0xFF800000> : vector<8xf32>
    %17 = vector.multi_reduction <maximumf>, %16, %cst_12 [1] : vector<8x8xf32> to vector<8xf32>
    %18 = vector.shape_cast %17 : vector<8xf32> to vector<8x1xf32>
    %19 = vector.broadcast %18 : vector<8x1xf32> to vector<8x8xf32>
    %20 = arith.subf %16, %19 : vector<8x8xf32>
    %21 = math.exp %20 : vector<8x8xf32>
    %cst_13 = arith.constant dense<0.000000e+00> : vector<8xf32>
    %22 = vector.multi_reduction <add>, %21, %cst_13 [1] : vector<8x8xf32> to vector<8xf32>
    %23 = vector.shape_cast %22 : vector<8xf32> to vector<8x1xf32>
    %24 = tpu.reciprocal %23 {approx = true} : vector<8x1xf32> -> vector<8x1xf32>
    %25 = vector.broadcast %24 : vector<8x1xf32> to vector<8x8xf32>
    %26 = arith.mulf %21, %25 : vector<8x8xf32>
    %27 = arith.truncf %26 : vector<8x8xf32> to vector<8x8xbf16>
    %c0_14 = arith.constant 0 : index
    %c0_15 = arith.constant 0 : index
    %c0_16 = arith.constant 0 : index
    %28 = vector.load %arg15[%c0_14, %c0_15, %c0_16] : memref<4x8x8xbf16, #tpu.memory_space<vmem>>, vector<1x8x8xbf16>
    %29 = vector.shape_cast %28 : vector<1x8x8xbf16> to vector<8x8xbf16>
    %cst_17 = arith.constant dense<0.000000e+00> : vector<8x8xf32>
    %30 = tpu.matmul %27, %29, %cst_17 {dimension_numbers = #tpu.dot_dimension_numbers<[1], [0], [0], [1], [0, 0, 1, 1], [], []>} : vector<8x8xbf16>, vector<8x8xbf16>, vector<8x8xf32> -> vector<8x8xf32>
    %31 = arith.truncf %30 : vector<8x8xf32> to vector<8x8xbf16>
    %c0_18 = arith.constant 0 : index
    %c0_19 = arith.constant 0 : index
    %32 = vector.load %arg16[%c0_18, %c0_19] : memref<8x32xbf16, #tpu.memory_space<vmem>>, vector<8x8xbf16>
    tpu.vector_store %arg16[%c0_18, %c0_19], %31 {strides = array<i32>} : memref<8x32xbf16, #tpu.memory_space<vmem>>, vector<8x8xbf16>,
    %33 = vector.extract_strided_slice %12 {offsets = [0, 8], sizes = [8, 8], strides = [1, 1]} : vector<8x32xbf16> to vector<8x8xbf16>
    %c1 = arith.constant 1 : index
    %c0_20 = arith.constant 0 : index
    %c0_21 = arith.constant 0 : index
    %34 = vector.load %arg14[%c1, %c0_20, %c0_21] : memref<4x8x8xbf16, #tpu.memory_space<vmem>>, vector<1x8x8xbf16>
    %35 = vector.shape_cast %34 : vector<1x8x8xbf16> to vector<8x8xbf16>
    %cst_22 = arith.constant dense<0.000000e+00> : vector<8x8xf32>
    %36 = tpu.matmul %33, %35, %cst_22 {dimension_numbers = #tpu.dot_dimension_numbers<[1], [0], [0], [1], [0, 0, 1, 1], [], []>} : vector<8x8xbf16>, vector<8x8xbf16>, vector<8x8xf32> -> vector<8x8xf32>
    %cst_23 = arith.constant dense<0xFF800000> : vector<8xf32>
    %37 = vector.multi_reduction <maximumf>, %36, %cst_23 [1] : vector<8x8xf32> to vector<8xf32>
    %38 = vector.shape_cast %37 : vector<8xf32> to vector<8x1xf32>
    %39 = vector.broadcast %38 : vector<8x1xf32> to vector<8x8xf32>
    %40 = arith.subf %36, %39 : vector<8x8xf32>
    %41 = math.exp %40 : vector<8x8xf32>
    %cst_24 = arith.constant dense<0.000000e+00> : vector<8xf32>
    %42 = vector.multi_reduction <add>, %41, %cst_24 [1] : vector<8x8xf32> to vector<8xf32>
    %43 = vector.shape_cast %42 : vector<8xf32> to vector<8x1xf32>
    %44 = tpu.reciprocal %43 {approx = true} : vector<8x1xf32> -> vector<8x1xf32>
    %45 = vector.broadcast %44 : vector<8x1xf32> to vector<8x8xf32>
    %46 = arith.mulf %41, %45 : vector<8x8xf32>
    %47 = arith.truncf %46 : vector<8x8xf32> to vector<8x8xbf16>
    %c1_25 = arith.constant 1 : index
    %c0_26 = arith.constant 0 : index
    %c0_27 = arith.constant 0 : index
    %48 = vector.load %arg15[%c1_25, %c0_26, %c0_27] : memref<4x8x8xbf16, #tpu.memory_space<vmem>>, vector<1x8x8xbf16>
    %49 = vector.shape_cast %48 : vector<1x8x8xbf16> to vector<8x8xbf16>
    %cst_28 = arith.constant dense<0.000000e+00> : vector<8x8xf32>
    %50 = tpu.matmul %47, %49, %cst_28 {dimension_numbers = #tpu.dot_dimension_numbers<[1], [0], [0], [1], [0, 0, 1, 1], [], []>} : vector<8x8xbf16>, vector<8x8xbf16>, vector<8x8xf32> -> vector<8x8xf32>
    %51 = arith.truncf %50 : vector<8x8xf32> to vector<8x8xbf16>
    %c0_29 = arith.constant 0 : index
    %c8 = arith.constant 8 : index
    %52 = vector.load %arg16[%c0_29, %c8] : memref<8x32xbf16, #tpu.memory_space<vmem>>, vector<8x8xbf16>
    tpu.vector_store %arg16[%c0_29, %c8], %51 {strides = array<i32>} : memref<8x32xbf16, #tpu.memory_space<vmem>>, vector<8x8xbf16>,
    %53 = vector.extract_strided_slice %12 {offsets = [0, 16], sizes = [8, 8], strides = [1, 1]} : vector<8x32xbf16> to vector<8x8xbf16>
    %c2 = arith.constant 2 : index
    %c0_30 = arith.constant 0 : index
    %c0_31 = arith.constant 0 : index
    %54 = vector.load %arg14[%c2, %c0_30, %c0_31] : memref<4x8x8xbf16, #tpu.memory_space<vmem>>, vector<1x8x8xbf16>
    %55 = vector.shape_cast %54 : vector<1x8x8xbf16> to vector<8x8xbf16>
    %cst_32 = arith.constant dense<0.000000e+00> : vector<8x8xf32>
    %56 = tpu.matmul %53, %55, %cst_32 {dimension_numbers = #tpu.dot_dimension_numbers<[1], [0], [0], [1], [0, 0, 1, 1], [], []>} : vector<8x8xbf16>, vector<8x8xbf16>, vector<8x8xf32> -> vector<8x8xf32>
    %cst_33 = arith.constant dense<0xFF800000> : vector<8xf32>
    %57 = vector.multi_reduction <maximumf>, %56, %cst_33 [1] : vector<8x8xf32> to vector<8xf32>
    %58 = vector.shape_cast %57 : vector<8xf32> to vector<8x1xf32>
    %59 = vector.broadcast %58 : vector<8x1xf32> to vector<8x8xf32>
    %60 = arith.subf %56, %59 : vector<8x8xf32>
    %61 = math.exp %60 : vector<8x8xf32>
    %cst_34 = arith.constant dense<0.000000e+00> : vector<8xf32>
    %62 = vector.multi_reduction <add>, %61, %cst_34 [1] : vector<8x8xf32> to vector<8xf32>
    %63 = vector.shape_cast %62 : vector<8xf32> to vector<8x1xf32>
    %64 = tpu.reciprocal %63 {approx = true} : vector<8x1xf32> -> vector<8x1xf32>
    %65 = vector.broadcast %64 : vector<8x1xf32> to vector<8x8xf32>
    %66 = arith.mulf %61, %65 : vector<8x8xf32>
    %67 = arith.truncf %66 : vector<8x8xf32> to vector<8x8xbf16>
    %c2_35 = arith.constant 2 : index
    %c0_36 = arith.constant 0 : index
    %c0_37 = arith.constant 0 : index
    %68 = vector.load %arg15[%c2_35, %c0_36, %c0_37] : memref<4x8x8xbf16, #tpu.memory_space<vmem>>, vector<1x8x8xbf16>
    %69 = vector.shape_cast %68 : vector<1x8x8xbf16> to vector<8x8xbf16>
    %cst_38 = arith.constant dense<0.000000e+00> : vector<8x8xf32>
    %70 = tpu.matmul %67, %69, %cst_38 {dimension_numbers = #tpu.dot_dimension_numbers<[1], [0], [0], [1], [0, 0, 1, 1], [], []>} : vector<8x8xbf16>, vector<8x8xbf16>, vector<8x8xf32> -> vector<8x8xf32>
    %71 = arith.truncf %70 : vector<8x8xf32> to vector<8x8xbf16>
    %c0_39 = arith.constant 0 : index
    %c16 = arith.constant 16 : index
    %72 = vector.load %arg16[%c0_39, %c16] : memref<8x32xbf16, #tpu.memory_space<vmem>>, vector<8x8xbf16>
    tpu.vector_store %arg16[%c0_39, %c16], %71 {strides = array<i32>} : memref<8x32xbf16, #tpu.memory_space<vmem>>, vector<8x8xbf16>,
    %73 = vector.extract_strided_slice %12 {offsets = [0, 24], sizes = [8, 8], strides = [1, 1]} : vector<8x32xbf16> to vector<8x8xbf16>
    %c3 = arith.constant 3 : index
    %c0_40 = arith.constant 0 : index
    %c0_41 = arith.constant 0 : index
    %74 = vector.load %arg14[%c3, %c0_40, %c0_41] : memref<4x8x8xbf16, #tpu.memory_space<vmem>>, vector<1x8x8xbf16>
    %75 = vector.shape_cast %74 : vector<1x8x8xbf16> to vector<8x8xbf16>
    %cst_42 = arith.constant dense<0.000000e+00> : vector<8x8xf32>
    %76 = tpu.matmul %73, %75, %cst_42 {dimension_numbers = #tpu.dot_dimension_numbers<[1], [0], [0], [1], [0, 0, 1, 1], [], []>} : vector<8x8xbf16>, vector<8x8xbf16>, vector<8x8xf32> -> vector<8x8xf32>
    %cst_43 = arith.constant dense<0xFF800000> : vector<8xf32>
    %77 = vector.multi_reduction <maximumf>, %76, %cst_43 [1] : vector<8x8xf32> to vector<8xf32>
    %78 = vector.shape_cast %77 : vector<8xf32> to vector<8x1xf32>
    %79 = vector.broadcast %78 : vector<8x1xf32> to vector<8x8xf32>
    %80 = arith.subf %76, %79 : vector<8x8xf32>
    %81 = math.exp %80 : vector<8x8xf32>
    %cst_44 = arith.constant dense<0.000000e+00> : vector<8xf32>
    %82 = vector.multi_reduction <add>, %81, %cst_44 [1] : vector<8x8xf32> to vector<8xf32>
    %83 = vector.shape_cast %82 : vector<8xf32> to vector<8x1xf32>
    %84 = tpu.reciprocal %83 {approx = true} : vector<8x1xf32> -> vector<8x1xf32>
    %85 = vector.broadcast %84 : vector<8x1xf32> to vector<8x8xf32>
    %86 = arith.mulf %81, %85 : vector<8x8xf32>
    %87 = arith.truncf %86 : vector<8x8xf32> to vector<8x8xbf16>
    %c3_45 = arith.constant 3 : index
    %c0_46 = arith.constant 0 : index
    %c0_47 = arith.constant 0 : index
    %88 = vector.load %arg15[%c3_45, %c0_46, %c0_47] : memref<4x8x8xbf16, #tpu.memory_space<vmem>>, vector<1x8x8xbf16>
    %89 = vector.shape_cast %88 : vector<1x8x8xbf16> to vector<8x8xbf16>
    %cst_48 = arith.constant dense<0.000000e+00> : vector<8x8xf32>
    %90 = tpu.matmul %87, %89, %cst_48 {dimension_numbers = #tpu.dot_dimension_numbers<[1], [0], [0], [1], [0, 0, 1, 1], [], []>} : vector<8x8xbf16>, vector<8x8xbf16>, vector<8x8xf32> -> vector<8x8xf32>
    %91 = arith.truncf %90 : vector<8x8xf32> to vector<8x8xbf16>
    %c0_49 = arith.constant 0 : index
    %c24 = arith.constant 24 : index
    %92 = vector.load %arg16[%c0_49, %c24] : memref<8x32xbf16, #tpu.memory_space<vmem>>, vector<8x8xbf16>
    tpu.vector_store %arg16[%c0_49, %c24], %91 {strides = array<i32>} : memref<8x32xbf16, #tpu.memory_space<vmem>>, vector<8x8xbf16>,
    %c0_50 = arith.constant 0 : index
    %c0_51 = arith.constant 0 : index
    %93 = vector.load %arg16[%c0_50, %c0_51] : memref<8x32xbf16, #tpu.memory_space<vmem>>, vector<8x32xbf16>
    %c0_52 = arith.constant 0 : index
    %c0_53 = arith.constant 0 : index
    %94 = vector.load %arg8[%c0_52, %c0_53] : memref<32x32xbf16, #tpu.memory_space<vmem>>, vector<32x32xbf16>
    %cst_54 = arith.constant dense<0.000000e+00> : vector<8x32xf32>
    %95 = tpu.matmul %93, %94, %cst_54 {dimension_numbers = #tpu.dot_dimension_numbers<[1], [0], [0], [1], [0, 0, 1, 1], [], []>} : vector<8x32xbf16>, vector<32x32xbf16>, vector<8x32xf32> -> vector<8x32xf32>
    %c0_55 = arith.constant 0 : index
    %c0_56 = arith.constant 0 : index
    %96 = vector.load %arg12[%c0_55, %c0_56] : memref<1x32xf32, #tpu.memory_space<vmem>>, vector<1x32xf32>
    %97 = vector.broadcast %96 : vector<1x32xf32> to vector<8x32xf32>
    %98 = arith.addf %95, %97 : vector<8x32xf32>
    %c0_57 = arith.constant 0 : index
    %c0_58 = arith.constant 0 : index
    %c0_59 = arith.constant 0 : index
    %99 = vector.load %arg13[%c0_57, %c0_58, %c0_59] : memref<1x8x32xf32, #tpu.memory_space<vmem>>, vector<1x8x32xf32>
    %100 = vector.shape_cast %99 : vector<1x8x32xf32> to vector<8x32xf32>
    %101 = vector.shape_cast %98 : vector<8x32xf32> to vector<1x8x32xf32>
    tpu.vector_store %arg13[%c0_57, %c0_58, %c0_59], %101 {strides = array<i32>} : memref<1x8x32xf32, #tpu.memory_space<vmem>>, vector<1x8x32xf32>,
    return
  }
  func.func @transform_0(%arg0: i32, %arg1: i32) -> (i32, i32, i32) {
    %c0_i32 = arith.constant 0 : i32
    %c0_i32_0 = arith.constant 0 : i32
    return %arg0, %arg1, %c0_i32 : i32, i32, i32
  }
  func.func @transform_1(%arg0: i32, %arg1: i32) -> (i32, i32, i32) {
    %c0_i32 = arith.constant 0 : i32
    %c0_i32_0 = arith.constant 0 : i32
    %c0_i32_1 = arith.constant 0 : i32
    return %arg0, %c0_i32, %c0_i32_0 : i32, i32, i32
  }
  func.func @transform_2(%arg0: i32, %arg1: i32) -> (i32, i32, i32) {
    %c0_i32 = arith.constant 0 : i32
    %c0_i32_0 = arith.constant 0 : i32
    %c0_i32_1 = arith.constant 0 : i32
    return %arg0, %c0_i32, %c0_i32_0 : i32, i32, i32
  }
  func.func @transform_3(%arg0: i32, %arg1: i32) -> (i32, i32) {
    %c0_i32 = arith.constant 0 : i32
    %c0_i32_0 = arith.constant 0 : i32
    %c0_i32_1 = arith.constant 0 : i32
    return %c0_i32, %c0_i32_0 : i32, i32
  }
  func.func @transform_4(%arg0: i32, %arg1: i32) -> (i32, i32) {
    %c0_i32 = arith.constant 0 : i32
    %c0_i32_0 = arith.constant 0 : i32
    %c0_i32_1 = arith.constant 0 : i32
    return %c0_i32, %c0_i32_0 : i32, i32
  }
  func.func @transform_5(%arg0: i32, %arg1: i32) -> (i32, i32) {
    %c0_i32 = arith.constant 0 : i32
    %c0_i32_0 = arith.constant 0 : i32
    %c0_i32_1 = arith.constant 0 : i32
    return %c0_i32, %c0_i32_0 : i32, i32
  }
  func.func @transform_6(%arg0: i32, %arg1: i32) -> (i32, i32) {
    %c0_i32 = arith.constant 0 : i32
    %c0_i32_0 = arith.constant 0 : i32
    %c0_i32_1 = arith.constant 0 : i32
    return %c0_i32, %c0_i32_0 : i32, i32
  }
  func.func @transform_7(%arg0: i32, %arg1: i32) -> (i32, i32) {
    %c0_i32 = arith.constant 0 : i32
    %c0_i32_0 = arith.constant 0 : i32
    %c0_i32_1 = arith.constant 0 : i32
    return %c0_i32, %c0_i32_0 : i32, i32
  }
  func.func @transform_8(%arg0: i32, %arg1: i32) -> (i32, i32) {
    %c0_i32 = arith.constant 0 : i32
    %c0_i32_0 = arith.constant 0 : i32
    %c0_i32_1 = arith.constant 0 : i32
    return %c0_i32, %c0_i32_0 : i32, i32
  }
  func.func @transform_9(%arg0: i32, %arg1: i32) -> (i32, i32) {
    %c0_i32 = arith.constant 0 : i32
    %c0_i32_0 = arith.constant 0 : i32
    %c0_i32_1 = arith.constant 0 : i32
    return %c0_i32, %c0_i32_0 : i32, i32
  }
  func.func @transform_10(%arg0: i32, %arg1: i32) -> (i32, i32) {
    %c0_i32 = arith.constant 0 : i32
    %c0_i32_0 = arith.constant 0 : i32
    %c0_i32_1 = arith.constant 0 : i32
    return %c0_i32, %c0_i32_0 : i32, i32
  }
  func.func @transform_11(%arg0: i32, %arg1: i32) -> (i32, i32, i32) {
    %c0_i32 = arith.constant 0 : i32
    %c0_i32_0 = arith.constant 0 : i32
    return %arg0, %arg1, %c0_i32 : i32, i32, i32
  }
}

</mosaic_0001>

<llo_original>
// kernel: tpu_custom_call.1
$region0: #{tpu_custom_call.1}
  #allocation0 [shape = 'u32[]', space=smem, size = 0x4, offset = 0x4, fixed_abs, tag = 'smem constant byte address 0x4 - core index']
  #allocation1 [shape = 'u32[72,128]{1,0:T(1,128)}', space=vmem, size = 0x9000, scoped, tag = 'internal scratch']
  #allocation2 [shape = 'bf16[4,8,8]{2,1,0:T(8,128)(2,1)}', space=vmem, size = 0x2000, scoped, tag = 'scratch operand']
  #allocation3 [shape = 'bf16[4,8,8]{2,1,0:T(8,128)(2,1)}', space=vmem, size = 0x2000, scoped, tag = 'scratch operand']
  #allocation4 [shape = 'bf16[8,32]{1,0:T(8,128)(2,1)}', space=vmem, size = 0x800, scoped, tag = 'scratch operand']
  %s0 = inlined_call_operand.hbm [shape: bf16[2,8,32], index: 0, kind: input, shape index: {}]
  %s1 = inlined_call_operand.hbm [shape: bf16[2,8,32], index: 1, kind: input, shape index: {}]
  %s2 = inlined_call_operand.hbm [shape: bf16[2,8,32], index: 2, kind: input, shape index: {}]
  %s3 = inlined_call_operand.hbm [shape: bf16[32,32], index: 3, kind: input, shape index: {}]
  %s4 = inlined_call_operand.hbm [shape: bf16[32,32], index: 4, kind: input, shape index: {}]
  %s5 = inlined_call_operand.hbm [shape: bf16[32,32], index: 5, kind: input, shape index: {}]
  %s6 = inlined_call_operand.hbm [shape: bf16[32,32], index: 6, kind: input, shape index: {}]
  %s7 = inlined_call_operand.vmem [shape: f32[1,32], index: 7, kind: input, shape index: {}]
  %s8 = inlined_call_operand.vmem [shape: f32[1,32], index: 8, kind: input, shape index: {}]
  %s9 = inlined_call_operand.vmem [shape: f32[1,32], index: 9, kind: input, shape index: {}]
  %s10 = inlined_call_operand.vmem [shape: f32[1,32], index: 10, kind: input, shape index: {}]
  %s11 = inlined_call_operand.hbm [shape: f32[2,8,32], index: 11, kind: output, shape index: {}]
  %s12 = sld [smem:[#allocation0]]
  $region109: #{tpu_custom_call.1} parent=0
    _
  %s14 = ssub.s32 1, %s12
  %s15 = scalar_select 0, %s14, %s12
  $region1: #{tpu_custom_call.1} parent=0
    #allocation5 [shape = 'u8[4096]{0}', space=vmem, size = 0x1000, scoped, tag = 'input window, operand 0']
    #allocation6 [shape = 's32[2]{0}', space=sflag, size = 0x8, scoped, tag = 'scoped memory for tpu_custom_call.1']
    #allocation7 [shape = 's32[2]{0}', space=sflag, size = 0x8, scoped, tag = 'scoped memory for tpu_custom_call.1']
    #allocation8 [shape = 'u8[4096]{0}', space=vmem, size = 0x1000, scoped, tag = 'input window, operand 1']
    #allocation9 [shape = 's32[2]{0}', space=sflag, size = 0x8, scoped, tag = 'scoped memory for tpu_custom_call.1']
    #allocation10 [shape = 'u8[4096]{0}', space=vmem, size = 0x1000, scoped, tag = 'input window, operand 2']
    #allocation11 [shape = 'u8[8192]{0}', space=vmem, size = 0x2000, scoped, tag = 'input window, operand 3, single buffered']
    #allocation12 [shape = 's32[1]{0}', space=sflag, size = 0x4, scoped, tag = 'scoped memory for tpu_custom_call.1']
    #allocation13 [shape = 'u8[8192]{0}', space=vmem, size = 0x2000, scoped, tag = 'input window, operand 4, single buffered']
    #allocation14 [shape = 'u8[8192]{0}', space=vmem, size = 0x2000, scoped, tag = 'input window, operand 5, single buffered']
    #allocation15 [shape = 's32[1]{0}', space=sflag, size = 0x4, scoped, tag = 'scoped memory for tpu_custom_call.1']
    #allocation16 [shape = 'u8[8192]{0}', space=vmem, size = 0x2000, scoped, tag = 'input window, operand 6, single buffered']
    #allocation17 [shape = 'u8[8192]{0}', space=vmem, size = 0x2000, scoped, tag = 'output window, operand 0']
    %16 = vsyncpa [#allocation6], 0
    %s17 = scalar_lea.sflag [#allocation6], 1
    %18 = vsyncpa %s17, 0
    %19 = vsyncpa [#allocation9], 0
    %s20 = scalar_lea.sflag [#allocation9], 1
    %21 = vsyncpa %s20, 0
    %22 = vsyncpa [#allocation12], 0
    %23 = vsyncpa [#allocation15], 0
    %24 = vsyncpa [#allocation7], 0
    %s25 = scalar_lea.sflag [#allocation7], 1
    %26 = vsyncpa %s25, 0
    loop: start=0, step=1, limit=4
    $region2: #{tpu_custom_call.1} parent=1 // loop_pre_header
      _
    $region3: #{tpu_custom_call.1} parent=1 // loop_header
      %s28 = sphi 0, %s32
      %p29 = scmp.ge.s32.totalorder %s28, 4
      %s35 = sphi 0, %s47
      %s36 = sphi 0, %s43
      %s37 = sphi 0, %s35
      %s38 = sphi 0, %s36
      %s39 = sphi 0, %s37
      %s40 = sphi 0, %s38
      %s52 = sphi 0, %s54
      %s55 = sphi 0, %s52
      %s56 = sphi 0, %s55
      %s72 = sphi 0, %s56
      %s78 = sphi 0, %s80
      %s81 = sphi 0, %s78
      %s82 = sphi 0, %s81
      %s98 = sphi 0, %s82
      %s104 = sphi 0, %s106
      %s107 = sphi 0, %s104
      %s108 = sphi 0, %s107
      %s124 = sphi 0, %s108
      %s128 = sphi 0, %s128
      %s130 = sphi 0, %s128
      %s131 = sphi 0, %s130
      %s145 = sphi 0, %s131
      %s149 = sphi 0, %s149
      %s151 = sphi 0, %s149
      %s152 = sphi 0, %s151
      %s166 = sphi 0, %s152
      %s170 = sphi 0, %s170
      %s172 = sphi 0, %s170
      %s173 = sphi 0, %s172
      %s187 = sphi 0, %s173
      %s191 = sphi 0, %s191
      %s193 = sphi 0, %s191
      %s194 = sphi 0, %s193
      %s208 = sphi 0, %s194
      %s212 = sphi 0, %s212
      %s214 = sphi 0, %s212
      %s215 = sphi 0, %s214
      %s229 = sphi 0, %s215
      %s233 = sphi 0, %s233
      %s235 = sphi 0, %s233
      %s236 = sphi 0, %s235
      %s250 = sphi 0, %s236
      %s254 = sphi 0, %s254
      %s256 = sphi 0, %s254
      %s257 = sphi 0, %s256
      %s271 = sphi 0, %s257
      %s275 = sphi 0, %s275
      %s277 = sphi 0, %s275
      %s278 = sphi 0, %s277
      %s292 = sphi 0, %s278
      %s300 = sphi 0, %s302
      %s303 = sphi 0, %s300
      %s304 = sphi 0, %s303
      %s320 = sphi 0, %s304
    $region4: #{tpu_custom_call.1} parent=1 // loop_header_branch
      %31 = sbr.rel (%p29) target = $region8
    $region5: #{tpu_custom_call.1} parent=1 // loop_body
      %s33 = ssub.s32 %s28, 1
      %s34 = ssub.s32 %s28, 2
      %s41 = sadd.s32 1, %s36
      %p42 = scmp.ge.s32.totalorder %s41, 1
      %s43 = scalar_select %p42, 0, %s41
      %s44 = sadd.s32 1, %s35
      %s45 = scalar_select %p42, %s44, %s35
      %p46 = scmp.ge.s32.totalorder %s45, 2
      %s47 = scalar_select %p46, 0, %s45
      %s48 = ssub.s32 %s35, %s47
      %s49 = ssub.s32 %s36, %s43
      %s50 = sor.u32 %s48, %s49
      %p51 = scmp.eq.s32.totalorder %s50, 0
      %s53 = sadd.s32 %s52, 1
      %s54 = scalar_select %p51, %s52, %s53
      %p57 = pneg %p51
      %p58 = scmp.eq.s32.totalorder %s28, 1
      %p59 = por %p57, %p58
      %p60 = scmp.ne.s32.totalorder %s52, %s55
      %p61 = scmp.eq.s32.totalorder %s28, 0
      %p62 = por %p60, %p61
      %p63 = scmp.ne.s32.totalorder %s52, %s55
      %p64 = scmp.eq.s32.totalorder %s33, 1
      %p65 = por %p63, %p64
      %p66 = scmp.ne.s32.totalorder %s55, %s56
      %p67 = scmp.eq.s32.totalorder %s33, 0
      %p68 = por %p66, %p67
      %p69 = scmp.ne.s32.totalorder %s55, %s56
      %p70 = scmp.eq.s32.totalorder %s34, 1
      %p71 = por %p69, %p70
      %p73 = scmp.ne.s32.totalorder %s56, %s72
      %p74 = scmp.eq.s32.totalorder %s34, 0
      %p75 = por %p73, %p74
      %s76 = ssub.s32 %s35, %s47
      %p77 = scmp.eq.s32.totalorder %s76, 0
      %s79 = sadd.s32 %s78, 1
      %s80 = scalar_select %p77, %s78, %s79
      %p83 = pneg %p77
      %p84 = scmp.eq.s32.totalorder %s28, 1
      %p85 = por %p83, %p84
      %p86 = scmp.ne.s32.totalorder %s78, %s81
      %p87 = scmp.eq.s32.totalorder %s28, 0
      %p88 = por %p86, %p87
      %p89 = scmp.ne.s32.totalorder %s78, %s81
      %p90 = scmp.eq.s32.totalorder %s33, 1
      %p91 = por %p89, %p90
      %p92 = scmp.ne.s32.totalorder %s81, %s82
      %p93 = scmp.eq.s32.totalorder %s33, 0
      %p94 = por %p92, %p93
      %p95 = scmp.ne.s32.totalorder %s81, %s82
      %p96 = scmp.eq.s32.totalorder %s34, 1
      %p97 = por %p95, %p96
      %p99 = scmp.ne.s32.totalorder %s82, %s98
      %p100 = scmp.eq.s32.totalorder %s34, 0
      %p101 = por %p99, %p100
      %s102 = ssub.s32 %s35, %s47
      %p103 = scmp.eq.s32.totalorder %s102, 0
      %s105 = sadd.s32 %s104, 1
      %s106 = scalar_select %p103, %s104, %s105
      %p109 = pneg %p103
      %p110 = scmp.eq.s32.totalorder %s28, 1
      %p111 = por %p109, %p110
      %p112 = scmp.ne.s32.totalorder %s104, %s107
      %p113 = scmp.eq.s32.totalorder %s28, 0
      %p114 = por %p112, %p113
      %p115 = scmp.ne.s32.totalorder %s104, %s107
      %p116 = scmp.eq.s32.totalorder %s33, 1
      %p117 = por %p115, %p116
      %p118 = scmp.ne.s32.totalorder %s107, %s108
      %p119 = scmp.eq.s32.totalorder %s33, 0
      %p120 = por %p118, %p119
      %p121 = scmp.ne.s32.totalorder %s107, %s108
      %p122 = scmp.eq.s32.totalorder %s34, 1
      %p123 = por %p121, %p122
      %p125 = scmp.ne.s32.totalorder %s108, %s124
      %p126 = scmp.eq.s32.totalorder %s34, 0
      %p127 = por %p125, %p126
      %s129 = sadd.s32 %s128, 1
      %p132 = scmp.eq.s32.totalorder %s28, 1
      %p133 = scmp.ne.s32.totalorder %s128, %s130
      %p134 = scmp.eq.s32.totalorder %s28, 0
      %p135 = por %p133, %p134
      %p136 = scmp.ne.s32.totalorder %s128, %s130
      %p137 = scmp.eq.s32.totalorder %s33, 1
      %p138 = por %p136, %p137
      %p139 = scmp.ne.s32.totalorder %s130, %s131
      %p140 = scmp.eq.s32.totalorder %s33, 0
      %p141 = por %p139, %p140
      %p142 = scmp.ne.s32.totalorder %s130, %s131
      %p143 = scmp.eq.s32.totalorder %s34, 1
      %p144 = por %p142, %p143
      %p146 = scmp.ne.s32.totalorder %s131, %s145
      %p147 = scmp.eq.s32.totalorder %s34, 0
      %p148 = por %p146, %p147
      %s150 = sadd.s32 %s149, 1
      %p153 = scmp.eq.s32.totalorder %s28, 1
      %p154 = scmp.ne.s32.totalorder %s149, %s151
      %p155 = scmp.eq.s32.totalorder %s28, 0
      %p156 = por %p154, %p155
      %p157 = scmp.ne.s32.totalorder %s149, %s151
      %p158 = scmp.eq.s32.totalorder %s33, 1
      %p159 = por %p157, %p158
      %p160 = scmp.ne.s32.totalorder %s151, %s152
      %p161 = scmp.eq.s32.totalorder %s33, 0
      %p162 = por %p160, %p161
      %p163 = scmp.ne.s32.totalorder %s151, %s152
      %p164 = scmp.eq.s32.totalorder %s34, 1
      %p165 = por %p163, %p164
      %p167 = scmp.ne.s32.totalorder %s152, %s166
      %p168 = scmp.eq.s32.totalorder %s34, 0
      %p169 = por %p167, %p168
      %s171 = sadd.s32 %s170, 1
      %p174 = scmp.eq.s32.totalorder %s28, 1
      %p175 = scmp.ne.s32.totalorder %s170, %s172
      %p176 = scmp.eq.s32.totalorder %s28, 0
      %p177 = por %p175, %p176
      %p178 = scmp.ne.s32.totalorder %s170, %s172
      %p179 = scmp.eq.s32.totalorder %s33, 1
      %p180 = por %p178, %p179
      %p181 = scmp.ne.s32.totalorder %s172, %s173
      %p182 = scmp.eq.s32.totalorder %s33, 0
      %p183 = por %p181, %p182
      %p184 = scmp.ne.s32.totalorder %s172, %s173
      %p185 = scmp.eq.s32.totalorder %s34, 1
      %p186 = por %p184, %p185
      %p188 = scmp.ne.s32.totalorder %s173, %s187
      %p189 = scmp.eq.s32.totalorder %s34, 0
      %p190 = por %p188, %p189
      %s192 = sadd.s32 %s191, 1
      %p195 = scmp.eq.s32.totalorder %s28, 1
      %p196 = scmp.ne.s32.totalorder %s191, %s193
      %p197 = scmp.eq.s32.totalorder %s28, 0
      %p198 = por %p196, %p197
      %p199 = scmp.ne.s32.totalorder %s191, %s193
      %p200 = scmp.eq.s32.totalorder %s33, 1
      %p201 = por %p199, %p200
      %p202 = scmp.ne.s32.totalorder %s193, %s194
      %p203 = scmp.eq.s32.totalorder %s33, 0
      %p204 = por %p202, %p203
      %p205 = scmp.ne.s32.totalorder %s193, %s194
      %p206 = scmp.eq.s32.totalorder %s34, 1
      %p207 = por %p205, %p206
      %p209 = scmp.ne.s32.totalorder %s194, %s208
      %p210 = scmp.eq.s32.totalorder %s34, 0
      %p211 = por %p209, %p210
      %s213 = sadd.s32 %s212, 1
      %p216 = scmp.eq.s32.totalorder %s28, 1
      %p217 = scmp.ne.s32.totalorder %s212, %s214
      %p218 = scmp.eq.s32.totalorder %s28, 0
      %p219 = por %p217, %p218
      %p220 = scmp.ne.s32.totalorder %s212, %s214
      %p221 = scmp.eq.s32.totalorder %s33, 1
      %p222 = por %p220, %p221
      %p223 = scmp.ne.s32.totalorder %s214, %s215
      %p224 = scmp.eq.s32.totalorder %s33, 0
      %p225 = por %p223, %p224
      %p226 = scmp.ne.s32.totalorder %s214, %s215
      %p227 = scmp.eq.s32.totalorder %s34, 1
      %p228 = por %p226, %p227
      %p230 = scmp.ne.s32.totalorder %s215, %s229
      %p231 = scmp.eq.s32.totalorder %s34, 0
      %p232 = por %p230, %p231
      %s234 = sadd.s32 %s233, 1
      %p237 = scmp.eq.s32.totalorder %s28, 1
      %p238 = scmp.ne.s32.totalorder %s233, %s235
      %p239 = scmp.eq.s32.totalorder %s28, 0
      %p240 = por %p238, %p239
      %p241 = scmp.ne.s32.totalorder %s233, %s235
      %p242 = scmp.eq.s32.totalorder %s33, 1
      %p243 = por %p241, %p242
      %p244 = scmp.ne.s32.totalorder %s235, %s236
      %p245 = scmp.eq.s32.totalorder %s33, 0
      %p246 = por %p244, %p245
      %p247 = scmp.ne.s32.totalorder %s235, %s236
      %p248 = scmp.eq.s32.totalorder %s34, 1
      %p249 = por %p247, %p248
      %p251 = scmp.ne.s32.totalorder %s236, %s250
      %p252 = scmp.eq.s32.totalorder %s34, 0
      %p253 = por %p251, %p252
      %s255 = sadd.s32 %s254, 1
      %p258 = scmp.eq.s32.totalorder %s28, 1
      %p259 = scmp.ne.s32.totalorder %s254, %s256
      %p260 = scmp.eq.s32.totalorder %s28, 0
      %p261 = por %p259, %p260
      %p262 = scmp.ne.s32.totalorder %s254, %s256
      %p263 = scmp.eq.s32.totalorder %s33, 1
      %p264 = por %p262, %p263
      %p265 = scmp.ne.s32.totalorder %s256, %s257
      %p266 = scmp.eq.s32.totalorder %s33, 0
      %p267 = por %p265, %p266
      %p268 = scmp.ne.s32.totalorder %s256, %s257
      %p269 = scmp.eq.s32.totalorder %s34, 1
      %p270 = por %p268, %p269
      %p272 = scmp.ne.s32.totalorder %s257, %s271
      %p273 = scmp.eq.s32.totalorder %s34, 0
      %p274 = por %p272, %p273
      %s276 = sadd.s32 %s275, 1
      %p279 = scmp.eq.s32.totalorder %s28, 1
      %p280 = scmp.ne.s32.totalorder %s275, %s277
      %p281 = scmp.eq.s32.totalorder %s28, 0
      %p282 = por %p280, %p281
      %p283 = scmp.ne.s32.totalorder %s275, %s277
      %p284 = scmp.eq.s32.totalorder %s33, 1
      %p285 = por %p283, %p284
      %p286 = scmp.ne.s32.totalorder %s277, %s278
      %p287 = scmp.eq.s32.totalorder %s33, 0
      %p288 = por %p286, %p287
      %p289 = scmp.ne.s32.totalorder %s277, %s278
      %p290 = scmp.eq.s32.totalorder %s34, 1
      %p291 = por %p289, %p290
      %p293 = scmp.ne.s32.totalorder %s278, %s292
      %p294 = scmp.eq.s32.totalorder %s34, 0
      %p295 = por %p293, %p294
      %s296 = ssub.s32 %s35, %s47
      %s297 = ssub.s32 %s36, %s43
      %s298 = sor.u32 %s296, %s297
      %p299 = scmp.eq.s32.totalorder %s298, 0
      %s301 = sadd.s32 %s300, 1
      %s302 = scalar_select %p299, %s300, %s301
      %p305 = pneg %p299
      %p306 = scmp.eq.s32.totalorder %s28, 1
      %p307 = por %p305, %p306
      %p308 = scmp.ne.s32.totalorder %s300, %s303
      %p309 = scmp.eq.s32.totalorder %s28, 0
      %p310 = por %p308, %p309
      %p311 = scmp.ne.s32.totalorder %s300, %s303
      %p312 = scmp.eq.s32.totalorder %s33, 1
      %p313 = por %p311, %p312
      %p314 = scmp.ne.s32.totalorder %s303, %s304
      %p315 = scmp.eq.s32.totalorder %s33, 0
      %p316 = por %p314, %p315
      %p317 = scmp.ne.s32.totalorder %s303, %s304
      %p318 = scmp.eq.s32.totalorder %s34, 1
      %p319 = por %p317, %p318
      %p321 = scmp.ne.s32.totalorder %s304, %s320
      %p322 = scmp.eq.s32.totalorder %s34, 0
      %p323 = por %p321, %p322
      %p324 = scmp.le.s32.totalorder 1, %s28
      %p325 = scmp.lt.s32.totalorder %s28, 3
      %p326 = pnand %p324, %p325
      %p327 = pneg %p326
      // Predicated region
      $region9: #{tpu_custom_call.1} parent=5 // pred_check
        _
      $region10: #{tpu_custom_call.1} parent=5 // pred_check_branch
        %329 = sbr.rel (%p326) target = $region12
      $region11: #{tpu_custom_call.1} parent=5 // pred_region
        %s330 = ssub.s32 %s28, 1
        // Predicated region
        $region13: #{tpu_custom_call.1} parent=11 // pred_check
          %p331 = pneg %p141
        $region14: #{tpu_custom_call.1} parent=11 // pred_check_branch
          %333 = sbr.rel (%p331) target = $region16
        $region15: #{tpu_custom_call.1} parent=11 // pred_region
          %335 = vsyncadd [#allocation12], 0
          %s336 = sshll.u32 %s3, 4
          %s337 = int_to_ptr.hbm [resolvable:$true] %s336
          %s338 = sshll.u32 [#allocation11], 4
          %s339 = int_to_ptr.vmem [resolvable:$true] %s338
          %344 = dma.hbm_to_vmem [thread:$0]  %s337, 256, %s339, [#allocation12], 64, 64, 4
        $region16: #{tpu_custom_call.1} parent=11 // pred_fallthru
          _
        // Predicated region
        $region17: #{tpu_custom_call.1} parent=11 // pred_check
          %p345 = pneg %p162
        $region18: #{tpu_custom_call.1} parent=11 // pred_check_branch
          %347 = sbr.rel (%p345) target = $region20
        $region19: #{tpu_custom_call.1} parent=11 // pred_region
          %349 = vsyncadd [#allocation12], 0
          %s350 = sshll.u32 %s4, 4
          %s351 = int_to_ptr.hbm [resolvable:$true] %s350
          %s352 = sshll.u32 [#allocation13], 4
          %s353 = int_to_ptr.vmem [resolvable:$true] %s352
          %358 = dma.hbm_to_vmem [thread:$0]  %s351, 256, %s353, [#allocation12], 64, 64, 4
        $region20: #{tpu_custom_call.1} parent=11 // pred_fallthru
          _
        // Predicated region
        $region21: #{tpu_custom_call.1} parent=11 // pred_check
          %p359 = pneg %p183
        $region22: #{tpu_custom_call.1} parent=11 // pred_check_branch
          %361 = sbr.rel (%p359) target = $region24
        $region23: #{tpu_custom_call.1} parent=11 // pred_region
          %363 = vsyncadd [#allocation15], 0
          %s364 = sshll.u32 %s5, 4
          %s365 = int_to_ptr.hbm [resolvable:$true] %s364
          %s366 = sshll.u32 [#allocation14], 4
          %s367 = int_to_ptr.vmem [resolvable:$true] %s366
          %372 = dma.hbm_to_vmem [thread:$0]  %s365, 256, %s367, [#allocation15], 64, 64, 4
        $region24: #{tpu_custom_call.1} parent=11 // pred_fallthru
          _
        // Predicated region
        $region25: #{tpu_custom_call.1} parent=11 // pred_check
          %p373 = pneg %p204
        $region26: #{tpu_custom_call.1} parent=11 // pred_check_branch
          %375 = sbr.rel (%p373) target = $region28
        $region27: #{tpu_custom_call.1} parent=11 // pred_region
          %377 = vsyncadd [#allocation15], 0
          %s378 = sshll.u32 %s6, 4
          %s379 = int_to_ptr.hbm [resolvable:$true] %s378
          %s380 = sshll.u32 [#allocation16], 4
          %s381 = int_to_ptr.vmem [resolvable:$true] %s380
          %386 = dma.hbm_to_vmem [thread:$0]  %s379, 256, %s381, [#allocation15], 64, 64, 4
        $region28: #{tpu_custom_call.1} parent=11 // pred_fallthru
          _
        // Predicated region
        $region29: #{tpu_custom_call.1} parent=11 // pred_check
          %p387 = pneg %p225
        $region30: #{tpu_custom_call.1} parent=11 // pred_check_branch
          %389 = sbr.rel (%p387) target = $region32
        $region31: #{tpu_custom_call.1} parent=11 // pred_region
          _
        $region32: #{tpu_custom_call.1} parent=11 // pred_fallthru
          _
        // Predicated region
        $region33: #{tpu_custom_call.1} parent=11 // pred_check
          %p390 = pneg %p246
        $region34: #{tpu_custom_call.1} parent=11 // pred_check_branch
          %392 = sbr.rel (%p390) target = $region36
        $region35: #{tpu_custom_call.1} parent=11 // pred_region
          _
        $region36: #{tpu_custom_call.1} parent=11 // pred_fallthru
          _
        // Predicated region
        $region37: #{tpu_custom_call.1} parent=11 // pred_check
          %p393 = pneg %p267
        $region38: #{tpu_custom_call.1} parent=11 // pred_check_branch
          %395 = sbr.rel (%p393) target = $region40
        $region39: #{tpu_custom_call.1} parent=11 // pred_region
          _
        $region40: #{tpu_custom_call.1} parent=11 // pred_fallthru
          _
        // Predicated region
        $region41: #{tpu_custom_call.1} parent=11 // pred_check
          %p396 = pneg %p288
        $region42: #{tpu_custom_call.1} parent=11 // pred_check_branch
          %398 = sbr.rel (%p396) target = $region44
        $region43: #{tpu_custom_call.1} parent=11 // pred_region
          _
        $region44: #{tpu_custom_call.1} parent=11 // pred_fallthru
          _
      $region12: #{tpu_custom_call.1} parent=5 // pred_fallthru
        _
      %p399 = scmp.lt.s32.totalorder %s28, 2
      // Predicated region
      $region45: #{tpu_custom_call.1} parent=5 // pred_check
        %p400 = pneg %p399
      $region46: #{tpu_custom_call.1} parent=5 // pred_check_branch
        %402 = sbr.rel (%p400) target = $region48
      $region47: #{tpu_custom_call.1} parent=5 // pred_region
        // Predicated region
        $region49: #{tpu_custom_call.1} parent=47 // pred_check
          %p403 = pneg %p62
        $region50: #{tpu_custom_call.1} parent=47 // pred_check_branch
          %405 = sbr.rel (%p403) target = $region52
        $region51: #{tpu_custom_call.1} parent=47 // pred_region
          %s406 = sand.u32 %s52, 1
          %s407 = scalar_lea.sflag [#allocation6], %s406
          %s408 = sand.u32 %s52, 1
          %s409 = smul.addr %s408, 4
          %s410 = scalar_lea.vmem [#allocation5], %s409
          %412 = vsyncadd %s407, 0
          %s413 = sadd.s32 %s36, %s35
          %s414 = smul.addr %s413, 4
          %s415 = scalar_lea.hbm %s0, %s414
          %s417 = sshll.u32 %s415, 4
          %s418 = int_to_ptr.hbm [resolvable:$true] %s417
          %s419 = sshll.u32 %s410, 4
          %s420 = int_to_ptr.vmem [resolvable:$true] %s419
          %422 = dma.hbm_to_vmem [thread:$0]  %s418, 64, %s420, %s407
        $region52: #{tpu_custom_call.1} parent=47 // pred_fallthru
          _
        // Predicated region
        $region53: #{tpu_custom_call.1} parent=47 // pred_check
          %p423 = pneg %p88
        $region54: #{tpu_custom_call.1} parent=47 // pred_check_branch
          %425 = sbr.rel (%p423) target = $region56
        $region55: #{tpu_custom_call.1} parent=47 // pred_region
          %s426 = sand.u32 %s28, 1
          %s427 = scalar_lea.sflag [#allocation9], %s426
          %s428 = sand.u32 %s78, 1
          %s429 = smul.addr %s428, 4
          %s430 = scalar_lea.vmem [#allocation8], %s429
          %432 = vsyncadd %s427, 0
          %s433 = smul.addr %s35, 4
          %s434 = scalar_lea.hbm %s1, %s433
          %s436 = sshll.u32 %s434, 4
          %s437 = int_to_ptr.hbm [resolvable:$true] %s436
          %s438 = sshll.u32 %s430, 4
          %s439 = int_to_ptr.vmem [resolvable:$true] %s438
          %441 = dma.hbm_to_vmem [thread:$0]  %s437, 64, %s439, %s427
        $region56: #{tpu_custom_call.1} parent=47 // pred_fallthru
          _
        // Predicated region
        $region57: #{tpu_custom_call.1} parent=47 // pred_check
          %p442 = pneg %p114
        $region58: #{tpu_custom_call.1} parent=47 // pred_check_branch
          %444 = sbr.rel (%p442) target = $region60
        $region59: #{tpu_custom_call.1} parent=47 // pred_region
          %s445 = sand.u32 %s28, 1
          %s446 = scalar_lea.sflag [#allocation9], %s445
          %s447 = sand.u32 %s104, 1
          %s448 = smul.addr %s447, 4
          %s449 = scalar_lea.vmem [#allocation10], %s448
          %451 = vsyncadd %s446, 0
          %s452 = smul.addr %s35, 4
          %s453 = scalar_lea.hbm %s2, %s452
          %s455 = sshll.u32 %s453, 4
          %s456 = int_to_ptr.hbm [resolvable:$true] %s455
          %s457 = sshll.u32 %s449, 4
          %s458 = int_to_ptr.vmem [resolvable:$true] %s457
          %460 = dma.hbm_to_vmem [thread:$0]  %s456, 64, %s458, %s446
        $region60: #{tpu_custom_call.1} parent=47 // pred_fallthru
          _
      $region48: #{tpu_custom_call.1} parent=5 // pred_fallthru
        _
      %p461 = scmp.le.s32.totalorder 1, %s28
      %p462 = scmp.lt.s32.totalorder %s28, 3
      %p463 = pnand %p461, %p462
      %p464 = pneg %p463
      // Predicated region
      $region61: #{tpu_custom_call.1} parent=5 // pred_check
        _
      $region62: #{tpu_custom_call.1} parent=5 // pred_check_branch
        %466 = sbr.rel (%p463) target = $region64
      $region63: #{tpu_custom_call.1} parent=5 // pred_region
        %s467 = ssub.s32 %s28, 1
        %s468 = sand.u32 %s55, 1
        %s469 = scalar_lea.sflag [#allocation6], %s468
        %s470 = sand.u32 %s55, 1
        %s471 = smul.addr %s470, 4
        %s472 = scalar_lea.vmem [#allocation5], %s471
        // Predicated region
        $region65: #{tpu_custom_call.1} parent=63 // pred_check
          %p473 = pneg %p68
        $region66: #{tpu_custom_call.1} parent=63 // pred_check_branch
          %475 = sbr.rel (%p473) target = $region68
        $region67: #{tpu_custom_call.1} parent=63 // pred_region
          %477 = dma.done %s469, 64
        $region68: #{tpu_custom_call.1} parent=63 // pred_fallthru
          _
        %s478 = sand.u32 %s33, 1
        %s479 = scalar_lea.sflag [#allocation9], %s478
        %s480 = sand.u32 %s81, 1
        %s481 = smul.addr %s480, 4
        %s482 = scalar_lea.vmem [#allocation8], %s481
        // Predicated region
        $region69: #{tpu_custom_call.1} parent=63 // pred_check
          %p483 = pneg %p94
        $region70: #{tpu_custom_call.1} parent=63 // pred_check_branch
          %485 = sbr.rel (%p483) target = $region72
        $region71: #{tpu_custom_call.1} parent=63 // pred_region
          %487 = dma.done %s479, 64
        $region72: #{tpu_custom_call.1} parent=63 // pred_fallthru
          _
        %s488 = sand.u32 %s33, 1
        %s489 = scalar_lea.sflag [#allocation9], %s488
        %s490 = sand.u32 %s107, 1
        %s491 = smul.addr %s490, 4
        %s492 = scalar_lea.vmem [#allocation10], %s491
        // Predicated region
        $region73: #{tpu_custom_call.1} parent=63 // pred_check
          %p493 = pneg %p120
        $region74: #{tpu_custom_call.1} parent=63 // pred_check_branch
          %495 = sbr.rel (%p493) target = $region76
        $region75: #{tpu_custom_call.1} parent=63 // pred_region
          %497 = dma.done %s489, 64
        $region76: #{tpu_custom_call.1} parent=63 // pred_fallthru
          _
        // Predicated region
        $region77: #{tpu_custom_call.1} parent=63 // pred_check
          %p498 = pneg %p141
        $region78: #{tpu_custom_call.1} parent=63 // pred_check_branch
          %500 = sbr.rel (%p498) target = $region80
        $region79: #{tpu_custom_call.1} parent=63 // pred_region
          %502 = dma.done [#allocation12], 256
        $region80: #{tpu_custom_call.1} parent=63 // pred_fallthru
          _
        // Predicated region
        $region81: #{tpu_custom_call.1} parent=63 // pred_check
          %p503 = pneg %p162
        $region82: #{tpu_custom_call.1} parent=63 // pred_check_branch
          %505 = sbr.rel (%p503) target = $region84
        $region83: #{tpu_custom_call.1} parent=63 // pred_region
          %507 = dma.done [#allocation12], 256
        $region84: #{tpu_custom_call.1} parent=63 // pred_fallthru
          _
        // Predicated region
        $region85: #{tpu_custom_call.1} parent=63 // pred_check
          %p508 = pneg %p183
        $region86: #{tpu_custom_call.1} parent=63 // pred_check_branch
          %510 = sbr.rel (%p508) target = $region88
        $region87: #{tpu_custom_call.1} parent=63 // pred_region
          %512 = dma.done [#allocation15], 256
        $region88: #{tpu_custom_call.1} parent=63 // pred_fallthru
          _
        // Predicated region
        $region89: #{tpu_custom_call.1} parent=63 // pred_check
          %p513 = pneg %p204
        $region90: #{tpu_custom_call.1} parent=63 // pred_check_branch
          %515 = sbr.rel (%p513) target = $region92
        $region91: #{tpu_custom_call.1} parent=63 // pred_region
          %517 = dma.done [#allocation15], 256
        $region92: #{tpu_custom_call.1} parent=63 // pred_fallthru
          _
        %s518 = sand.u32 %s55, 1
        %s519 = scalar_lea.sflag [#allocation6], %s518
        %s520 = sand.u32 %s55, 1
        %s521 = smul.addr %s520, 4
        %s522 = scalar_lea.vmem [#allocation5], %s521
        %p523 = pneg %p68
        %p524 = pneg %p65
        %s525 = sand.u32 %s33, 1
        %s526 = scalar_lea.sflag [#allocation9], %s525
        %s527 = sand.u32 %s81, 1
        %s528 = smul.addr %s527, 4
        %s529 = scalar_lea.vmem [#allocation8], %s528
        %p530 = pneg %p94
        %p531 = pneg %p91
        %s532 = sand.u32 %s33, 1
        %s533 = scalar_lea.sflag [#allocation9], %s532
        %s534 = sand.u32 %s107, 1
        %s535 = smul.addr %s534, 4
        %s536 = scalar_lea.vmem [#allocation10], %s535
        %p537 = pneg %p120
        %p538 = pneg %p117
        %p539 = pneg %p141
        %p540 = pneg %p138
        %p541 = pneg %p162
        %p542 = pneg %p159
        %p543 = pneg %p183
        %p544 = pneg %p180
        %p545 = pneg %p204
        %p546 = pneg %p201
        %p547 = pneg %p225
        %p548 = pneg %p222
        %p549 = pneg %p246
        %p550 = pneg %p243
        %p551 = pneg %p267
        %p552 = pneg %p264
        %p553 = pneg %p288
        %p554 = pneg %p285
        %p555 = pneg %p316
        %p556 = pneg %p313
        %s557 = sand.u32 %s303, 1
        %s558 = scalar_lea.sflag [#allocation7], %s557
        %s559 = sand.u32 %s303, 1
        %s560 = smul.addr %s559, 8
        %s561 = scalar_lea.vmem [#allocation17], %s560
        %p563 = scmp.eq.s32.totalorder %s38, 0
        // Predicated region
        $region93: #{tpu_custom_call.1} parent=63 // pred_check
          %p564 = pneg %p563
        $region94: #{tpu_custom_call.1} parent=63 // pred_check_branch
          %566 = sbr.rel (%p564) target = $region96
        $region95: #{tpu_custom_call.1} parent=63 // pred_region
          %v567 = vld [vmem:[%s482] sm:$0xf]
          %v568 = vld [vmem:[#allocation13] sm:$0xf]
          %v569 = vld [vmem:[#allocation13 + $0x4] sm:$0xf]
          %v570 = vld [vmem:[#allocation13 + $0x8] sm:$0xf]
          %v571 = vld [vmem:[#allocation13 + $0xc] sm:$0xf]
          %v572 = vld [vmem:[%s8] sm:$0x1]
          %v574 = vperm.slane %v572, 0
          %v580 = vunpack.c.l.b16 %v568
          %v581 = vunpack.c.l.b16 %v569
          %v582 = vunpack.c.l.b16 %v570
          %v583 = vunpack.c.l.b16 %v571
          %v584 = vpack.c.b16 %v581, %v580
          %v585 = vpack.c.b16 %v583, %v582
          %vm588 = vcmask 261120
          %v590 = vsel %vm588, %v567, 0
          %592 = vmatpush.bf16.msra.mxu0 0
          %593 = vmatpush.bf16.msra.mxu0 0
          %594 = vmatpush.bf16.msra.mxu0 0
          %595 = vmatpush.bf16.msra.mxu0 0
          %596 = vmatpush.bf16.msra.mxu0 0
          %597 = vmatpush.bf16.msra.mxu0 0
          %598 = vmatpush.bf16.msra.mxu0 %v585
          %599 = vmatpush.bf16.msra.mxu0 %v584
          %600 = vmatmul.bf16.gmra.mxu0 %v590
          %v601 = vpop.f32.mrf.mxu0
          %v602 = vadd.f32 %v574, %v601
          %v603 = vpop.f32.mrf.mxu0
          %604 = vdwg.mxu0
          %v605 = vld [vmem:[%s492] sm:$0xf]
          %v606 = vld [vmem:[#allocation14] sm:$0xf]
          %v607 = vld [vmem:[#allocation14 + $0x4] sm:$0xf]
          %v608 = vld [vmem:[#allocation14 + $0x8] sm:$0xf]
          %v609 = vld [vmem:[#allocation14 + $0xc] sm:$0xf]
          %v610 = vld [vmem:[%s9] sm:$0x1]
          %v612 = vperm.slane %v610, 0
          %v618 = vunpack.c.l.b16 %v606
          %v619 = vunpack.c.l.b16 %v607
          %v620 = vunpack.c.l.b16 %v608
          %v621 = vunpack.c.l.b16 %v609
          %v622 = vpack.c.b16 %v619, %v618
          %v623 = vpack.c.b16 %v621, %v620
          %v627 = vsel %vm588, %v605, 0
          %629 = vmatpush.bf16.msra.mxu0 0
          %630 = vmatpush.bf16.msra.mxu0 0
          %631 = vmatpush.bf16.msra.mxu0 0
          %632 = vmatpush.bf16.msra.mxu0 0
          %633 = vmatpush.bf16.msra.mxu0 0
          %634 = vmatpush.bf16.msra.mxu0 0
          %635 = vmatpush.bf16.msra.mxu0 %v623
          %636 = vmatpush.bf16.msra.mxu0 %v622
          %637 = vmatmul.bf16.gmra.mxu0 %v627
          %v638 = vpop.f32.mrf.mxu0
          %v639 = vadd.f32 %v612, %v638
          %v640 = vpop.f32.mrf.mxu0
          %641 = vdwg.mxu0
          %642 = vxpose.xlu0.b32.start [1/16] %v602, 128
          %643 = vxpose.xlu0.b32.cont [2/16] 0.0, 128
          %644 = vxpose.xlu0.b32.cont [3/16] 0.0, 128
          %645 = vxpose.xlu0.b32.cont [4/16] 0.0, 128
          %646 = vxpose.xlu0.b32.cont [5/16] 0.0, 128
          %647 = vxpose.xlu0.b32.cont [6/16] 0.0, 128
          %648 = vxpose.xlu0.b32.cont [7/16] 0.0, 128
          %649 = vxpose.xlu0.b32.cont [8/16] 0.0, 128
          %650 = vxpose.xlu0.b32.cont [9/16] 0.0, 128
          %651 = vxpose.xlu0.b32.cont [10/16] 0.0, 128
          %652 = vxpose.xlu0.b32.cont [11/16] 0.0, 128
          %653 = vxpose.xlu0.b32.cont [12/16] 0.0, 128
          %654 = vxpose.xlu0.b32.cont [13/16] 0.0, 128
          %655 = vxpose.xlu0.b32.cont [14/16] 0.0, 128
          %656 = vxpose.xlu0.b32.cont [15/16] 0.0, 128
          %657 = vxpose.xlu0.b32.end [16/16] 0.0, 128
          %v658 = vpop.trf.xlu0
          %v659 = vpop.trf.xlu0
          %v660 = vpop.trf.xlu0
          %v661 = vpop.trf.xlu0
          %v662 = vpop.trf.xlu0
          %v663 = vpop.trf.xlu0
          %v664 = vpop.trf.xlu0
          %v665 = vpop.trf.xlu0
          %v666 = vpop.trf.xlu0
          %v667 = vpop.trf.xlu0
          %v668 = vpop.trf.xlu0
          %v669 = vpop.trf.xlu0
          %v670 = vpop.trf.xlu0
          %v671 = vpop.trf.xlu0
          %v672 = vpop.trf.xlu0
          %v673 = vpop.trf.xlu0
          %v674 = vpack.c.bf16 %v658, %v658
          %vm675 = vcmask 60416
          %676 = vst.msk [vmem:[#allocation2] sm:$0xf] %vm675, %v674
          %v677 = vpack.c.bf16 %v639, %v639
          %678 = vst.msk [vmem:[#allocation3] sm:$0xf] %vm675, %v677
          %680 = vrot.lane.b32.xlu0 %v602, 120
          %v681 = vpop.permute.xlu0 %680
          %683 = vxpose.xlu0.b32.start [1/16] %v681, 128
          %684 = vxpose.xlu0.b32.cont [2/16] 0.0, 128
          %685 = vxpose.xlu0.b32.cont [3/16] 0.0, 128
          %686 = vxpose.xlu0.b32.cont [4/16] 0.0, 128
          %687 = vxpose.xlu0.b32.cont [5/16] 0.0, 128
          %688 = vxpose.xlu0.b32.cont [6/16] 0.0, 128
          %689 = vxpose.xlu0.b32.cont [7/16] 0.0, 128
          %690 = vxpose.xlu0.b32.cont [8/16] 0.0, 128
          %691 = vxpose.xlu0.b32.cont [9/16] 0.0, 128
          %692 = vxpose.xlu0.b32.cont [10/16] 0.0, 128
          %693 = vxpose.xlu0.b32.cont [11/16] 0.0, 128
          %694 = vxpose.xlu0.b32.cont [12/16] 0.0, 128
          %695 = vxpose.xlu0.b32.cont [13/16] 0.0, 128
          %696 = vxpose.xlu0.b32.cont [14/16] 0.0, 128
          %697 = vxpose.xlu0.b32.cont [15/16] 0.0, 128
          %698 = vxpose.xlu0.b32.end [16/16] 0.0, 128
          %v699 = vpop.trf.xlu0
          %v700 = vpop.trf.xlu0
          %v701 = vpop.trf.xlu0
          %v702 = vpop.trf.xlu0
          %v703 = vpop.trf.xlu0
          %v704 = vpop.trf.xlu0
          %v705 = vpop.trf.xlu0
          %v706 = vpop.trf.xlu0
          %v707 = vpop.trf.xlu0
          %v708 = vpop.trf.xlu0
          %v709 = vpop.trf.xlu0
          %v710 = vpop.trf.xlu0
          %v711 = vpop.trf.xlu0
          %v712 = vpop.trf.xlu0
          %v713 = vpop.trf.xlu0
          %v714 = vpop.trf.xlu0
          %v715 = vpack.c.bf16 %v699, %v699
          %s716 = scalar_lea.vmem [#allocation2], 4
          %717 = vst.msk [vmem:[%s716] sm:$0xf] %vm675, %v715
          %719 = vrot.lane.b32.xlu0 %v677, 120
          %v720 = vpop.permute.xlu0 %719
          %s722 = scalar_lea.vmem [#allocation3], 4
          %723 = vst.msk [vmem:[%s722] sm:$0xf] %vm675, %v720
          %724 = vrot.lane.b32.xlu0 %v602, 112
          %v725 = vpop.permute.xlu0 %724
          %727 = vxpose.xlu0.b32.start [1/16] %v725, 128
          %728 = vxpose.xlu0.b32.cont [2/16] 0.0, 128
          %729 = vxpose.xlu0.b32.cont [3/16] 0.0, 128
          %730 = vxpose.xlu0.b32.cont [4/16] 0.0, 128
          %731 = vxpose.xlu0.b32.cont [5/16] 0.0, 128
          %732 = vxpose.xlu0.b32.cont [6/16] 0.0, 128
          %733 = vxpose.xlu0.b32.cont [7/16] 0.0, 128
          %734 = vxpose.xlu0.b32.cont [8/16] 0.0, 128
          %735 = vxpose.xlu0.b32.cont [9/16] 0.0, 128
          %736 = vxpose.xlu0.b32.cont [10/16] 0.0, 128
          %737 = vxpose.xlu0.b32.cont [11/16] 0.0, 128
          %738 = vxpose.xlu0.b32.cont [12/16] 0.0, 128
          %739 = vxpose.xlu0.b32.cont [13/16] 0.0, 128
          %740 = vxpose.xlu0.b32.cont [14/16] 0.0, 128
          %741 = vxpose.xlu0.b32.cont [15/16] 0.0, 128
          %742 = vxpose.xlu0.b32.end [16/16] 0.0, 128
          %v743 = vpop.trf.xlu0
          %v744 = vpop.trf.xlu0
          %v745 = vpop.trf.xlu0
          %v746 = vpop.trf.xlu0
          %v747 = vpop.trf.xlu0
          %v748 = vpop.trf.xlu0
          %v749 = vpop.trf.xlu0
          %v750 = vpop.trf.xlu0
          %v751 = vpop.trf.xlu0
          %v752 = vpop.trf.xlu0
          %v753 = vpop.trf.xlu0
          %v754 = vpop.trf.xlu0
          %v755 = vpop.trf.xlu0
          %v756 = vpop.trf.xlu0
          %v757 = vpop.trf.xlu0
          %v758 = vpop.trf.xlu0
          %v759 = vpack.c.bf16 %v743, %v743
          %s760 = scalar_lea.vmem [#allocation2], 8
          %761 = vst.msk [vmem:[%s760] sm:$0xf] %vm675, %v759
          %762 = vrot.lane.b32.xlu0 %v677, 112
          %v763 = vpop.permute.xlu0 %762
          %s765 = scalar_lea.vmem [#allocation3], 8
          %766 = vst.msk [vmem:[%s765] sm:$0xf] %vm675, %v763
          %767 = vrot.lane.b32.xlu0 %v602, 104
          %v768 = vpop.permute.xlu0 %767
          %770 = vxpose.xlu0.b32.start [1/16] %v768, 128
          %771 = vxpose.xlu0.b32.cont [2/16] 0.0, 128
          %772 = vxpose.xlu0.b32.cont [3/16] 0.0, 128
          %773 = vxpose.xlu0.b32.cont [4/16] 0.0, 128
          %774 = vxpose.xlu0.b32.cont [5/16] 0.0, 128
          %775 = vxpose.xlu0.b32.cont [6/16] 0.0, 128
          %776 = vxpose.xlu0.b32.cont [7/16] 0.0, 128
          %777 = vxpose.xlu0.b32.cont [8/16] 0.0, 128
          %778 = vxpose.xlu0.b32.cont [9/16] 0.0, 128
          %779 = vxpose.xlu0.b32.cont [10/16] 0.0, 128
          %780 = vxpose.xlu0.b32.cont [11/16] 0.0, 128
          %781 = vxpose.xlu0.b32.cont [12/16] 0.0, 128
          %782 = vxpose.xlu0.b32.cont [13/16] 0.0, 128
          %783 = vxpose.xlu0.b32.cont [14/16] 0.0, 128
          %784 = vxpose.xlu0.b32.cont [15/16] 0.0, 128
          %785 = vxpose.xlu0.b32.end [16/16] 0.0, 128
          %v786 = vpop.trf.xlu0
          %v787 = vpop.trf.xlu0
          %v788 = vpop.trf.xlu0
          %v789 = vpop.trf.xlu0
          %v790 = vpop.trf.xlu0
          %v791 = vpop.trf.xlu0
          %v792 = vpop.trf.xlu0
          %v793 = vpop.trf.xlu0
          %v794 = vpop.trf.xlu0
          %v795 = vpop.trf.xlu0
          %v796 = vpop.trf.xlu0
          %v797 = vpop.trf.xlu0
          %v798 = vpop.trf.xlu0
          %v799 = vpop.trf.xlu0
          %v800 = vpop.trf.xlu0
          %v801 = vpop.trf.xlu0
          %v802 = vpack.c.bf16 %v786, %v786
          %s803 = scalar_lea.vmem [#allocation2], 12
          %804 = vst.msk [vmem:[%s803] sm:$0xf] %vm675, %v802
          %805 = vrot.lane.b32.xlu0 %v677, 104
          %v806 = vpop.permute.xlu0 %805
          %s808 = scalar_lea.vmem [#allocation3], 12
          %809 = vst.msk [vmem:[%s808] sm:$0xf] %vm675, %v806
        $region96: #{tpu_custom_call.1} parent=63 // pred_fallthru
          _
        %v810 = vld [vmem:[%s472] sm:$0xf]
        %v811 = vld [vmem:[#allocation11] sm:$0xf]
        %v812 = vld [vmem:[#allocation11 + $0x4] sm:$0xf]
        %v813 = vld [vmem:[#allocation11 + $0x8] sm:$0xf]
        %v814 = vld [vmem:[#allocation11 + $0xc] sm:$0xf]
        %v815 = vld [vmem:[%s7] sm:$0x1]
        %v817 = vperm.slane %v815, 0
        %v823 = vunpack.c.l.b16 %v811
        %v824 = vunpack.c.l.b16 %v812
        %v825 = vunpack.c.l.b16 %v813
        %v826 = vunpack.c.l.b16 %v814
        %v827 = vpack.c.b16 %v824, %v823
        %v828 = vpack.c.b16 %v826, %v825
        %vm831 = vcmask 261120
        %v833 = vsel %vm831, %v810, 0
        %835 = vmatpush.bf16.msra.mxu0 0
        %836 = vmatpush.bf16.msra.mxu0 0
        %837 = vmatpush.bf16.msra.mxu0 0
        %838 = vmatpush.bf16.msra.mxu0 0
        %839 = vmatpush.bf16.msra.mxu0 0
        %840 = vmatpush.bf16.msra.mxu0 0
        %841 = vmatpush.bf16.msra.mxu0 %v828
        %842 = vmatpush.bf16.msra.mxu0 %v827
        %843 = vmatmul.bf16.gmra.mxu0 %v833
        %v844 = vpop.f32.mrf.mxu0
        %v845 = vadd.f32 %v817, %v844
        %v846 = vpop.f32.mrf.mxu0
        %847 = vdwg.mxu0
        %v848 = vmul.f32 %v845, 0.35355338
        %v849 = vpack.c.bf16 %v848, %v848
        %v850 = vld [vmem:[#allocation2] sm:$0xf]
        %vm851 = vcmask 64512
        %v853 = vsel %vm851, %v849, 0
        %vm855 = vcmask 1043456
        %v857 = vsel %vm855, %v850, 0
        %859 = vmatpush.bf16.msra.mxu0 0
        %860 = vmatpush.bf16.msra.mxu0 0
        %861 = vmatpush.bf16.msra.mxu0 0
        %862 = vmatpush.bf16.msra.mxu0 0
        %863 = vmatpush.bf16.msra.mxu0 0
        %864 = vmatpush.bf16.msra.mxu0 0
        %865 = vmatpush.bf16.msra.mxu0 0
        %866 = vmatpush.bf16.msra.mxu0 %v857
        %867 = vmatmul.bf16.gmra.mxu0 %v853
        %v868 = vpop.f32.mrf.mxu0
        %v869 = vadd.f32 0.0, %v868
        %v870 = vpop.f32.mrf.mxu0
        %871 = vdwg.mxu0
        %v872 = vsel %vm851, %v869, -inf
        %873 = vmax.xlane.f32.xlu0 %v872
        %v874 = vpop.xlane.xlu0 %873
        %v875 = vsub.f32 %v869, %v874
        %v876 = vmul.f32 %v875, 1.442695
        %v877 = vpow.pop %v876
        %v878 = vsel %vm851, %v877, 0.0
        %879 = vadd.xlane.f32.xlu0 %v878
        %v880 = vpop.xlane.xlu0 %879
        %v881 = vrcp.pop %v880
        %v882 = vmul.f32 %v877, %v881
        %v883 = vpack.c.bf16 %v882, %v882
        %v884 = vld [vmem:[#allocation3] sm:$0xf]
        %v886 = vsel %vm851, %v883, 0
        %v889 = vsel %vm855, %v884, 0
        %891 = vmatpush.bf16.msra.mxu0 0
        %892 = vmatpush.bf16.msra.mxu0 0
        %893 = vmatpush.bf16.msra.mxu0 0
        %894 = vmatpush.bf16.msra.mxu0 0
        %895 = vmatpush.bf16.msra.mxu0 0
        %896 = vmatpush.bf16.msra.mxu0 0
        %897 = vmatpush.bf16.msra.mxu0 0
        %898 = vmatpush.bf16.msra.mxu0 %v889
        %899 = vmatmul.bf16.gmra.mxu0 %v886
        %v900 = vpop.f32.mrf.mxu0
        %v901 = vadd.f32 0.0, %v900
        %v902 = vpop.f32.mrf.mxu0
        %903 = vdwg.mxu0
        %v904 = vpack.c.bf16 %v901, %v901
        %vm905 = vcmask 60416
        %906 = vst.msk [vmem:[#allocation4] sm:$0xf] %vm905, %v904
        %s907 = scalar_lea.vmem [#allocation2], 4
        %v908 = vld [vmem:[%s907] sm:$0xf]
        %v910 = vunpack.c.l.b16 %v849
        %v911 = vpack.c.b16 %v910, %v910
        %912 = vrot.lane.b32.xlu0 %v911, 120
        %v913 = vpop.permute.xlu0 %912
        %v915 = vsel %vm851, %v913, 0
        %v918 = vsel %vm855, %v908, 0
        %920 = vmatpush.bf16.msra.mxu0 0
        %921 = vmatpush.bf16.msra.mxu0 0
        %922 = vmatpush.bf16.msra.mxu0 0
        %923 = vmatpush.bf16.msra.mxu0 0
        %924 = vmatpush.bf16.msra.mxu0 0
        %925 = vmatpush.bf16.msra.mxu0 0
        %926 = vmatpush.bf16.msra.mxu0 0
        %927 = vmatpush.bf16.msra.mxu0 %v918
        %928 = vmatmul.bf16.gmra.mxu0 %v915
        %v929 = vpop.f32.mrf.mxu0
        %v930 = vadd.f32 0.0, %v929
        %v931 = vpop.f32.mrf.mxu0
        %932 = vdwg.mxu0
        %v933 = vsel %vm851, %v930, -inf
        %934 = vmax.xlane.f32.xlu0 %v933
        %v935 = vpop.xlane.xlu0 %934
        %v936 = vsub.f32 %v930, %v935
        %v937 = vmul.f32 %v936, 1.442695
        %v938 = vpow.pop %v937
        %v939 = vsel %vm851, %v938, 0.0
        %940 = vadd.xlane.f32.xlu0 %v939
        %v941 = vpop.xlane.xlu0 %940
        %v942 = vrcp.pop %v941
        %v943 = vmul.f32 %v938, %v942
        %v944 = vpack.c.bf16 %v943, %v943
        %s945 = scalar_lea.vmem [#allocation3], 4
        %v946 = vld [vmem:[%s945] sm:$0xf]
        %v948 = vsel %vm851, %v944, 0
        %v951 = vsel %vm855, %v946, 0
        %953 = vmatpush.bf16.msra.mxu0 0
        %954 = vmatpush.bf16.msra.mxu0 0
        %955 = vmatpush.bf16.msra.mxu0 0
        %956 = vmatpush.bf16.msra.mxu0 0
        %957 = vmatpush.bf16.msra.mxu0 0
        %958 = vmatpush.bf16.msra.mxu0 0
        %959 = vmatpush.bf16.msra.mxu0 0
        %960 = vmatpush.bf16.msra.mxu0 %v951
        %961 = vmatmul.bf16.gmra.mxu0 %v948
        %v962 = vpop.f32.mrf.mxu0
        %v963 = vadd.f32 0.0, %v962
        %v964 = vpop.f32.mrf.mxu0
        %965 = vdwg.mxu0
        %v966 = vpack.c.bf16 %v963, %v963
        %968 = vrot.lane.b32.xlu0 %v966, 8
        %v969 = vpop.permute.xlu0 %968
        %vm971 = vcmask 126016
        %972 = vst.msk [vmem:[#allocation4] sm:$0xf] %vm971, %v969
        %s973 = scalar_lea.vmem [#allocation2], 8
        %v974 = vld [vmem:[%s973] sm:$0xf]
        %975 = vrot.lane.b32.xlu0 %v911, 112
        %v976 = vpop.permute.xlu0 %975
        %v978 = vsel %vm851, %v976, 0
        %v981 = vsel %vm855, %v974, 0
        %983 = vmatpush.bf16.msra.mxu0 0
        %984 = vmatpush.bf16.msra.mxu0 0
        %985 = vmatpush.bf16.msra.mxu0 0
        %986 = vmatpush.bf16.msra.mxu0 0
        %987 = vmatpush.bf16.msra.mxu0 0
        %988 = vmatpush.bf16.msra.mxu0 0
        %989 = vmatpush.bf16.msra.mxu0 0
        %990 = vmatpush.bf16.msra.mxu0 %v981
        %991 = vmatmul.bf16.gmra.mxu0 %v978
        %v992 = vpop.f32.mrf.mxu0
        %v993 = vadd.f32 0.0, %v992
        %v994 = vpop.f32.mrf.mxu0
        %995 = vdwg.mxu0
        %v996 = vsel %vm851, %v993, -inf
        %997 = vmax.xlane.f32.xlu0 %v996
        %v998 = vpop.xlane.xlu0 %997
        %v999 = vsub.f32 %v993, %v998
        %v1000 = vmul.f32 %v999, 1.442695
        %v1001 = vpow.pop %v1000
        %v1002 = vsel %vm851, %v1001, 0.0
        %1003 = vadd.xlane.f32.xlu0 %v1002
        %v1004 = vpop.xlane.xlu0 %1003
        %v1005 = vrcp.pop %v1004
        %v1006 = vmul.f32 %v1001, %v1005
        %v1007 = vpack.c.bf16 %v1006, %v1006
        %s1008 = scalar_lea.vmem [#allocation3], 8
        %v1009 = vld [vmem:[%s1008] sm:$0xf]
        %v1011 = vsel %vm851, %v1007, 0
        %v1014 = vsel %vm855, %v1009, 0
        %1016 = vmatpush.bf16.msra.mxu0 0
        %1017 = vmatpush.bf16.msra.mxu0 0
        %1018 = vmatpush.bf16.msra.mxu0 0
        %1019 = vmatpush.bf16.msra.mxu0 0
        %1020 = vmatpush.bf16.msra.mxu0 0
        %1021 = vmatpush.bf16.msra.mxu0 0
        %1022 = vmatpush.bf16.msra.mxu0 0
        %1023 = vmatpush.bf16.msra.mxu0 %v1014
        %1024 = vmatmul.bf16.gmra.mxu0 %v1011
        %v1025 = vpop.f32.mrf.mxu0
        %v1026 = vadd.f32 0.0, %v1025
        %v1027 = vpop.f32.mrf.mxu0
        %1028 = vdwg.mxu0
        %v1029 = vpack.c.bf16 %v1026, %v1026
        %1031 = vrot.lane.b32.xlu0 %v1029, 16
        %v1032 = vpop.permute.xlu0 %1031
        %vm1034 = vcmask 191616
        %1035 = vst.msk [vmem:[#allocation4] sm:$0xf] %vm1034, %v1032
        %s1036 = scalar_lea.vmem [#allocation2], 12
        %v1037 = vld [vmem:[%s1036] sm:$0xf]
        %1038 = vrot.lane.b32.xlu0 %v911, 104
        %v1039 = vpop.permute.xlu0 %1038
        %v1041 = vsel %vm851, %v1039, 0
        %v1044 = vsel %vm855, %v1037, 0
        %1046 = vmatpush.bf16.msra.mxu0 0
        %1047 = vmatpush.bf16.msra.mxu0 0
        %1048 = vmatpush.bf16.msra.mxu0 0
        %1049 = vmatpush.bf16.msra.mxu0 0
        %1050 = vmatpush.bf16.msra.mxu0 0
        %1051 = vmatpush.bf16.msra.mxu0 0
        %1052 = vmatpush.bf16.msra.mxu0 0
        %1053 = vmatpush.bf16.msra.mxu0 %v1044
        %1054 = vmatmul.bf16.gmra.mxu0 %v1041
        %v1055 = vpop.f32.mrf.mxu0
        %v1056 = vadd.f32 0.0, %v1055
        %v1057 = vpop.f32.mrf.mxu0
        %1058 = vdwg.mxu0
        %v1059 = vsel %vm851, %v1056, -inf
        %1060 = vmax.xlane.f32.xlu0 %v1059
        %v1061 = vpop.xlane.xlu0 %1060
        %v1062 = vsub.f32 %v1056, %v1061
        %v1063 = vmul.f32 %v1062, 1.442695
        %v1064 = vpow.pop %v1063
        %v1065 = vsel %vm851, %v1064, 0.0
        %1066 = vadd.xlane.f32.xlu0 %v1065
        %v1067 = vpop.xlane.xlu0 %1066
        %v1068 = vrcp.pop %v1067
        %v1069 = vmul.f32 %v1064, %v1068
        %v1070 = vpack.c.bf16 %v1069, %v1069
        %s1071 = scalar_lea.vmem [#allocation3], 12
        %v1072 = vld [vmem:[%s1071] sm:$0xf]
        %v1074 = vsel %vm851, %v1070, 0
        %v1077 = vsel %vm855, %v1072, 0
        %1079 = vmatpush.bf16.msra.mxu0 0
        %1080 = vmatpush.bf16.msra.mxu0 0
        %1081 = vmatpush.bf16.msra.mxu0 0
        %1082 = vmatpush.bf16.msra.mxu0 0
        %1083 = vmatpush.bf16.msra.mxu0 0
        %1084 = vmatpush.bf16.msra.mxu0 0
        %1085 = vmatpush.bf16.msra.mxu0 0
        %1086 = vmatpush.bf16.msra.mxu0 %v1077
        %1087 = vmatmul.bf16.gmra.mxu0 %v1074
        %v1088 = vpop.f32.mrf.mxu0
        %v1089 = vadd.f32 0.0, %v1088
        %v1090 = vpop.f32.mrf.mxu0
        %1091 = vdwg.mxu0
        %v1092 = vpack.c.bf16 %v1089, %v1089
        %1094 = vrot.lane.b32.xlu0 %v1092, 24
        %v1095 = vpop.permute.xlu0 %1094
        %vm1097 = vcmask 257216
        %1098 = vst.msk [vmem:[#allocation4] sm:$0xf] %vm1097, %v1095
        %v1099 = vld [vmem:[#allocation4] sm:$0xf]
        %v1100 = vld [vmem:[#allocation16] sm:$0xf]
        %v1101 = vld [vmem:[#allocation16 + $0x4] sm:$0xf]
        %v1102 = vld [vmem:[#allocation16 + $0x8] sm:$0xf]
        %v1103 = vld [vmem:[#allocation16 + $0xc] sm:$0xf]
        %v1104 = vld [vmem:[%s10] sm:$0x1]
        %v1106 = vperm.slane %v1104, 0
        %v1112 = vunpack.c.l.b16 %v1100
        %v1113 = vunpack.c.l.b16 %v1101
        %v1114 = vunpack.c.l.b16 %v1102
        %v1115 = vunpack.c.l.b16 %v1103
        %v1116 = vpack.c.b16 %v1113, %v1112
        %v1117 = vpack.c.b16 %v1115, %v1114
        %v1121 = vsel %vm831, %v1099, 0
        %1123 = vmatpush.bf16.msra.mxu0 0
        %1124 = vmatpush.bf16.msra.mxu0 0
        %1125 = vmatpush.bf16.msra.mxu0 0
        %1126 = vmatpush.bf16.msra.mxu0 0
        %1127 = vmatpush.bf16.msra.mxu0 0
        %1128 = vmatpush.bf16.msra.mxu0 0
        %1129 = vmatpush.bf16.msra.mxu0 %v1117
        %1130 = vmatpush.bf16.msra.mxu0 %v1116
        %1131 = vmatmul.bf16.gmra.mxu0 %v1121
        %v1132 = vpop.f32.mrf.mxu0
        %v1133 = vadd.f32 %v1106, %v1132
        %v1134 = vpop.f32.mrf.mxu0
        %1135 = vdwg.mxu0
        %1136 = vst.msk [vmem:[%s561] sm:$0xff] %vm831, %v1133
        %s1137 = sand.u32 %s303, 1
        %s1138 = scalar_lea.sflag [#allocation7], %s1137
        %s1139 = sand.u32 %s303, 1
        %s1140 = smul.addr %s1139, 8
        %s1141 = scalar_lea.vmem [#allocation17], %s1140
        // Predicated region
        $region97: #{tpu_custom_call.1} parent=63 // pred_check
          %p1142 = pneg %p313
        $region98: #{tpu_custom_call.1} parent=63 // pred_check_branch
          %1144 = sbr.rel (%p1142) target = $region100
        $region99: #{tpu_custom_call.1} parent=63 // pred_region
          %1146 = vsyncadd %s1138, 0
          %s1147 = sadd.s32 %s38, %s37
          %s1148 = smul.addr %s1147, 8
          %s1149 = scalar_lea.hbm %s11, %s1148
          %s1151 = sshll.u32 %s1141, 4
          %s1152 = int_to_ptr.vmem [resolvable:$true] %s1151
          %s1153 = sshll.u32 %s1149, 4
          %s1154 = int_to_ptr.hbm [resolvable:$true] %s1153
          %1156 = dma.vmem_to_hbm [thread:$0]  %s1152, 128, %s1154, %s1138
        $region100: #{tpu_custom_call.1} parent=63 // pred_fallthru
          _
      $region64: #{tpu_custom_call.1} parent=5 // pred_fallthru
        _
      %p1157 = scmp.le.s32.totalorder 2, %s28
      // Predicated region
      $region101: #{tpu_custom_call.1} parent=5 // pred_check
        %p1158 = pneg %p1157
      $region102: #{tpu_custom_call.1} parent=5 // pred_check_branch
        %1160 = sbr.rel (%p1158) target = $region104
      $region103: #{tpu_custom_call.1} parent=5 // pred_region
        %s1161 = ssub.s32 %s28, 2
        // Predicated region
        $region105: #{tpu_custom_call.1} parent=103 // pred_check
          %p1162 = pneg %p319
        $region106: #{tpu_custom_call.1} parent=103 // pred_check_branch
          %1164 = sbr.rel (%p1162) target = $region108
        $region107: #{tpu_custom_call.1} parent=103 // pred_region
          %s1165 = sand.u32 %s304, 1
          %s1166 = scalar_lea.sflag [#allocation7], %s1165
          %s1167 = sand.u32 %s304, 1
          %s1168 = smul.addr %s1167, 8
          %s1169 = scalar_lea.vmem [#allocation17], %s1168
          %1171 = dma.done %s1166, 128
        $region108: #{tpu_custom_call.1} parent=103 // pred_fallthru
          _
      $region104: #{tpu_custom_call.1} parent=5 // pred_fallthru
        _
    $region6: #{tpu_custom_call.1} parent=1 // loop_footer
      %s32 = sadd.s32 1, %s28
    $region7: #{tpu_custom_call.1} parent=1 // loop_footer_branch
      %27 = sbr.rel target = $region3
    $region8: #{tpu_custom_call.1} parent=1 // loop_exit
      _
    %1172 = vsyncpa [#allocation6], 1
    %s1173 = scalar_lea.sflag [#allocation6], 1
    %1174 = vsyncpa %s1173, 1
    %1175 = vsyncpa [#allocation9], 1
    %s1176 = scalar_lea.sflag [#allocation9], 1
    %1177 = vsyncpa %s1176, 1
    %1178 = vsyncpa [#allocation12], 1
    %1179 = vsyncpa [#allocation15], 1
    %1180 = vsyncpa [#allocation7], 1
    %s1181 = scalar_lea.sflag [#allocation7], 1
    %1182 = vsyncpa %s1181, 1

// kernel: tpu_custom_call.1
$region0: #{tpu_custom_call.1}
  #allocation0 [shape = 'u32[]', space=smem, size = 0x4, offset = 0x4, fixed_abs, tag = 'smem constant byte address 0x4 - core index']
  #allocation1 [shape = 'u32[72,128]{1,0:T(1,128)}', space=vmem, size = 0x9000, scoped, tag = 'internal scratch']
  #allocation2 [shape = 'bf16[4,8,8]{2,1,0:T(8,128)(2,1)}', space=vmem, size = 0x2000, scoped, tag = 'scratch operand']
  #allocation3 [shape = 'bf16[4,8,8]{2,1,0:T(8,128)(2,1)}', space=vmem, size = 0x2000, scoped, tag = 'scratch operand']
  #allocation4 [shape = 'bf16[8,32]{1,0:T(8,128)(2,1)}', space=vmem, size = 0x800, scoped, tag = 'scratch operand']
  %s0 = inlined_call_operand.hbm [shape: bf16[2,8,32], index: 0, kind: input, shape index: {}]
  %s1 = inlined_call_operand.hbm [shape: bf16[2,8,32], index: 1, kind: input, shape index: {}]
  %s2 = inlined_call_operand.hbm [shape: bf16[2,8,32], index: 2, kind: input, shape index: {}]
  %s3 = inlined_call_operand.hbm [shape: bf16[32,32], index: 3, kind: input, shape index: {}]
  %s4 = inlined_call_operand.hbm [shape: bf16[32,32], index: 4, kind: input, shape index: {}]
  %s5 = inlined_call_operand.hbm [shape: bf16[32,32], index: 5, kind: input, shape index: {}]
  %s6 = inlined_call_operand.hbm [shape: bf16[32,32], index: 6, kind: input, shape index: {}]
  %s7 = inlined_call_operand.vmem [shape: f32[1,32], index: 7, kind: input, shape index: {}]
  %s8 = inlined_call_operand.vmem [shape: f32[1,32], index: 8, kind: input, shape index: {}]
  %s9 = inlined_call_operand.vmem [shape: f32[1,32], index: 9, kind: input, shape index: {}]
  %s10 = inlined_call_operand.vmem [shape: f32[1,32], index: 10, kind: input, shape index: {}]
  %s11 = inlined_call_operand.hbm [shape: f32[2,8,32], index: 11, kind: output, shape index: {}]
  %s12 = sld [smem:[#allocation0]]
  $region109: #{tpu_custom_call.1} parent=0
    _
  %s14 = ssub.s32 1, %s12
  %s15 = scalar_select 0, %s14, %s12
  $region1: #{tpu_custom_call.1} parent=0
    #allocation5 [shape = 'u8[4096]{0}', space=vmem, size = 0x1000, scoped, tag = 'input window, operand 0']
    #allocation6 [shape = 's32[2]{0}', space=sflag, size = 0x8, scoped, tag = 'scoped memory for tpu_custom_call.1']
    #allocation7 [shape = 's32[2]{0}', space=sflag, size = 0x8, scoped, tag = 'scoped memory for tpu_custom_call.1']
    #allocation8 [shape = 'u8[4096]{0}', space=vmem, size = 0x1000, scoped, tag = 'input window, operand 1']
    #allocation9 [shape = 's32[2]{0}', space=sflag, size = 0x8, scoped, tag = 'scoped memory for tpu_custom_call.1']
    #allocation10 [shape = 'u8[4096]{0}', space=vmem, size = 0x1000, scoped, tag = 'input window, operand 2']
    #allocation11 [shape = 'u8[8192]{0}', space=vmem, size = 0x2000, scoped, tag = 'input window, operand 3, single buffered']
    #allocation12 [shape = 's32[1]{0}', space=sflag, size = 0x4, scoped, tag = 'scoped memory for tpu_custom_call.1']
    #allocation13 [shape = 'u8[8192]{0}', space=vmem, size = 0x2000, scoped, tag = 'input window, operand 4, single buffered']
    #allocation14 [shape = 'u8[8192]{0}', space=vmem, size = 0x2000, scoped, tag = 'input window, operand 5, single buffered']
    #allocation15 [shape = 's32[1]{0}', space=sflag, size = 0x4, scoped, tag = 'scoped memory for tpu_custom_call.1']
    #allocation16 [shape = 'u8[8192]{0}', space=vmem, size = 0x2000, scoped, tag = 'input window, operand 6, single buffered']
    #allocation17 [shape = 'u8[8192]{0}', space=vmem, size = 0x2000, scoped, tag = 'output window, operand 0']
    %16 = vsyncpa [#allocation6], 0
    %s17 = scalar_lea.sflag [#allocation6], 1
    %18 = vsyncpa %s17, 0
    %19 = vsyncpa [#allocation9], 0
    %s20 = scalar_lea.sflag [#allocation9], 1
    %21 = vsyncpa %s20, 0
    %22 = vsyncpa [#allocation12], 0
    %23 = vsyncpa [#allocation15], 0
    %24 = vsyncpa [#allocation7], 0
    %s25 = scalar_lea.sflag [#allocation7], 1
    %26 = vsyncpa %s25, 0
    loop: start=0, step=1, limit=4
    $region2: #{tpu_custom_call.1} parent=1 // loop_pre_header
      _
    $region3: #{tpu_custom_call.1} parent=1 // loop_header
      %s28 = sphi 0, %s32
      %p29 = scmp.ge.s32.totalorder %s28, 4
      %s35 = sphi 0, %s47
      %s36 = sphi 0, %s43
      %s37 = sphi 0, %s35
      %s38 = sphi 0, %s36
      %s39 = sphi 0, %s37
      %s40 = sphi 0, %s38
      %s52 = sphi 0, %s54
      %s55 = sphi 0, %s52
      %s56 = sphi 0, %s55
      %s72 = sphi 0, %s56
      %s78 = sphi 0, %s80
      %s81 = sphi 0, %s78
      %s82 = sphi 0, %s81
      %s98 = sphi 0, %s82
      %s104 = sphi 0, %s106
      %s107 = sphi 0, %s104
      %s108 = sphi 0, %s107
      %s124 = sphi 0, %s108
      %s128 = sphi 0, %s128
      %s130 = sphi 0, %s128
      %s131 = sphi 0, %s130
      %s145 = sphi 0, %s131
      %s149 = sphi 0, %s149
      %s151 = sphi 0, %s149
      %s152 = sphi 0, %s151
      %s166 = sphi 0, %s152
      %s170 = sphi 0, %s170
      %s172 = sphi 0, %s170
      %s173 = sphi 0, %s172
      %s187 = sphi 0, %s173
      %s191 = sphi 0, %s191
      %s193 = sphi 0, %s191
      %s194 = sphi 0, %s193
      %s208 = sphi 0, %s194
      %s212 = sphi 0, %s212
      %s214 = sphi 0, %s212
      %s215 = sphi 0, %s214
      %s229 = sphi 0, %s215
      %s233 = sphi 0, %s233
      %s235 = sphi 0, %s233
      %s236 = sphi 0, %s235
      %s250 = sphi 0, %s236
      %s254 = sphi 0, %s254
      %s256 = sphi 0, %s254
      %s257 = sphi 0, %s256
      %s271 = sphi 0, %s257
      %s275 = sphi 0, %s275
      %s277 = sphi 0, %s275
      %s278 = sphi 0, %s277
      %s292 = sphi 0, %s278
      %s300 = sphi 0, %s302
      %s303 = sphi 0, %s300
      %s304 = sphi 0, %s303
      %s320 = sphi 0, %s304
    $region4: #{tpu_custom_call.1} parent=1 // loop_header_branch
      %31 = sbr.rel (%p29) target = $region8
    $region5: #{tpu_custom_call.1} parent=1 // loop_body
      %s33 = ssub.s32 %s28, 1
      %s34 = ssub.s32 %s28, 2
      %s41 = sadd.s32 1, %s36
      %p42 = scmp.ge.s32.totalorder %s41, 1
      %s43 = scalar_select %p42, 0, %s41
      %s44 = sadd.s32 1, %s35
      %s45 = scalar_select %p42, %s44, %s35
      %p46 = scmp.ge.s32.totalorder %s45, 2
      %s47 = scalar_select %p46, 0, %s45
      %s48 = ssub.s32 %s35, %s47
      %s49 = ssub.s32 %s36, %s43
      %s50 = sor.u32 %s48, %s49
      %p51 = scmp.eq.s32.totalorder %s50, 0
      %s53 = sadd.s32 %s52, 1
      %s54 = scalar_select %p51, %s52, %s53
      %p57 = pneg %p51
      %p58 = scmp.eq.s32.totalorder %s28, 1
      %p59 = por %p57, %p58
      %p60 = scmp.ne.s32.totalorder %s52, %s55
      %p61 = scmp.eq.s32.totalorder %s28, 0
      %p62 = por %p60, %p61
      %p63 = scmp.ne.s32.totalorder %s52, %s55
      %p64 = scmp.eq.s32.totalorder %s33, 1
      %p65 = por %p63, %p64
      %p66 = scmp.ne.s32.totalorder %s55, %s56
      %p67 = scmp.eq.s32.totalorder %s33, 0
      %p68 = por %p66, %p67
      %p69 = scmp.ne.s32.totalorder %s55, %s56
      %p70 = scmp.eq.s32.totalorder %s34, 1
      %p71 = por %p69, %p70
      %p73 = scmp.ne.s32.totalorder %s56, %s72
      %p74 = scmp.eq.s32.totalorder %s34, 0
      %p75 = por %p73, %p74
      %s76 = ssub.s32 %s35, %s47
      %p77 = scmp.eq.s32.totalorder %s76, 0
      %s79 = sadd.s32 %s78, 1
      %s80 = scalar_select %p77, %s78, %s79
      %p83 = pneg %p77
      %p84 = scmp.eq.s32.totalorder %s28, 1
      %p85 = por %p83, %p84
      %p86 = scmp.ne.s32.totalorder %s78, %s81
      %p87 = scmp.eq.s32.totalorder %s28, 0
      %p88 = por %p86, %p87
      %p89 = scmp.ne.s32.totalorder %s78, %s81
      %p90 = scmp.eq.s32.totalorder %s33, 1
      %p91 = por %p89, %p90
      %p92 = scmp.ne.s32.totalorder %s81, %s82
      %p93 = scmp.eq.s32.totalorder %s33, 0
      %p94 = por %p92, %p93
      %p95 = scmp.ne.s32.totalorder %s81, %s82
      %p96 = scmp.eq.s32.totalorder %s34, 1
      %p97 = por %p95, %p96
      %p99 = scmp.ne.s32.totalorder %s82, %s98
      %p100 = scmp.eq.s32.totalorder %s34, 0
      %p101 = por %p99, %p100
      %s102 = ssub.s32 %s35, %s47
      %p103 = scmp.eq.s32.totalorder %s102, 0
      %s105 = sadd.s32 %s104, 1
      %s106 = scalar_select %p103, %s104, %s105
      %p109 = pneg %p103
      %p110 = scmp.eq.s32.totalorder %s28, 1
      %p111 = por %p109, %p110
      %p112 = scmp.ne.s32.totalorder %s104, %s107
      %p113 = scmp.eq.s32.totalorder %s28, 0
      %p114 = por %p112, %p113
      %p115 = scmp.ne.s32.totalorder %s104, %s107
      %p116 = scmp.eq.s32.totalorder %s33, 1
      %p117 = por %p115, %p116
      %p118 = scmp.ne.s32.totalorder %s107, %s108
      %p119 = scmp.eq.s32.totalorder %s33, 0
      %p120 = por %p118, %p119
      %p121 = scmp.ne.s32.totalorder %s107, %s108
      %p122 = scmp.eq.s32.totalorder %s34, 1
      %p123 = por %p121, %p122
      %p125 = scmp.ne.s32.totalorder %s108, %s124
      %p126 = scmp.eq.s32.totalorder %s34, 0
      %p127 = por %p125, %p126
      %s129 = sadd.s32 %s128, 1
      %p132 = scmp.eq.s32.totalorder %s28, 1
      %p133 = scmp.ne.s32.totalorder %s128, %s130
      %p134 = scmp.eq.s32.totalorder %s28, 0
      %p135 = por %p133, %p134
      %p136 = scmp.ne.s32.totalorder %s128, %s130
      %p137 = scmp.eq.s32.totalorder %s33, 1
      %p138 = por %p136, %p137
      %p139 = scmp.ne.s32.totalorder %s130, %s131
      %p140 = scmp.eq.s32.totalorder %s33, 0
      %p141 = por %p139, %p140
      %p142 = scmp.ne.s32.totalorder %s130, %s131
      %p143 = scmp.eq.s32.totalorder %s34, 1
      %p144 = por %p142, %p143
      %p146 = scmp.ne.s32.totalorder %s131, %s145
      %p147 = scmp.eq.s32.totalorder %s34, 0
      %p148 = por %p146, %p147
      %s150 = sadd.s32 %s149, 1
      %p153 = scmp.eq.s32.totalorder %s28, 1
      %p154 = scmp.ne.s32.totalorder %s149, %s151
      %p155 = scmp.eq.s32.totalorder %s28, 0
      %p156 = por %p154, %p155
      %p157 = scmp.ne.s32.totalorder %s149, %s151
      %p158 = scmp.eq.s32.totalorder %s33, 1
      %p159 = por %p157, %p158
      %p160 = scmp.ne.s32.totalorder %s151, %s152
      %p161 = scmp.eq.s32.totalorder %s33, 0
      %p162 = por %p160, %p161
      %p163 = scmp.ne.s32.totalorder %s151, %s152
      %p164 = scmp.eq.s32.totalorder %s34, 1
      %p165 = por %p163, %p164
      %p167 = scmp.ne.s32.totalorder %s152, %s166
      %p168 = scmp.eq.s32.totalorder %s34, 0
      %p169 = por %p167, %p168
      %s171 = sadd.s32 %s170, 1
      %p174 = scmp.eq.s32.totalorder %s28, 1
      %p175 = scmp.ne.s32.totalorder %s170, %s172
      %p176 = scmp.eq.s32.totalorder %s28, 0
      %p177 = por %p175, %p176
      %p178 = scmp.ne.s32.totalorder %s170, %s172
      %p179 = scmp.eq.s32.totalorder %s33, 1
      %p180 = por %p178, %p179
      %p181 = scmp.ne.s32.totalorder %s172, %s173
      %p182 = scmp.eq.s32.totalorder %s33, 0
      %p183 = por %p181, %p182
      %p184 = scmp.ne.s32.totalorder %s172, %s173
      %p185 = scmp.eq.s32.totalorder %s34, 1
      %p186 = por %p184, %p185
      %p188 = scmp.ne.s32.totalorder %s173, %s187
      %p189 = scmp.eq.s32.totalorder %s34, 0
      %p190 = por %p188, %p189
      %s192 = sadd.s32 %s191, 1
      %p195 = scmp.eq.s32.totalorder %s28, 1
      %p196 = scmp.ne.s32.totalorder %s191, %s193
      %p197 = scmp.eq.s32.totalorder %s28, 0
      %p198 = por %p196, %p197
      %p199 = scmp.ne.s32.totalorder %s191, %s193
      %p200 = scmp.eq.s32.totalorder %s33, 1
      %p201 = por %p199, %p200
      %p202 = scmp.ne.s32.totalorder %s193, %s194
      %p203 = scmp.eq.s32.totalorder %s33, 0
      %p204 = por %p202, %p203
      %p205 = scmp.ne.s32.totalorder %s193, %s194
      %p206 = scmp.eq.s32.totalorder %s34, 1
      %p207 = por %p205, %p206
      %p209 = scmp.ne.s32.totalorder %s194, %s208
      %p210 = scmp.eq.s32.totalorder %s34, 0
      %p211 = por %p209, %p210
      %s213 = sadd.s32 %s212, 1
      %p216 = scmp.eq.s32.totalorder %s28, 1
      %p217 = scmp.ne.s32.totalorder %s212, %s214
      %p218 = scmp.eq.s32.totalorder %s28, 0
      %p219 = por %p217, %p218
      %p220 = scmp.ne.s32.totalorder %s212, %s214
      %p221 = scmp.eq.s32.totalorder %s33, 1
      %p222 = por %p220, %p221
      %p223 = scmp.ne.s32.totalorder %s214, %s215
      %p224 = scmp.eq.s32.totalorder %s33, 0
      %p225 = por %p223, %p224
      %p226 = scmp.ne.s32.totalorder %s214, %s215
      %p227 = scmp.eq.s32.totalorder %s34, 1
      %p228 = por %p226, %p227
      %p230 = scmp.ne.s32.totalorder %s215, %s229
      %p231 = scmp.eq.s32.totalorder %s34, 0
      %p232 = por %p230, %p231
      %s234 = sadd.s32 %s233, 1
      %p237 = scmp.eq.s32.totalorder %s28, 1
      %p238 = scmp.ne.s32.totalorder %s233, %s235
      %p239 = scmp.eq.s32.totalorder %s28, 0
      %p240 = por %p238, %p239
      %p241 = scmp.ne.s32.totalorder %s233, %s235
      %p242 = scmp.eq.s32.totalorder %s33, 1
      %p243 = por %p241, %p242
      %p244 = scmp.ne.s32.totalorder %s235, %s236
      %p245 = scmp.eq.s32.totalorder %s33, 0
      %p246 = por %p244, %p245
      %p247 = scmp.ne.s32.totalorder %s235, %s236
      %p248 = scmp.eq.s32.totalorder %s34, 1
      %p249 = por %p247, %p248
      %p251 = scmp.ne.s32.totalorder %s236, %s250
      %p252 = scmp.eq.s32.totalorder %s34, 0
      %p253 = por %p251, %p252
      %s255 = sadd.s32 %s254, 1
      %p258 = scmp.eq.s32.totalorder %s28, 1
      %p259 = scmp.ne.s32.totalorder %s254, %s256
      %p260 = scmp.eq.s32.totalorder %s28, 0
      %p261 = por %p259, %p260
      %p262 = scmp.ne.s32.totalorder %s254, %s256
      %p263 = scmp.eq.s32.totalorder %s33, 1
      %p264 = por %p262, %p263
      %p265 = scmp.ne.s32.totalorder %s256, %s257
      %p266 = scmp.eq.s32.totalorder %s33, 0
      %p267 = por %p265, %p266
      %p268 = scmp.ne.s32.totalorder %s256, %s257
      %p269 = scmp.eq.s32.totalorder %s34, 1
      %p270 = por %p268, %p269
      %p272 = scmp.ne.s32.totalorder %s257, %s271
      %p273 = scmp.eq.s32.totalorder %s34, 0
      %p274 = por %p272, %p273
      %s276 = sadd.s32 %s275, 1
      %p279 = scmp.eq.s32.totalorder %s28, 1
      %p280 = scmp.ne.s32.totalorder %s275, %s277
      %p281 = scmp.eq.s32.totalorder %s28, 0
      %p282 = por %p280, %p281
      %p283 = scmp.ne.s32.totalorder %s275, %s277
      %p284 = scmp.eq.s32.totalorder %s33, 1
      %p285 = por %p283, %p284
      %p286 = scmp.ne.s32.totalorder %s277, %s278
      %p287 = scmp.eq.s32.totalorder %s33, 0
      %p288 = por %p286, %p287
      %p289 = scmp.ne.s32.totalorder %s277, %s278
      %p290 = scmp.eq.s32.totalorder %s34, 1
      %p291 = por %p289, %p290
      %p293 = scmp.ne.s32.totalorder %s278, %s292
      %p294 = scmp.eq.s32.totalorder %s34, 0
      %p295 = por %p293, %p294
      %s296 = ssub.s32 %s35, %s47
      %s297 = ssub.s32 %s36, %s43
      %s298 = sor.u32 %s296, %s297
      %p299 = scmp.eq.s32.totalorder %s298, 0
      %s301 = sadd.s32 %s300, 1
      %s302 = scalar_select %p299, %s300, %s301
      %p305 = pneg %p299
      %p306 = scmp.eq.s32.totalorder %s28, 1
      %p307 = por %p305, %p306
      %p308 = scmp.ne.s32.totalorder %s300, %s303
      %p309 = scmp.eq.s32.totalorder %s28, 0
      %p310 = por %p308, %p309
      %p311 = scmp.ne.s32.totalorder %s300, %s303
      %p312 = scmp.eq.s32.totalorder %s33, 1
      %p313 = por %p311, %p312
      %p314 = scmp.ne.s32.totalorder %s303, %s304
      %p315 = scmp.eq.s32.totalorder %s33, 0
      %p316 = por %p314, %p315
      %p317 = scmp.ne.s32.totalorder %s303, %s304
      %p318 = scmp.eq.s32.totalorder %s34, 1
      %p319 = por %p317, %p318
      %p321 = scmp.ne.s32.totalorder %s304, %s320
      %p322 = scmp.eq.s32.totalorder %s34, 0
      %p323 = por %p321, %p322
      %p324 = scmp.le.s32.totalorder 1, %s28
      %p325 = scmp.lt.s32.totalorder %s28, 3
      %p326 = pnand %p324, %p325
      %p327 = pneg %p326
      // Predicated region
      $region9: #{tpu_custom_call.1} parent=5 // pred_check
        _
      $region10: #{tpu_custom_call.1} parent=5 // pred_check_branch
        %329 = sbr.rel (%p326) target = $region12
      $region11: #{tpu_custom_call.1} parent=5 // pred_region
        %s330 = ssub.s32 %s28, 1
        // Predicated region
        $region13: #{tpu_custom_call.1} parent=11 // pred_check
          %p331 = pneg %p141
        $region14: #{tpu_custom_call.1} parent=11 // pred_check_branch
          %333 = sbr.rel (%p331) target = $region16
        $region15: #{tpu_custom_call.1} parent=11 // pred_region
          %335 = vsyncadd [#allocation12], 0
          %s336 = sshll.u32 %s3, 4
          %s337 = int_to_ptr.hbm [resolvable:$true] %s336
          %s338 = sshll.u32 [#allocation11], 4
          %s339 = int_to_ptr.vmem [resolvable:$true] %s338
          %344 = dma.hbm_to_vmem [thread:$0]  %s337, 256, %s339, [#allocation12], 64, 64, 4
        $region16: #{tpu_custom_call.1} parent=11 // pred_fallthru
          _
        // Predicated region
        $region17: #{tpu_custom_call.1} parent=11 // pred_check
          %p345 = pneg %p162
        $region18: #{tpu_custom_call.1} parent=11 // pred_check_branch
          %347 = sbr.rel (%p345) target = $region20
        $region19: #{tpu_custom_call.1} parent=11 // pred_region
          %349 = vsyncadd [#allocation12], 0
          %s350 = sshll.u32 %s4, 4
          %s351 = int_to_ptr.hbm [resolvable:$true] %s350
          %s352 = sshll.u32 [#allocation13], 4
          %s353 = int_to_ptr.vmem [resolvable:$true] %s352
          %358 = dma.hbm_to_vmem [thread:$0]  %s351, 256, %s353, [#allocation12], 64, 64, 4
        $region20: #{tpu_custom_call.1} parent=11 // pred_fallthru
          _
        // Predicated region
        $region21: #{tpu_custom_call.1} parent=11 // pred_check
          %p359 = pneg %p183
        $region22: #{tpu_custom_call.1} parent=11 // pred_check_branch
          %361 = sbr.rel (%p359) target = $region24
        $region23: #{tpu_custom_call.1} parent=11 // pred_region
          %363 = vsyncadd [#allocation15], 0
          %s364 = sshll.u32 %s5, 4
          %s365 = int_to_ptr.hbm [resolvable:$true] %s364
          %s366 = sshll.u32 [#allocation14], 4
          %s367 = int_to_ptr.vmem [resolvable:$true] %s366
          %372 = dma.hbm_to_vmem [thread:$0]  %s365, 256, %s367, [#allocation15], 64, 64, 4
        $region24: #{tpu_custom_call.1} parent=11 // pred_fallthru
          _
        // Predicated region
        $region25: #{tpu_custom_call.1} parent=11 // pred_check
          %p373 = pneg %p204
        $region26: #{tpu_custom_call.1} parent=11 // pred_check_branch
          %375 = sbr.rel (%p373) target = $region28
        $region27: #{tpu_custom_call.1} parent=11 // pred_region
          %377 = vsyncadd [#allocation15], 0
          %s378 = sshll.u32 %s6, 4
          %s379 = int_to_ptr.hbm [resolvable:$true] %s378
          %s380 = sshll.u32 [#allocation16], 4
          %s381 = int_to_ptr.vmem [resolvable:$true] %s380
          %386 = dma.hbm_to_vmem [thread:$0]  %s379, 256, %s381, [#allocation15], 64, 64, 4
        $region28: #{tpu_custom_call.1} parent=11 // pred_fallthru
          _
        // Predicated region
        $region29: #{tpu_custom_call.1} parent=11 // pred_check
          %p387 = pneg %p225
        $region30: #{tpu_custom_call.1} parent=11 // pred_check_branch
          %389 = sbr.rel (%p387) target = $region32
        $region31: #{tpu_custom_call.1} parent=11 // pred_region
          _
        $region32: #{tpu_custom_call.1} parent=11 // pred_fallthru
          _
        // Predicated region
        $region33: #{tpu_custom_call.1} parent=11 // pred_check
          %p390 = pneg %p246
        $region34: #{tpu_custom_call.1} parent=11 // pred_check_branch
          %392 = sbr.rel (%p390) target = $region36
        $region35: #{tpu_custom_call.1} parent=11 // pred_region
          _
        $region36: #{tpu_custom_call.1} parent=11 // pred_fallthru
          _
        // Predicated region
        $region37: #{tpu_custom_call.1} parent=11 // pred_check
          %p393 = pneg %p267
        $region38: #{tpu_custom_call.1} parent=11 // pred_check_branch
          %395 = sbr.rel (%p393) target = $region40
        $region39: #{tpu_custom_call.1} parent=11 // pred_region
          _
        $region40: #{tpu_custom_call.1} parent=11 // pred_fallthru
          _
        // Predicated region
        $region41: #{tpu_custom_call.1} parent=11 // pred_check
          %p396 = pneg %p288
        $region42: #{tpu_custom_call.1} parent=11 // pred_check_branch
          %398 = sbr.rel (%p396) target = $region44
        $region43: #{tpu_custom_call.1} parent=11 // pred_region
          _
        $region44: #{tpu_custom_call.1} parent=11 // pred_fallthru
          _
      $region12: #{tpu_custom_call.1} parent=5 // pred_fallthru
        _
      %p399 = scmp.lt.s32.totalorder %s28, 2
      // Predicated region
      $region45: #{tpu_custom_call.1} parent=5 // pred_check
        %p400 = pneg %p399
      $region46: #{tpu_custom_call.1} parent=5 // pred_check_branch
        %402 = sbr.rel (%p400) target = $region48
      $region47: #{tpu_custom_call.1} parent=5 // pred_region
        // Predicated region
        $region49: #{tpu_custom_call.1} parent=47 // pred_check
          %p403 = pneg %p62
        $region50: #{tpu_custom_call.1} parent=47 // pred_check_branch
          %405 = sbr.rel (%p403) target = $region52
        $region51: #{tpu_custom_call.1} parent=47 // pred_region
          %s406 = sand.u32 %s52, 1
          %s407 = scalar_lea.sflag [#allocation6], %s406
          %s408 = sand.u32 %s52, 1
          %s409 = smul.addr %s408, 4
          %s410 = scalar_lea.vmem [#allocation5], %s409
          %412 = vsyncadd %s407, 0
          %s413 = sadd.s32 %s36, %s35
          %s414 = smul.addr %s413, 4
          %s415 = scalar_lea.hbm %s0, %s414
          %s417 = sshll.u32 %s415, 4
          %s418 = int_to_ptr.hbm [resolvable:$true] %s417
          %s419 = sshll.u32 %s410, 4
          %s420 = int_to_ptr.vmem [resolvable:$true] %s419
          %422 = dma.hbm_to_vmem [thread:$0]  %s418, 64, %s420, %s407
        $region52: #{tpu_custom_call.1} parent=47 // pred_fallthru
          _
        // Predicated region
        $region53: #{tpu_custom_call.1} parent=47 // pred_check
          %p423 = pneg %p88
        $region54: #{tpu_custom_call.1} parent=47 // pred_check_branch
          %425 = sbr.rel (%p423) target = $region56
        $region55: #{tpu_custom_call.1} parent=47 // pred_region
          %s426 = sand.u32 %s28, 1
          %s427 = scalar_lea.sflag [#allocation9], %s426
          %s428 = sand.u32 %s78, 1
          %s429 = smul.addr %s428, 4
          %s430 = scalar_lea.vmem [#allocation8], %s429
          %432 = vsyncadd %s427, 0
          %s433 = smul.addr %s35, 4
          %s434 = scalar_lea.hbm %s1, %s433
          %s436 = sshll.u32 %s434, 4
          %s437 = int_to_ptr.hbm [resolvable:$true] %s436
          %s438 = sshll.u32 %s430, 4
          %s439 = int_to_ptr.vmem [resolvable:$true] %s438
          %441 = dma.hbm_to_vmem [thread:$0]  %s437, 64, %s439, %s427
        $region56: #{tpu_custom_call.1} parent=47 // pred_fallthru
          _
        // Predicated region
        $region57: #{tpu_custom_call.1} parent=47 // pred_check
          %p442 = pneg %p114
        $region58: #{tpu_custom_call.1} parent=47 // pred_check_branch
          %444 = sbr.rel (%p442) target = $region60
        $region59: #{tpu_custom_call.1} parent=47 // pred_region
          %s445 = sand.u32 %s28, 1
          %s446 = scalar_lea.sflag [#allocation9], %s445
          %s447 = sand.u32 %s104, 1
          %s448 = smul.addr %s447, 4
          %s449 = scalar_lea.vmem [#allocation10], %s448
          %451 = vsyncadd %s446, 0
          %s452 = smul.addr %s35, 4
          %s453 = scalar_lea.hbm %s2, %s452
          %s455 = sshll.u32 %s453, 4
          %s456 = int_to_ptr.hbm [resolvable:$true] %s455
          %s457 = sshll.u32 %s449, 4
          %s458 = int_to_ptr.vmem [resolvable:$true] %s457
          %460 = dma.hbm_to_vmem [thread:$0]  %s456, 64, %s458, %s446
        $region60: #{tpu_custom_call.1} parent=47 // pred_fallthru
          _
      $region48: #{tpu_custom_call.1} parent=5 // pred_fallthru
        _
      %p461 = scmp.le.s32.totalorder 1, %s28
      %p462 = scmp.lt.s32.totalorder %s28, 3
      %p463 = pnand %p461, %p462
      %p464 = pneg %p463
      // Predicated region
      $region61: #{tpu_custom_call.1} parent=5 // pred_check
        _
      $region62: #{tpu_custom_call.1} parent=5 // pred_check_branch
        %466 = sbr.rel (%p463) target = $region64
      $region63: #{tpu_custom_call.1} parent=5 // pred_region
        %s467 = ssub.s32 %s28, 1
        %s468 = sand.u32 %s55, 1
        %s469 = scalar_lea.sflag [#allocation6], %s468
        %s470 = sand.u32 %s55, 1
        %s471 = smul.addr %s470, 4
        %s472 = scalar_lea.vmem [#allocation5], %s471
        // Predicated region
        $region65: #{tpu_custom_call.1} parent=63 // pred_check
          %p473 = pneg %p68
        $region66: #{tpu_custom_call.1} parent=63 // pred_check_branch
          %475 = sbr.rel (%p473) target = $region68
        $region67: #{tpu_custom_call.1} parent=63 // pred_region
          %477 = dma.done %s469, 64
        $region68: #{tpu_custom_call.1} parent=63 // pred_fallthru
          _
        %s478 = sand.u32 %s33, 1
        %s479 = scalar_lea.sflag [#allocation9], %s478
        %s480 = sand.u32 %s81, 1
        %s481 = smul.addr %s480, 4
        %s482 = scalar_lea.vmem [#allocation8], %s481
        // Predicated region
        $region69: #{tpu_custom_call.1} parent=63 // pred_check
          %p483 = pneg %p94
        $region70: #{tpu_custom_call.1} parent=63 // pred_check_branch
          %485 = sbr.rel (%p483) target = $region72
        $region71: #{tpu_custom_call.1} parent=63 // pred_region
          %487 = dma.done %s479, 64
        $region72: #{tpu_custom_call.1} parent=63 // pred_fallthru
          _
        %s488 = sand.u32 %s33, 1
        %s489 = scalar_lea.sflag [#allocation9], %s488
        %s490 = sand.u32 %s107, 1
        %s491 = smul.addr %s490, 4
        %s492 = scalar_lea.vmem [#allocation10], %s491
        // Predicated region
        $region73: #{tpu_custom_call.1} parent=63 // pred_check
          %p493 = pneg %p120
        $region74: #{tpu_custom_call.1} parent=63 // pred_check_branch
          %495 = sbr.rel (%p493) target = $region76
        $region75: #{tpu_custom_call.1} parent=63 // pred_region
          %497 = dma.done %s489, 64
        $region76: #{tpu_custom_call.1} parent=63 // pred_fallthru
          _
        // Predicated region
        $region77: #{tpu_custom_call.1} parent=63 // pred_check
          %p498 = pneg %p141
        $region78: #{tpu_custom_call.1} parent=63 // pred_check_branch
          %500 = sbr.rel (%p498) target = $region80
        $region79: #{tpu_custom_call.1} parent=63 // pred_region
          %502 = dma.done [#allocation12], 256
        $region80: #{tpu_custom_call.1} parent=63 // pred_fallthru
          _
        // Predicated region
        $region81: #{tpu_custom_call.1} parent=63 // pred_check
          %p503 = pneg %p162
        $region82: #{tpu_custom_call.1} parent=63 // pred_check_branch
          %505 = sbr.rel (%p503) target = $region84
        $region83: #{tpu_custom_call.1} parent=63 // pred_region
          %507 = dma.done [#allocation12], 256
        $region84: #{tpu_custom_call.1} parent=63 // pred_fallthru
          _
        // Predicated region
        $region85: #{tpu_custom_call.1} parent=63 // pred_check
          %p508 = pneg %p183
        $region86: #{tpu_custom_call.1} parent=63 // pred_check_branch
          %510 = sbr.rel (%p508) target = $region88
        $region87: #{tpu_custom_call.1} parent=63 // pred_region
          %512 = dma.done [#allocation15], 256
        $region88: #{tpu_custom_call.1} parent=63 // pred_fallthru
          _
        // Predicated region
        $region89: #{tpu_custom_call.1} parent=63 // pred_check
          %p513 = pneg %p204
        $region90: #{tpu_custom_call.1} parent=63 // pred_check_branch
          %515 = sbr.rel (%p513) target = $region92
        $region91: #{tpu_custom_call.1} parent=63 // pred_region
          %517 = dma.done [#allocation15], 256
        $region92: #{tpu_custom_call.1} parent=63 // pred_fallthru
          _
        %s518 = sand.u32 %s55, 1
        %s519 = scalar_lea.sflag [#allocation6], %s518
        %s520 = sand.u32 %s55, 1
        %s521 = smul.addr %s520, 4
        %s522 = scalar_lea.vmem [#allocation5], %s521
        %p523 = pneg %p68
        %p524 = pneg %p65
        %s525 = sand.u32 %s33, 1
        %s526 = scalar_lea.sflag [#allocation9], %s525
        %s527 = sand.u32 %s81, 1
        %s528 = smul.addr %s527, 4
        %s529 = scalar_lea.vmem [#allocation8], %s528
        %p530 = pneg %p94
        %p531 = pneg %p91
        %s532 = sand.u32 %s33, 1
        %s533 = scalar_lea.sflag [#allocation9], %s532
        %s534 = sand.u32 %s107, 1
        %s535 = smul.addr %s534, 4
        %s536 = scalar_lea.vmem [#allocation10], %s535
        %p537 = pneg %p120
        %p538 = pneg %p117
        %p539 = pneg %p141
        %p540 = pneg %p138
        %p541 = pneg %p162
        %p542 = pneg %p159
        %p543 = pneg %p183
        %p544 = pneg %p180
        %p545 = pneg %p204
        %p546 = pneg %p201
        %p547 = pneg %p225
        %p548 = pneg %p222
        %p549 = pneg %p246
        %p550 = pneg %p243
        %p551 = pneg %p267
        %p552 = pneg %p264
        %p553 = pneg %p288
        %p554 = pneg %p285
        %p555 = pneg %p316
        %p556 = pneg %p313
        %s557 = sand.u32 %s303, 1
        %s558 = scalar_lea.sflag [#allocation7], %s557
        %s559 = sand.u32 %s303, 1
        %s560 = smul.addr %s559, 8
        %s561 = scalar_lea.vmem [#allocation17], %s560
        %p563 = scmp.eq.s32.totalorder %s38, 0
        // Predicated region
        $region93: #{tpu_custom_call.1} parent=63 // pred_check
          %p564 = pneg %p563
        $region94: #{tpu_custom_call.1} parent=63 // pred_check_branch
          %566 = sbr.rel (%p564) target = $region96
        $region95: #{tpu_custom_call.1} parent=63 // pred_region
          %v567 = vld [vmem:[%s482] sm:$0xf]
          %v568 = vld [vmem:[#allocation13] sm:$0xf]
          %v569 = vld [vmem:[#allocation13 + $0x4] sm:$0xf]
          %v570 = vld [vmem:[#allocation13 + $0x8] sm:$0xf]
          %v571 = vld [vmem:[#allocation13 + $0xc] sm:$0xf]
          %v572 = vld [vmem:[%s8] sm:$0x1]
          %v574 = vperm.slane %v572, 0
          %v580 = vunpack.c.l.b16 %v568
          %v581 = vunpack.c.l.b16 %v569
          %v582 = vunpack.c.l.b16 %v570
          %v583 = vunpack.c.l.b16 %v571
          %v584 = vpack.c.b16 %v581, %v580
          %v585 = vpack.c.b16 %v583, %v582
          %vm588 = vcmask 261120
          %v590 = vsel %vm588, %v567, 0
          %592 = vmatpush.bf16.msra.mxu0 0
          %593 = vmatpush.bf16.msra.mxu0 0
          %594 = vmatpush.bf16.msra.mxu0 0
          %595 = vmatpush.bf16.msra.mxu0 0
          %596 = vmatpush.bf16.msra.mxu0 0
          %597 = vmatpush.bf16.msra.mxu0 0
          %598 = vmatpush.bf16.msra.mxu0 %v585
          %599 = vmatpush.bf16.msra.mxu0 %v584
          %600 = vmatmul.bf16.gmra.mxu0 %v590
          %v601 = vpop.f32.mrf.mxu0
          %v602 = vadd.f32 %v574, %v601
          %v603 = vpop.f32.mrf.mxu0
          %604 = vdwg.mxu0
          %v605 = vld [vmem:[%s492] sm:$0xf]
          %v606 = vld [vmem:[#allocation14] sm:$0xf]
          %v607 = vld [vmem:[#allocation14 + $0x4] sm:$0xf]
          %v608 = vld [vmem:[#allocation14 + $0x8] sm:$0xf]
          %v609 = vld [vmem:[#allocation14 + $0xc] sm:$0xf]
          %v610 = vld [vmem:[%s9] sm:$0x1]
          %v612 = vperm.slane %v610, 0
          %v618 = vunpack.c.l.b16 %v606
          %v619 = vunpack.c.l.b16 %v607
          %v620 = vunpack.c.l.b16 %v608
          %v621 = vunpack.c.l.b16 %v609
          %v622 = vpack.c.b16 %v619, %v618
          %v623 = vpack.c.b16 %v621, %v620
          %v627 = vsel %vm588, %v605, 0
          %629 = vmatpush.bf16.msra.mxu0 0
          %630 = vmatpush.bf16.msra.mxu0 0
          %631 = vmatpush.bf16.msra.mxu0 0
          %632 = vmatpush.bf16.msra.mxu0 0
          %633 = vmatpush.bf16.msra.mxu0 0
          %634 = vmatpush.bf16.msra.mxu0 0
          %635 = vmatpush.bf16.msra.mxu0 %v623
          %636 = vmatpush.bf16.msra.mxu0 %v622
          %637 = vmatmul.bf16.gmra.mxu0 %v627
          %v638 = vpop.f32.mrf.mxu0
          %v639 = vadd.f32 %v612, %v638
          %v640 = vpop.f32.mrf.mxu0
          %641 = vdwg.mxu0
          %642 = vxpose.xlu0.b32.start [1/16] %v602, 128
          %643 = vxpose.xlu0.b32.cont [2/16] 0.0, 128
          %644 = vxpose.xlu0.b32.cont [3/16] 0.0, 128
          %645 = vxpose.xlu0.b32.cont [4/16] 0.0, 128
          %646 = vxpose.xlu0.b32.cont [5/16] 0.0, 128
          %647 = vxpose.xlu0.b32.cont [6/16] 0.0, 128
          %648 = vxpose.xlu0.b32.cont [7/16] 0.0, 128
          %649 = vxpose.xlu0.b32.cont [8/16] 0.0, 128
          %650 = vxpose.xlu0.b32.cont [9/16] 0.0, 128
          %651 = vxpose.xlu0.b32.cont [10/16] 0.0, 128
          %652 = vxpose.xlu0.b32.cont [11/16] 0.0, 128
          %653 = vxpose.xlu0.b32.cont [12/16] 0.0, 128
          %654 = vxpose.xlu0.b32.cont [13/16] 0.0, 128
          %655 = vxpose.xlu0.b32.cont [14/16] 0.0, 128
          %656 = vxpose.xlu0.b32.cont [15/16] 0.0, 128
          %657 = vxpose.xlu0.b32.end [16/16] 0.0, 128
          %v658 = vpop.trf.xlu0
          %v659 = vpop.trf.xlu0
          %v660 = vpop.trf.xlu0
          %v661 = vpop.trf.xlu0
          %v662 = vpop.trf.xlu0
          %v663 = vpop.trf.xlu0
          %v664 = vpop.trf.xlu0
          %v665 = vpop.trf.xlu0
          %v666 = vpop.trf.xlu0
          %v667 = vpop.trf.xlu0
          %v668 = vpop.trf.xlu0
          %v669 = vpop.trf.xlu0
          %v670 = vpop.trf.xlu0
          %v671 = vpop.trf.xlu0
          %v672 = vpop.trf.xlu0
          %v673 = vpop.trf.xlu0
          %v674 = vpack.c.bf16 %v658, %v658
          %vm675 = vcmask 60416
          %676 = vst.msk [vmem:[#allocation2] sm:$0xf] %vm675, %v674
          %v677 = vpack.c.bf16 %v639, %v639
          %678 = vst.msk [vmem:[#allocation3] sm:$0xf] %vm675, %v677
          %680 = vrot.lane.b32.xlu0 %v602, 120
          %v681 = vpop.permute.xlu0 %680
          %683 = vxpose.xlu0.b32.start [1/16] %v681, 128
          %684 = vxpose.xlu0.b32.cont [2/16] 0.0, 128
          %685 = vxpose.xlu0.b32.cont [3/16] 0.0, 128
          %686 = vxpose.xlu0.b32.cont [4/16] 0.0, 128
          %687 = vxpose.xlu0.b32.cont [5/16] 0.0, 128
          %688 = vxpose.xlu0.b32.cont [6/16] 0.0, 128
          %689 = vxpose.xlu0.b32.cont [7/16] 0.0, 128
          %690 = vxpose.xlu0.b32.cont [8/16] 0.0, 128
          %691 = vxpose.xlu0.b32.cont [9/16] 0.0, 128
          %692 = vxpose.xlu0.b32.cont [10/16] 0.0, 128
          %693 = vxpose.xlu0.b32.cont [11/16] 0.0, 128
          %694 = vxpose.xlu0.b32.cont [12/16] 0.0, 128
          %695 = vxpose.xlu0.b32.cont [13/16] 0.0, 128
          %696 = vxpose.xlu0.b32.cont [14/16] 0.0, 128
          %697 = vxpose.xlu0.b32.cont [15/16] 0.0, 128
          %698 = vxpose.xlu0.b32.end [16/16] 0.0, 128
          %v699 = vpop.trf.xlu0
          %v700 = vpop.trf.xlu0
          %v701 = vpop.trf.xlu0
          %v702 = vpop.trf.xlu0
          %v703 = vpop.trf.xlu0
          %v704 = vpop.trf.xlu0
          %v705 = vpop.trf.xlu0
          %v706 = vpop.trf.xlu0
          %v707 = vpop.trf.xlu0
          %v708 = vpop.trf.xlu0
          %v709 = vpop.trf.xlu0
          %v710 = vpop.trf.xlu0
          %v711 = vpop.trf.xlu0
          %v712 = vpop.trf.xlu0
          %v713 = vpop.trf.xlu0
          %v714 = vpop.trf.xlu0
          %v715 = vpack.c.bf16 %v699, %v699
          %s716 = scalar_lea.vmem [#allocation2], 4
          %717 = vst.msk [vmem:[%s716] sm:$0xf] %vm675, %v715
          %719 = vrot.lane.b32.xlu0 %v677, 120
          %v720 = vpop.permute.xlu0 %719
          %s722 = scalar_lea.vmem [#allocation3], 4
          %723 = vst.msk [vmem:[%s722] sm:$0xf] %vm675, %v720
          %724 = vrot.lane.b32.xlu0 %v602, 112
          %v725 = vpop.permute.xlu0 %724
          %727 = vxpose.xlu0.b32.start [1/16] %v725, 128
          %728 = vxpose.xlu0.b32.cont [2/16] 0.0, 128
          %729 = vxpose.xlu0.b32.cont [3/16] 0.0, 128
          %730 = vxpose.xlu0.b32.cont [4/16] 0.0, 128
          %731 = vxpose.xlu0.b32.cont [5/16] 0.0, 128
          %732 = vxpose.xlu0.b32.cont [6/16] 0.0, 128
          %733 = vxpose.xlu0.b32.cont [7/16] 0.0, 128
          %734 = vxpose.xlu0.b32.cont [8/16] 0.0, 128
          %735 = vxpose.xlu0.b32.cont [9/16] 0.0, 128
          %736 = vxpose.xlu0.b32.cont [10/16] 0.0, 128
          %737 = vxpose.xlu0.b32.cont [11/16] 0.0, 128
          %738 = vxpose.xlu0.b32.cont [12/16] 0.0, 128
          %739 = vxpose.xlu0.b32.cont [13/16] 0.0, 128
          %740 = vxpose.xlu0.b32.cont [14/16] 0.0, 128
          %741 = vxpose.xlu0.b32.cont [15/16] 0.0, 128
          %742 = vxpose.xlu0.b32.end [16/16] 0.0, 128
          %v743 = vpop.trf.xlu0
          %v744 = vpop.trf.xlu0
          %v745 = vpop.trf.xlu0
          %v746 = vpop.trf.xlu0
          %v747 = vpop.trf.xlu0
          %v748 = vpop.trf.xlu0
          %v749 = vpop.trf.xlu0
          %v750 = vpop.trf.xlu0
          %v751 = vpop.trf.xlu0
          %v752 = vpop.trf.xlu0
          %v753 = vpop.trf.xlu0
          %v754 = vpop.trf.xlu0
          %v755 = vpop.trf.xlu0
          %v756 = vpop.trf.xlu0
          %v757 = vpop.trf.xlu0
          %v758 = vpop.trf.xlu0
          %v759 = vpack.c.bf16 %v743, %v743
          %s760 = scalar_lea.vmem [#allocation2], 8
          %761 = vst.msk [vmem:[%s760] sm:$0xf] %vm675, %v759
          %762 = vrot.lane.b32.xlu0 %v677, 112
          %v763 = vpop.permute.xlu0 %762
          %s765 = scalar_lea.vmem [#allocation3], 8
          %766 = vst.msk [vmem:[%s765] sm:$0xf] %vm675, %v763
          %767 = vrot.lane.b32.xlu0 %v602, 104
          %v768 = vpop.permute.xlu0 %767
          %770 = vxpose.xlu0.b32.start [1/16] %v768, 128
          %771 = vxpose.xlu0.b32.cont [2/16] 0.0, 128
          %772 = vxpose.xlu0.b32.cont [3/16] 0.0, 128
          %773 = vxpose.xlu0.b32.cont [4/16] 0.0, 128
          %774 = vxpose.xlu0.b32.cont [5/16] 0.0, 128
          %775 = vxpose.xlu0.b32.cont [6/16] 0.0, 128
          %776 = vxpose.xlu0.b32.cont [7/16] 0.0, 128
          %777 = vxpose.xlu0.b32.cont [8/16] 0.0, 128
          %778 = vxpose.xlu0.b32.cont [9/16] 0.0, 128
          %779 = vxpose.xlu0.b32.cont [10/16] 0.0, 128
          %780 = vxpose.xlu0.b32.cont [11/16] 0.0, 128
          %781 = vxpose.xlu0.b32.cont [12/16] 0.0, 128
          %782 = vxpose.xlu0.b32.cont [13/16] 0.0, 128
          %783 = vxpose.xlu0.b32.cont [14/16] 0.0, 128
          %784 = vxpose.xlu0.b32.cont [15/16] 0.0, 128
          %785 = vxpose.xlu0.b32.end [16/16] 0.0, 128
          %v786 = vpop.trf.xlu0
          %v787 = vpop.trf.xlu0
          %v788 = vpop.trf.xlu0
          %v789 = vpop.trf.xlu0
          %v790 = vpop.trf.xlu0
          %v791 = vpop.trf.xlu0
          %v792 = vpop.trf.xlu0
          %v793 = vpop.trf.xlu0
          %v794 = vpop.trf.xlu0
          %v795 = vpop.trf.xlu0
          %v796 = vpop.trf.xlu0
          %v797 = vpop.trf.xlu0
          %v798 = vpop.trf.xlu0
          %v799 = vpop.trf.xlu0
          %v800 = vpop.trf.xlu0
          %v801 = vpop.trf.xlu0
          %v802 = vpack.c.bf16 %v786, %v786
          %s803 = scalar_lea.vmem [#allocation2], 12
          %804 = vst.msk [vmem:[%s803] sm:$0xf] %vm675, %v802
          %805 = vrot.lane.b32.xlu0 %v677, 104
          %v806 = vpop.permute.xlu0 %805
          %s808 = scalar_lea.vmem [#allocation3], 12
          %809 = vst.msk [vmem:[%s808] sm:$0xf] %vm675, %v806
        $region96: #{tpu_custom_call.1} parent=63 // pred_fallthru
          _
        %v810 = vld [vmem:[%s472] sm:$0xf]
        %v811 = vld [vmem:[#allocation11] sm:$0xf]
        %v812 = vld [vmem:[#allocation11 + $0x4] sm:$0xf]
        %v813 = vld [vmem:[#allocation11 + $0x8] sm:$0xf]
        %v814 = vld [vmem:[#allocation11 + $0xc] sm:$0xf]
        %v815 = vld [vmem:[%s7] sm:$0x1]
        %v817 = vperm.slane %v815, 0
        %v823 = vunpack.c.l.b16 %v811
        %v824 = vunpack.c.l.b16 %v812
        %v825 = vunpack.c.l.b16 %v813
        %v826 = vunpack.c.l.b16 %v814
        %v827 = vpack.c.b16 %v824, %v823
        %v828 = vpack.c.b16 %v826, %v825
        %vm831 = vcmask 261120
        %v833 = vsel %vm831, %v810, 0
        %835 = vmatpush.bf16.msra.mxu0 0
        %836 = vmatpush.bf16.msra.mxu0 0
        %837 = vmatpush.bf16.msra.mxu0 0
        %838 = vmatpush.bf16.msra.mxu0 0
        %839 = vmatpush.bf16.msra.mxu0 0
        %840 = vmatpush.bf16.msra.mxu0 0
        %841 = vmatpush.bf16.msra.mxu0 %v828
        %842 = vmatpush.bf16.msra.mxu0 %v827
        %843 = vmatmul.bf16.gmra.mxu0 %v833
        %v844 = vpop.f32.mrf.mxu0
        %v845 = vadd.f32 %v817, %v844
        %v846 = vpop.f32.mrf.mxu0
        %847 = vdwg.mxu0
        %v848 = vmul.f32 %v845, 0.35355338
        %v849 = vpack.c.bf16 %v848, %v848
        %v850 = vld [vmem:[#allocation2] sm:$0xf]
        %vm851 = vcmask 64512
        %v853 = vsel %vm851, %v849, 0
        %vm855 = vcmask 1043456
        %v857 = vsel %vm855, %v850, 0
        %859 = vmatpush.bf16.msra.mxu0 0
        %860 = vmatpush.bf16.msra.mxu0 0
        %861 = vmatpush.bf16.msra.mxu0 0
        %862 = vmatpush.bf16.msra.mxu0 0
        %863 = vmatpush.bf16.msra.mxu0 0
        %864 = vmatpush.bf16.msra.mxu0 0
        %865 = vmatpush.bf16.msra.mxu0 0
        %866 = vmatpush.bf16.msra.mxu0 %v857
        %867 = vmatmul.bf16.gmra.mxu0 %v853
        %v868 = vpop.f32.mrf.mxu0
        %v869 = vadd.f32 0.0, %v868
        %v870 = vpop.f32.mrf.mxu0
        %871 = vdwg.mxu0
        %v872 = vsel %vm851, %v869, -inf
        %873 = vmax.xlane.f32.xlu0 %v872
        %v874 = vpop.xlane.xlu0 %873
        %v875 = vsub.f32 %v869, %v874
        %v876 = vmul.f32 %v875, 1.442695
        %v877 = vpow.pop %v876
        %v878 = vsel %vm851, %v877, 0.0
        %879 = vadd.xlane.f32.xlu0 %v878
        %v880 = vpop.xlane.xlu0 %879
        %v881 = vrcp.pop %v880
        %v882 = vmul.f32 %v877, %v881
        %v883 = vpack.c.bf16 %v882, %v882
        %v884 = vld [vmem:[#allocation3] sm:$0xf]
        %v886 = vsel %vm851, %v883, 0
        %v889 = vsel %vm855, %v884, 0
        %891 = vmatpush.bf16.msra.mxu0 0
        %892 = vmatpush.bf16.msra.mxu0 0
        %893 = vmatpush.bf16.msra.mxu0 0
        %894 = vmatpush.bf16.msra.mxu0 0
        %895 = vmatpush.bf16.msra.mxu0 0
        %896 = vmatpush.bf16.msra.mxu0 0
        %897 = vmatpush.bf16.msra.mxu0 0
        %898 = vmatpush.bf16.msra.mxu0 %v889
        %899 = vmatmul.bf16.gmra.mxu0 %v886
        %v900 = vpop.f32.mrf.mxu0
        %v901 = vadd.f32 0.0, %v900
        %v902 = vpop.f32.mrf.mxu0
        %903 = vdwg.mxu0
        %v904 = vpack.c.bf16 %v901, %v901
        %vm905 = vcmask 60416
        %906 = vst.msk [vmem:[#allocation4] sm:$0xf] %vm905, %v904
        %s907 = scalar_lea.vmem [#allocation2], 4
        %v908 = vld [vmem:[%s907] sm:$0xf]
        %v910 = vunpack.c.l.b16 %v849
        %v911 = vpack.c.b16 %v910, %v910
        %912 = vrot.lane.b32.xlu0 %v911, 120
        %v913 = vpop.permute.xlu0 %912
        %v915 = vsel %vm851, %v913, 0
        %v918 = vsel %vm855, %v908, 0
        %920 = vmatpush.bf16.msra.mxu0 0
        %921 = vmatpush.bf16.msra.mxu0 0
        %922 = vmatpush.bf16.msra.mxu0 0
        %923 = vmatpush.bf16.msra.mxu0 0
        %924 = vmatpush.bf16.msra.mxu0 0
        %925 = vmatpush.bf16.msra.mxu0 0
        %926 = vmatpush.bf16.msra.mxu0 0
        %927 = vmatpush.bf16.msra.mxu0 %v918
        %928 = vmatmul.bf16.gmra.mxu0 %v915
        %v929 = vpop.f32.mrf.mxu0
        %v930 = vadd.f32 0.0, %v929
        %v931 = vpop.f32.mrf.mxu0
        %932 = vdwg.mxu0
        %v933 = vsel %vm851, %v930, -inf
        %934 = vmax.xlane.f32.xlu0 %v933
        %v935 = vpop.xlane.xlu0 %934
        %v936 = vsub.f32 %v930, %v935
        %v937 = vmul.f32 %v936, 1.442695
        %v938 = vpow.pop %v937
        %v939 = vsel %vm851, %v938, 0.0
        %940 = vadd.xlane.f32.xlu0 %v939
        %v941 = vpop.xlane.xlu0 %940
        %v942 = vrcp.pop %v941
        %v943 = vmul.f32 %v938, %v942
        %v944 = vpack.c.bf16 %v943, %v943
        %s945 = scalar_lea.vmem [#allocation3], 4
        %v946 = vld [vmem:[%s945] sm:$0xf]
        %v948 = vsel %vm851, %v944, 0
        %v951 = vsel %vm855, %v946, 0
        %953 = vmatpush.bf16.msra.mxu0 0
        %954 = vmatpush.bf16.msra.mxu0 0
        %955 = vmatpush.bf16.msra.mxu0 0
        %956 = vmatpush.bf16.msra.mxu0 0
        %957 = vmatpush.bf16.msra.mxu0 0
        %958 = vmatpush.bf16.msra.mxu0 0
        %959 = vmatpush.bf16.msra.mxu0 0
        %960 = vmatpush.bf16.msra.mxu0 %v951
        %961 = vmatmul.bf16.gmra.mxu0 %v948
        %v962 = vpop.f32.mrf.mxu0
        %v963 = vadd.f32 0.0, %v962
        %v964 = vpop.f32.mrf.mxu0
        %965 = vdwg.mxu0
        %v966 = vpack.c.bf16 %v963, %v963
        %968 = vrot.lane.b32.xlu0 %v966, 8
        %v969 = vpop.permute.xlu0 %968
        %vm971 = vcmask 126016
        %972 = vst.msk [vmem:[#allocation4] sm:$0xf] %vm971, %v969
        %s973 = scalar_lea.vmem [#allocation2], 8
        %v974 = vld [vmem:[%s973] sm:$0xf]
        %975 = vrot.lane.b32.xlu0 %v911, 112
        %v976 = vpop.permute.xlu0 %975
        %v978 = vsel %vm851, %v976, 0
        %v981 = vsel %vm855, %v974, 0
        %983 = vmatpush.bf16.msra.mxu0 0
        %984 = vmatpush.bf16.msra.mxu0 0
        %985 = vmatpush.bf16.msra.mxu0 0
        %986 = vmatpush.bf16.msra.mxu0 0
        %987 = vmatpush.bf16.msra.mxu0 0
        %988 = vmatpush.bf16.msra.mxu0 0
        %989 = vmatpush.bf16.msra.mxu0 0
        %990 = vmatpush.bf16.msra.mxu0 %v981
        %991 = vmatmul.bf16.gmra.mxu0 %v978
        %v992 = vpop.f32.mrf.mxu0
        %v993 = vadd.f32 0.0, %v992
        %v994 = vpop.f32.mrf.mxu0
        %995 = vdwg.mxu0
        %v996 = vsel %vm851, %v993, -inf
        %997 = vmax.xlane.f32.xlu0 %v996
        %v998 = vpop.xlane.xlu0 %997
        %v999 = vsub.f32 %v993, %v998
        %v1000 = vmul.f32 %v999, 1.442695
        %v1001 = vpow.pop %v1000
        %v1002 = vsel %vm851, %v1001, 0.0
        %1003 = vadd.xlane.f32.xlu0 %v1002
        %v1004 = vpop.xlane.xlu0 %1003
        %v1005 = vrcp.pop %v1004
        %v1006 = vmul.f32 %v1001, %v1005
        %v1007 = vpack.c.bf16 %v1006, %v1006
        %s1008 = scalar_lea.vmem [#allocation3], 8
        %v1009 = vld [vmem:[%s1008] sm:$0xf]
        %v1011 = vsel %vm851, %v1007, 0
        %v1014 = vsel %vm855, %v1009, 0
        %1016 = vmatpush.bf16.msra.mxu0 0
        %1017 = vmatpush.bf16.msra.mxu0 0
        %1018 = vmatpush.bf16.msra.mxu0 0
        %1019 = vmatpush.bf16.msra.mxu0 0
        %1020 = vmatpush.bf16.msra.mxu0 0
        %1021 = vmatpush.bf16.msra.mxu0 0
        %1022 = vmatpush.bf16.msra.mxu0 0
        %1023 = vmatpush.bf16.msra.mxu0 %v1014
        %1024 = vmatmul.bf16.gmra.mxu0 %v1011
        %v1025 = vpop.f32.mrf.mxu0
        %v1026 = vadd.f32 0.0, %v1025
        %v1027 = vpop.f32.mrf.mxu0
        %1028 = vdwg.mxu0
        %v1029 = vpack.c.bf16 %v1026, %v1026
        %1031 = vrot.lane.b32.xlu0 %v1029, 16
        %v1032 = vpop.permute.xlu0 %1031
        %vm1034 = vcmask 191616
        %1035 = vst.msk [vmem:[#allocation4] sm:$0xf] %vm1034, %v1032
        %s1036 = scalar_lea.vmem [#allocation2], 12
        %v1037 = vld [vmem:[%s1036] sm:$0xf]
        %1038 = vrot.lane.b32.xlu0 %v911, 104
        %v1039 = vpop.permute.xlu0 %1038
        %v1041 = vsel %vm851, %v1039, 0
        %v1044 = vsel %vm855, %v1037, 0
        %1046 = vmatpush.bf16.msra.mxu0 0
        %1047 = vmatpush.bf16.msra.mxu0 0
        %1048 = vmatpush.bf16.msra.mxu0 0
        %1049 = vmatpush.bf16.msra.mxu0 0
        %1050 = vmatpush.bf16.msra.mxu0 0
        %1051 = vmatpush.bf16.msra.mxu0 0
        %1052 = vmatpush.bf16.msra.mxu0 0
        %1053 = vmatpush.bf16.msra.mxu0 %v1044
        %1054 = vmatmul.bf16.gmra.mxu0 %v1041
        %v1055 = vpop.f32.mrf.mxu0
        %v1056 = vadd.f32 0.0, %v1055
        %v1057 = vpop.f32.mrf.mxu0
        %1058 = vdwg.mxu0
        %v1059 = vsel %vm851, %v1056, -inf
        %1060 = vmax.xlane.f32.xlu0 %v1059
        %v1061 = vpop.xlane.xlu0 %1060
        %v1062 = vsub.f32 %v1056, %v1061
        %v1063 = vmul.f32 %v1062, 1.442695
        %v1064 = vpow.pop %v1063
        %v1065 = vsel %vm851, %v1064, 0.0
        %1066 = vadd.xlane.f32.xlu0 %v1065
        %v1067 = vpop.xlane.xlu0 %1066
        %v1068 = vrcp.pop %v1067
        %v1069 = vmul.f32 %v1064, %v1068
        %v1070 = vpack.c.bf16 %v1069, %v1069
        %s1071 = scalar_lea.vmem [#allocation3], 12
        %v1072 = vld [vmem:[%s1071] sm:$0xf]
        %v1074 = vsel %vm851, %v1070, 0
        %v1077 = vsel %vm855, %v1072, 0
        %1079 = vmatpush.bf16.msra.mxu0 0
        %1080 = vmatpush.bf16.msra.mxu0 0
        %1081 = vmatpush.bf16.msra.mxu0 0
        %1082 = vmatpush.bf16.msra.mxu0 0
        %1083 = vmatpush.bf16.msra.mxu0 0
        %1084 = vmatpush.bf16.msra.mxu0 0
        %1085 = vmatpush.bf16.msra.mxu0 0
        %1086 = vmatpush.bf16.msra.mxu0 %v1077
        %1087 = vmatmul.bf16.gmra.mxu0 %v1074
        %v1088 = vpop.f32.mrf.mxu0
        %v1089 = vadd.f32 0.0, %v1088
        %v1090 = vpop.f32.mrf.mxu0
        %1091 = vdwg.mxu0
        %v1092 = vpack.c.bf16 %v1089, %v1089
        %1094 = vrot.lane.b32.xlu0 %v1092, 24
        %v1095 = vpop.permute.xlu0 %1094
        %vm1097 = vcmask 257216
        %1098 = vst.msk [vmem:[#allocation4] sm:$0xf] %vm1097, %v1095
        %v1099 = vld [vmem:[#allocation4] sm:$0xf]
        %v1100 = vld [vmem:[#allocation16] sm:$0xf]
        %v1101 = vld [vmem:[#allocation16 + $0x4] sm:$0xf]
        %v1102 = vld [vmem:[#allocation16 + $0x8] sm:$0xf]
        %v1103 = vld [vmem:[#allocation16 + $0xc] sm:$0xf]
        %v1104 = vld [vmem:[%s10] sm:$0x1]
        %v1106 = vperm.slane %v1104, 0
        %v1112 = vunpack.c.l.b16 %v1100
        %v1113 = vunpack.c.l.b16 %v1101
        %v1114 = vunpack.c.l.b16 %v1102
        %v1115 = vunpack.c.l.b16 %v1103
        %v1116 = vpack.c.b16 %v1113, %v1112
        %v1117 = vpack.c.b16 %v1115, %v1114
        %v1121 = vsel %vm831, %v1099, 0
        %1123 = vmatpush.bf16.msra.mxu0 0
        %1124 = vmatpush.bf16.msra.mxu0 0
        %1125 = vmatpush.bf16.msra.mxu0 0
        %1126 = vmatpush.bf16.msra.mxu0 0
        %1127 = vmatpush.bf16.msra.mxu0 0
        %1128 = vmatpush.bf16.msra.mxu0 0
        %1129 = vmatpush.bf16.msra.mxu0 %v1117
        %1130 = vmatpush.bf16.msra.mxu0 %v1116
        %1131 = vmatmul.bf16.gmra.mxu0 %v1121
        %v1132 = vpop.f32.mrf.mxu0
        %v1133 = vadd.f32 %v1106, %v1132
        %v1134 = vpop.f32.mrf.mxu0
        %1135 = vdwg.mxu0
        %1136 = vst.msk [vmem:[%s561] sm:$0xff] %vm831, %v1133
        %s1137 = sand.u32 %s303, 1
        %s1138 = scalar_lea.sflag [#allocation7], %s1137
        %s1139 = sand.u32 %s303, 1
        %s1140 = smul.addr %s1139, 8
        %s1141 = scalar_lea.vmem [#allocation17], %s1140
        // Predicated region
        $region97: #{tpu_custom_call.1} parent=63 // pred_check
          %p1142 = pneg %p313
        $region98: #{tpu_custom_call.1} parent=63 // pred_check_branch
          %1144 = sbr.rel (%p1142) target = $region100
        $region99: #{tpu_custom_call.1} parent=63 // pred_region
          %1146 = vsyncadd %s1138, 0
          %s1147 = sadd.s32 %s38, %s37
          %s1148 = smul.addr %s1147, 8
          %s1149 = scalar_lea.hbm %s11, %s1148
          %s1151 = sshll.u32 %s1141, 4
          %s1152 = int_to_ptr.vmem [resolvable:$true] %s1151
          %s1153 = sshll.u32 %s1149, 4
          %s1154 = int_to_ptr.hbm [resolvable:$true] %s1153
          %1156 = dma.vmem_to_hbm [thread:$0]  %s1152, 128, %s1154, %s1138
        $region100: #{tpu_custom_call.1} parent=63 // pred_fallthru
          _
      $region64: #{tpu_custom_call.1} parent=5 // pred_fallthru
        _
      %p1157 = scmp.le.s32.totalorder 2, %s28
      // Predicated region
      $region101: #{tpu_custom_call.1} parent=5 // pred_check
        %p1158 = pneg %p1157
      $region102: #{tpu_custom_call.1} parent=5 // pred_check_branch
        %1160 = sbr.rel (%p1158) target = $region104
      $region103: #{tpu_custom_call.1} parent=5 // pred_region
        %s1161 = ssub.s32 %s28, 2
        // Predicated region
        $region105: #{tpu_custom_call.1} parent=103 // pred_check
          %p1162 = pneg %p319
        $region106: #{tpu_custom_call.1} parent=103 // pred_check_branch
          %1164 = sbr.rel (%p1162) target = $region108
        $region107: #{tpu_custom_call.1} parent=103 // pred_region
          %s1165 = sand.u32 %s304, 1
          %s1166 = scalar_lea.sflag [#allocation7], %s1165
          %s1167 = sand.u32 %s304, 1
          %s1168 = smul.addr %s1167, 8
          %s1169 = scalar_lea.vmem [#allocation17], %s1168
          %1171 = dma.done %s1166, 128
        $region108: #{tpu_custom_call.1} parent=103 // pred_fallthru
          _
      $region104: #{tpu_custom_call.1} parent=5 // pred_fallthru
        _
    $region6: #{tpu_custom_call.1} parent=1 // loop_footer
      %s32 = sadd.s32 1, %s28
    $region7: #{tpu_custom_call.1} parent=1 // loop_footer_branch
      %27 = sbr.rel target = $region3
    $region8: #{tpu_custom_call.1} parent=1 // loop_exit
      _
    %1172 = vsyncpa [#allocation6], 1
    %s1173 = scalar_lea.sflag [#allocation6], 1
    %1174 = vsyncpa %s1173, 1
    %1175 = vsyncpa [#allocation9], 1
    %s1176 = scalar_lea.sflag [#allocation9], 1
    %1177 = vsyncpa %s1176, 1
    %1178 = vsyncpa [#allocation12], 1
    %1179 = vsyncpa [#allocation15], 1
    %1180 = vsyncpa [#allocation7], 1
    %s1181 = scalar_lea.sflag [#allocation7], 1
    %1182 = vsyncpa %s1181, 1

</llo_original>
